<compile_context>
chip_gen: v5e
topology: v5e:2x2
jax: 0.10.0
libtpu: 0.0.40
codegen_flags: <defaults>
</compile_context>

<pallas_src>
import functools
import math

import jax
import jax.numpy as jnp
from jax.experimental import pallas as pl
from jax.experimental.pallas import tpu as pltpu

_LAYER_KEYS = ("ln1_g", "ln1_b", "w_qkv", "w_fc", "b_fc",
               "ln2_g", "ln2_b", "w1", "b1", "w2", "b2")
_NPRM = len(_LAYER_KEYS)


# --------------------------------------------------------------------------
# BlockSpec helpers (grid = (batch, layer))
# --------------------------------------------------------------------------
def _batch_spec(block_shape):
    """Leading dim indexed by the batch grid axis, rest full."""
    trailing = (0,) * (len(block_shape) - 1)
    return pl.BlockSpec(block_shape, lambda b, l, _t=trailing: (b,) + _t)


def _bcast_spec(shape):
    """Whole array, identical block for every grid point (weights, PE)."""
    zeros = (0,) * len(shape)
    return pl.BlockSpec(shape, lambda b, l, _z=zeros: _z)


def _stack_spec(full_shape):
    """Stacked per-layer params: leading dim selected by the layer grid axis.

    Layer grid index l maps to stacked entry max(l-1, 0); the l==0 iteration
    therefore prefetches layer 1's weights while layer 0 (separate refs)
    computes.
    """
    blk = (1,) + tuple(full_shape[1:])
    trailing = (0,) * (len(full_shape) - 1)
    return pl.BlockSpec(
        blk, lambda b, l, _t=trailing: (jnp.maximum(l - 1, 0),) + _t)


def _layernorm(x, g, b, eps):
    mu = jnp.mean(x, axis=-1, keepdims=True)
    var = jnp.mean(jnp.square(x - mu), axis=-1, keepdims=True)
    return (x - mu) * jax.lax.rsqrt(var + eps) * g + b


# --------------------------------------------------------------------------
# One FFT layer (pre-LN MHSA + Conv-FFN), plain jnp on in-VMEM arrays
# --------------------------------------------------------------------------
def _layer_body(x, bias, mcol, prm, *, n_head, d_head, add_residual):
    (ln1_g, ln1_b, w_qkv, w_fc, b_fc, ln2_g, ln2_b, w1, b1, w2, b2) = prm
    bf16 = jnp.bfloat16
    f32 = jnp.float32
    T = x.shape[0]
    Dh = d_head
    HDh = n_head * d_head

    # ---------------- MHSA (pre-LN) ----------------------------------------
    xn = _layernorm(x, ln1_g, ln1_b, eps=1e-5)
    # Fused lane-dense QKV projection; 1/sqrt(d_head) already folded into the
    # Q columns of w_qkv (host-side weight transform).
    qkv = jnp.dot(xn.astype(bf16), w_qkv, preferred_element_type=f32)  # (T,3*HDh)

    ctx_heads = []
    for h in range(n_head):
        qh = qkv[:, h * Dh:(h + 1) * Dh].astype(bf16)                  # (T,Dh)
        kh = qkv[:, HDh + h * Dh: HDh + (h + 1) * Dh].astype(bf16)
        vh = qkv[:, 2 * HDh + h * Dh: 2 * HDh + (h + 1) * Dh].astype(bf16)
        # scores = q @ k^T, contraction over Dh, f32 accumulation
        s = jax.lax.dot_general(qh, kh, (((1,), (1,)), ((), ())),
                                preferred_element_type=f32)            # (T,T)
        s = s + bias                                                   # key-pad
        m = jnp.max(s, axis=-1, keepdims=True)                         # f32
        p = jnp.exp(s - m)
        denom = jnp.sum(p, axis=-1, keepdims=True)
        ctx = jnp.dot(p.astype(bf16), vh, preferred_element_type=f32)  # (T,Dh)
        ctx_heads.append(ctx * pl.reciprocal(denom, approx=True))      # EUP
    ctx = (ctx_heads[0] if n_head == 1
           else jnp.concatenate(ctx_heads, axis=-1))                   # (T,HDh)

    # Single output projection over the concatenated heads.
    proj = jnp.dot(ctx.astype(bf16), w_fc, preferred_element_type=f32) + b_fc
    if add_residual:                                   # only when d_in == d_model
        proj = proj + x
    xa = jnp.where(mcol > 0.5, 0.0, proj)              # zero padded rows

    # ---------------- Conv-FFN: LN -> Conv1d(k=3) -> ReLU -> Conv1d(k=1) ----
    xn2 = _layernorm(xa, ln2_g, ln2_b, eps=1e-5)
    row = jax.lax.broadcasted_iota(jnp.int32, xn2.shape, 0)
    x_prev = jnp.where(row == 0, 0.0, pltpu.roll(xn2, shift=1, axis=0))
    x_next = jnp.where(row == T - 1, 0.0, pltpu.roll(xn2, shift=T - 1, axis=0))
    # Fuse the three conv taps into one matmul with 3x deeper contraction.
    taps = jnp.concatenate([x_prev, xn2, x_next], axis=-1).astype(bf16)  # (T,3d)
    h1 = jnp.dot(taps, w1, preferred_element_type=f32) + b1
    h1 = jnp.maximum(h1, 0.0)                                            # ReLU f32
    y = jnp.dot(h1.astype(bf16), w2, preferred_element_type=f32) + b2 + xa
    return jnp.where(mcol > 0.5, 0.0, y)               # zero padded rows again


# --------------------------------------------------------------------------
# Fused encoder kernel body: grid point = (batch b, layer l)
# --------------------------------------------------------------------------
def _encoder_kernel(x_ref, pe_ref, bias_ref, mcol_ref, *refs,
                    n_layer, n_head, d_head, add_residual0, has_stack, scale):
    o_ref = refs[-1]
    l0 = refs[0:_NPRM]
    if has_stack:
        stk = refs[_NPRM:2 * _NPRM]
        fin_g, fin_b = refs[2 * _NPRM], refs[2 * _NPRM + 1]
    else:
        stk = None
        fin_g, fin_b = refs[_NPRM], refs[_NPRM + 1]

    l = pl.program_id(1)
    bias = bias_ref[0]                     # (1, T) additive key-padding bias
    mcol = mcol_ref[0]                     # (T, 1) 1.0 = padded position

    # ---- layer 0: x*sqrt(d_model) + PE, then FFT block (separate refs) ----
    @pl.when(l == 0)
    def _():
        x0 = x_ref[0] * jnp.float32(scale) + pe_ref[...]
        prm = tuple(r[...] for r in l0)
        o_ref[0] = _layer_body(x0, bias, mcol, prm, n_head=n_head,
                               d_head=d_head, add_residual=add_residual0)

    # ---- layers 1..L-1: stacked weights selected by the layer grid axis ----
    if has_stack:
        @pl.when(l > 0)
        def _():
            prm = tuple(r[0] for r in stk)
            o_ref[0] = _layer_body(o_ref[0], bias, mcol, prm, n_head=n_head,
                                   d_head=d_head, add_residual=True)

    # ---- final LayerNorm(d_model, eps=1e-6) --------------------------------
    @pl.when(l == n_layer - 1)
    def _():
        o_ref[0] = _layernorm(o_ref[0], fin_g[...], fin_b[...], eps=1e-6)


# --------------------------------------------------------------------------
# Host-side glue: positional encoding, parameter synthesis / packing, wrapper
# --------------------------------------------------------------------------
def sinusoidal_position_encoding(T, depth, dtype=jnp.float32):
    positions = jnp.arange(1, T + 1, dtype=dtype)
    log_ts_inc = math.log(10000.0) / (depth / 2 - 1)
    inv_timescales = jnp.exp(jnp.arange(depth // 2, dtype=dtype) * (-log_ts_inc))
    scaled_time = positions[:, None] * inv_timescales[None, :]
    return jnp.concatenate([jnp.sin(scaled_time), jnp.cos(scaled_time)], axis=-1)


def _make_layer(key, d, d_model, n_head, d_head, d_inner):
    """Synthesize one FFT layer's params, already packed for the kernel.

    For a real checkpoint: w_qkv = concat([Wq*(1/sqrt(d_head)), Wk, Wv], -1)
    on the input-feature axis; w1 = concat([Wc3[:,:,0].T, Wc3[:,:,1].T,
    Wc3[:,:,2].T], 0) (Conv1d k=3 taps for [t-1, t, t+1]); w2 = Wc1[:,:,0].T.
    """
    ks = jax.random.split(key, 8)
    HDh = n_head * d_head

    def nrm(k, shape, dtype=jnp.bfloat16):
        return (0.05 * jax.random.normal(k, shape, jnp.float32)).astype(dtype)

    w_qkv = 0.05 * jax.random.normal(ks[0], (d, 3 * HDh), jnp.float32)
    w_qkv = w_qkv.at[:, :HDh].multiply(1.0 / (d_head ** 0.5))  # fold q-scale
    return dict(
        ln1_g=jnp.ones((1, d), jnp.float32),
        ln1_b=jnp.zeros((1, d), jnp.float32),
        w_qkv=w_qkv.astype(jnp.bfloat16),
        w_fc=nrm(ks[1], (HDh, d_model)),
        b_fc=nrm(ks[2], (1, d_model), dtype=jnp.float32),
        ln2_g=jnp.ones((1, d_model), jnp.float32),
        ln2_b=jnp.zeros((1, d_model), jnp.float32),
        w1=nrm(ks[3], (3 * d_model, d_inner)),      # fused k=3 conv taps
        b1=nrm(ks[4], (1, d_inner), dtype=jnp.float32),
        w2=nrm(ks[5], (d_inner, d_model)),          # k=1 conv
        b2=nrm(ks[6], (1, d_model), dtype=jnp.float32),
    )


def init_params(key, *, n_layer, d_in, d_model, n_head, d_head, d_inner):
    keys = jax.random.split(key, n_layer)
    d_lst = [d_in] + [d_model] * (n_layer - 1)
    layers = [_make_layer(keys[i], d_lst[i], d_model, n_head, d_head, d_inner)
              for i in range(n_layer)]
    stacked = None
    if n_layer > 1:
        stacked = {k: jnp.stack([layers[i][k] for i in range(1, n_layer)], 0)
                   for k in _LAYER_KEYS}
    return dict(layer0=layers[0], stacked=stacked,
                n_layer=n_layer, d_model=d_model, n_head=n_head, d_head=d_head,
                ln_g=jnp.ones((1, d_model), jnp.float32),
                ln_b=jnp.zeros((1, d_model), jnp.float32))


def _pick_vmem_limit_bytes():
    try:
        kind = jax.devices()[0].device_kind.lower()
    except Exception:  # pragma: no cover
        kind = ""
    if "7" in kind:                    # v7x: 64 MiB physical -> leave headroom
        return 48 * 1024 * 1024
    return 64 * 1024 * 1024            # v5e / v6e: 128 MiB physical


def self_attention_encoder(x, params, mask=None, return_attns=False):
    """x: (B, T, d_in) f32; mask: optional bool (B, T), True = padded."""
    B, T, d_in = x.shape
    d_model = params["d_model"]
    n_head = params["n_head"]
    d_head = params["d_head"]
    n_layer = params["n_layer"]
    layer0 = params["layer0"]
    stacked = params["stacked"]
    has_stack = stacked is not None

    pe = sinusoidal_position_encoding(T, d_in)                   # (T, d_in)
    pad = (jnp.zeros((B, T), jnp.float32) if mask is None
           else mask.astype(jnp.float32))
    attn_bias = (pad * jnp.float32(-1e9)).reshape(B, 1, T)       # additive bias
    mask_col = pad.reshape(B, T, 1)                              # zero pad rows

    inputs = [x, pe, attn_bias, mask_col]
    in_specs = [_batch_spec((1, T, d_in)),
                _bcast_spec((T, d_in)),
                _batch_spec((1, 1, T)),
                _batch_spec((1, T, 1))]
    for kname in _LAYER_KEYS:                                    # layer 0
        arr = layer0[kname]
        inputs.append(arr)
        in_specs.append(_bcast_spec(arr.shape))
    if has_stack:                                                # layers 1..L-1
        for kname in _LAYER_KEYS:
            arr = stacked[kname]
            inputs.append(arr)
            in_specs.append(_stack_spec(arr.shape))
    inputs += [params["ln_g"], params["ln_b"]]
    in_specs += [_bcast_spec(params["ln_g"].shape),
                 _bcast_spec(params["ln_b"].shape)]

    kern = functools.partial(
        _encoder_kernel,
        n_layer=n_layer, n_head=n_head, d_head=d_head,
        add_residual0=(d_in == d_model), has_stack=has_stack,
        scale=float(d_model ** 0.5))

    out = pl.pallas_call(
        kern,
        out_shape=jax.ShapeDtypeStruct((B, T, d_model), jnp.float32),
        grid=(B, n_layer),
        in_specs=in_specs,
        out_specs=_batch_spec((1, T, d_model)),
        compiler_params=pltpu.CompilerParams(
            dimension_semantics=("parallel", "arbitrary"),
            vmem_limit_bytes=_pick_vmem_limit_bytes()),
    )(*inputs)

    # TODO(synk): per-layer attention maps are not returned (return_attns path).
    return out, []


# --------------------------------------------------------------------------
if __name__ == "__main__":
    key = jax.random.PRNGKey(0)
    B, T = 2, 8
    n_layer, d_in, d_model = 2, 32, 32
    n_head, d_head, d_inner = 2, 16, 64

    kx, kp = jax.random.split(key)
    x = jax.random.normal(kx, (B, T, d_in), dtype=jnp.float32)
    params = init_params(kp, n_layer=n_layer, d_in=d_in, d_model=d_model,
                         n_head=n_head, d_head=d_head, d_inner=d_inner)

    lengths = jnp.array([8, 6])
    mask = jnp.arange(T)[None, :] >= lengths[:, None]            # True = pad

    out, attns = self_attention_encoder(x, params, mask=mask)
    out = jax.block_until_ready(out)
    assert out.shape == (B, T, d_model)
    assert bool(jnp.all(jnp.isfinite(out)))
    print("KERNEL_OK")
</pallas_src>

<mosaic_0001>
module attributes {stable_mosaic.version = 11 : i64} {
  func.func @_encoder_kernel(%arg0: i32, %arg1: i32, %arg2: memref<1x8x32xf32, #tpu.memory_space<vmem>>, %arg3: memref<8x32xf32, #tpu.memory_space<vmem>>, %arg4: memref<1x1x8xf32, #tpu.memory_space<vmem>>, %arg5: memref<1x8x1xf32, #tpu.memory_space<vmem>>, %arg6: memref<1x32xf32, #tpu.memory_space<vmem>>, %arg7: memref<1x32xf32, #tpu.memory_space<vmem>>, %arg8: memref<32x96xbf16, #tpu.memory_space<vmem>>, %arg9: memref<32x32xbf16, #tpu.memory_space<vmem>>, %arg10: memref<1x32xf32, #tpu.memory_space<vmem>>, %arg11: memref<1x32xf32, #tpu.memory_space<vmem>>, %arg12: memref<1x32xf32, #tpu.memory_space<vmem>>, %arg13: memref<96x64xbf16, #tpu.memory_space<vmem>>, %arg14: memref<1x64xf32, #tpu.memory_space<vmem>>, %arg15: memref<64x32xbf16, #tpu.memory_space<vmem>>, %arg16: memref<1x32xf32, #tpu.memory_space<vmem>>, %arg17: memref<1x1x32xf32, #tpu.memory_space<vmem>>, %arg18: memref<1x1x32xf32, #tpu.memory_space<vmem>>, %arg19: memref<1x32x96xbf16, #tpu.memory_space<vmem>>, %arg20: memref<1x32x32xbf16, #tpu.memory_space<vmem>>, %arg21: memref<1x1x32xf32, #tpu.memory_space<vmem>>, %arg22: memref<1x1x32xf32, #tpu.memory_space<vmem>>, %arg23: memref<1x1x32xf32, #tpu.memory_space<vmem>>, %arg24: memref<1x96x64xbf16, #tpu.memory_space<vmem>>, %arg25: memref<1x1x64xf32, #tpu.memory_space<vmem>>, %arg26: memref<1x64x32xbf16, #tpu.memory_space<vmem>>, %arg27: memref<1x1x32xf32, #tpu.memory_space<vmem>>, %arg28: memref<1x32xf32, #tpu.memory_space<vmem>>, %arg29: memref<1x32xf32, #tpu.memory_space<vmem>>, %arg30: memref<1x8x32xf32, #tpu.memory_space<vmem>>) attributes {dimension_semantics = [#tpu.dimension_semantics<parallel>, #tpu.dimension_semantics<arbitrary>], iteration_bounds = array<i64: 2, 2>, scalar_prefetch = 0 : i64, scratch_operands = 0 : i64, tpu.core_type = #tpu.core_type<tc>, window_params = [{transform_indices = @transform_0, window_bounds = array<i64: 1, 8, 32>}, {pipeline_mode = #tpu.pipeline_mode<synchronous>, transform_indices = @transform_1, window_bounds = array<i64: 8, 32>}, {transform_indices = @transform_2, window_bounds = array<i64: 1, 1, 8>}, {transform_indices = @transform_3, window_bounds = array<i64: 1, 8, 1>}, {pipeline_mode = #tpu.pipeline_mode<synchronous>, transform_indices = @transform_4, window_bounds = array<i64: 1, 32>}, {pipeline_mode = #tpu.pipeline_mode<synchronous>, transform_indices = @transform_5, window_bounds = array<i64: 1, 32>}, {pipeline_mode = #tpu.pipeline_mode<synchronous>, transform_indices = @transform_6, window_bounds = array<i64: 32, 96>}, {pipeline_mode = #tpu.pipeline_mode<synchronous>, transform_indices = @transform_7, window_bounds = array<i64: 32, 32>}, {pipeline_mode = #tpu.pipeline_mode<synchronous>, transform_indices = @transform_8, window_bounds = array<i64: 1, 32>}, {pipeline_mode = #tpu.pipeline_mode<synchronous>, transform_indices = @transform_9, window_bounds = array<i64: 1, 32>}, {pipeline_mode = #tpu.pipeline_mode<synchronous>, transform_indices = @transform_10, window_bounds = array<i64: 1, 32>}, {pipeline_mode = #tpu.pipeline_mode<synchronous>, transform_indices = @transform_11, window_bounds = array<i64: 96, 64>}, {pipeline_mode = #tpu.pipeline_mode<synchronous>, transform_indices = @transform_12, window_bounds = array<i64: 1, 64>}, {pipeline_mode = #tpu.pipeline_mode<synchronous>, transform_indices = @transform_13, window_bounds = array<i64: 64, 32>}, {pipeline_mode = #tpu.pipeline_mode<synchronous>, transform_indices = @transform_14, window_bounds = array<i64: 1, 32>}, {transform_indices = @transform_15, window_bounds = array<i64: 1, 1, 32>}, {transform_indices = @transform_16, window_bounds = array<i64: 1, 1, 32>}, {transform_indices = @transform_17, window_bounds = array<i64: 1, 32, 96>}, {transform_indices = @transform_18, window_bounds = array<i64: 1, 32, 32>}, {transform_indices = @transform_19, window_bounds = array<i64: 1, 1, 32>}, {transform_indices = @transform_20, window_bounds = array<i64: 1, 1, 32>}, {transform_indices = @transform_21, window_bounds = array<i64: 1, 1, 32>}, {transform_indices = @transform_22, window_bounds = array<i64: 1, 96, 64>}, {transform_indices = @transform_23, window_bounds = array<i64: 1, 1, 64>}, {transform_indices = @transform_24, window_bounds = array<i64: 1, 64, 32>}, {transform_indices = @transform_25, window_bounds = array<i64: 1, 1, 32>}, {pipeline_mode = #tpu.pipeline_mode<synchronous>, transform_indices = @transform_26, window_bounds = array<i64: 1, 32>}, {pipeline_mode = #tpu.pipeline_mode<synchronous>, transform_indices = @transform_27, window_bounds = array<i64: 1, 32>}, {transform_indices = @transform_28, window_bounds = array<i64: 1, 8, 32>}]} {
    %c0 = arith.constant 0 : index
    %c0_0 = arith.constant 0 : index
    %c0_1 = arith.constant 0 : index
    %0 = vector.load %arg4[%c0, %c0_0, %c0_1] : memref<1x1x8xf32, #tpu.memory_space<vmem>>, vector<1x1x8xf32>
    %1 = vector.shape_cast %0 : vector<1x1x8xf32> to vector<1x8xf32>
    %c0_2 = arith.constant 0 : index
    %c0_3 = arith.constant 0 : index
    %c0_4 = arith.constant 0 : index
    %2 = vector.load %arg5[%c0_2, %c0_3, %c0_4] : memref<1x8x1xf32, #tpu.memory_space<vmem>>, vector<1x8x1xf32>
    %3 = vector.shape_cast %2 : vector<1x8x1xf32> to vector<8x1xf32>
    %c0_i32 = arith.constant 0 : i32
    %4 = arith.cmpi eq, %arg1, %c0_i32 : i32
    %5 = arith.extui %4 : i1 to i32
    %c0_i32_5 = arith.constant 0 : i32
    %6 = arith.cmpi ne, %5, %c0_i32_5 : i32
    scf.if %6 {
      %c0_9 = arith.constant 0 : index
      %c0_10 = arith.constant 0 : index
      %c0_11 = arith.constant 0 : index
      %13 = vector.load %arg2[%c0_9, %c0_10, %c0_11] : memref<1x8x32xf32, #tpu.memory_space<vmem>>, vector<1x8x32xf32>
      %14 = vector.shape_cast %13 : vector<1x8x32xf32> to vector<8x32xf32>
      %cst = arith.constant 5.65685415 : f32
      %15 = vector.broadcast %cst : f32 to vector<8x32xf32>
      %16 = arith.mulf %14, %15 : vector<8x32xf32>
      %c0_12 = arith.constant 0 : index
      %c0_13 = arith.constant 0 : index
      %17 = vector.load %arg3[%c0_12, %c0_13] : memref<8x32xf32, #tpu.memory_space<vmem>>, vector<8x32xf32>
      %18 = arith.addf %16, %17 : vector<8x32xf32>
      %c0_14 = arith.constant 0 : index
      %c0_15 = arith.constant 0 : index
      %19 = vector.load %arg6[%c0_14, %c0_15] : memref<1x32xf32, #tpu.memory_space<vmem>>, vector<1x32xf32>
      %c0_16 = arith.constant 0 : index
      %c0_17 = arith.constant 0 : index
      %20 = vector.load %arg7[%c0_16, %c0_17] : memref<1x32xf32, #tpu.memory_space<vmem>>, vector<1x32xf32>
      %c0_18 = arith.constant 0 : index
      %c0_19 = arith.constant 0 : index
      %21 = vector.load %arg8[%c0_18, %c0_19] : memref<32x96xbf16, #tpu.memory_space<vmem>>, vector<32x96xbf16>
      %c0_20 = arith.constant 0 : index
      %c0_21 = arith.constant 0 : index
      %22 = vector.load %arg9[%c0_20, %c0_21] : memref<32x32xbf16, #tpu.memory_space<vmem>>, vector<32x32xbf16>
      %c0_22 = arith.constant 0 : index
      %c0_23 = arith.constant 0 : index
      %23 = vector.load %arg10[%c0_22, %c0_23] : memref<1x32xf32, #tpu.memory_space<vmem>>, vector<1x32xf32>
      %c0_24 = arith.constant 0 : index
      %c0_25 = arith.constant 0 : index
      %24 = vector.load %arg11[%c0_24, %c0_25] : memref<1x32xf32, #tpu.memory_space<vmem>>, vector<1x32xf32>
      %c0_26 = arith.constant 0 : index
      %c0_27 = arith.constant 0 : index
      %25 = vector.load %arg12[%c0_26, %c0_27] : memref<1x32xf32, #tpu.memory_space<vmem>>, vector<1x32xf32>
      %c0_28 = arith.constant 0 : index
      %c0_29 = arith.constant 0 : index
      %26 = vector.load %arg13[%c0_28, %c0_29] : memref<96x64xbf16, #tpu.memory_space<vmem>>, vector<96x64xbf16>
      %c0_30 = arith.constant 0 : index
      %c0_31 = arith.constant 0 : index
      %27 = vector.load %arg14[%c0_30, %c0_31] : memref<1x64xf32, #tpu.memory_space<vmem>>, vector<1x64xf32>
      %c0_32 = arith.constant 0 : index
      %c0_33 = arith.constant 0 : index
      %28 = vector.load %arg15[%c0_32, %c0_33] : memref<64x32xbf16, #tpu.memory_space<vmem>>, vector<64x32xbf16>
      %c0_34 = arith.constant 0 : index
      %c0_35 = arith.constant 0 : index
      %29 = vector.load %arg16[%c0_34, %c0_35] : memref<1x32xf32, #tpu.memory_space<vmem>>, vector<1x32xf32>
      %cst_36 = arith.constant dense<0.000000e+00> : vector<8xf32>
      %30 = vector.multi_reduction <add>, %18, %cst_36 [1] : vector<8x32xf32> to vector<8xf32>
      %31 = vector.shape_cast %30 : vector<8xf32> to vector<8x1xf32>
      %cst_37 = arith.constant 3.200000e+01 : f32
      %32 = vector.broadcast %cst_37 : f32 to vector<8x1xf32>
      %33 = arith.divf %31, %32 : vector<8x1xf32>
      %34 = vector.broadcast %33 : vector<8x1xf32> to vector<8x32xf32>
      %35 = arith.subf %18, %34 : vector<8x32xf32>
      %36 = arith.mulf %35, %35 : vector<8x32xf32>
      %cst_38 = arith.constant dense<0.000000e+00> : vector<8xf32>
      %37 = vector.multi_reduction <add>, %36, %cst_38 [1] : vector<8x32xf32> to vector<8xf32>
      %38 = vector.shape_cast %37 : vector<8xf32> to vector<8x1xf32>
      %cst_39 = arith.constant 3.200000e+01 : f32
      %39 = vector.broadcast %cst_39 : f32 to vector<8x1xf32>
      %40 = arith.divf %38, %39 : vector<8x1xf32>
      %41 = vector.broadcast %33 : vector<8x1xf32> to vector<8x32xf32>
      %42 = arith.subf %18, %41 : vector<8x32xf32>
      %cst_40 = arith.constant 9.99999974E-6 : f32
      %43 = vector.broadcast %cst_40 : f32 to vector<8x1xf32>
      %44 = arith.addf %40, %43 : vector<8x1xf32>
      %45 = math.rsqrt %44 : vector<8x1xf32>
      %46 = vector.broadcast %45 : vector<8x1xf32> to vector<8x32xf32>
      %47 = arith.mulf %42, %46 : vector<8x32xf32>
      %48 = vector.broadcast %19 : vector<1x32xf32> to vector<8x32xf32>
      %49 = arith.mulf %47, %48 : vector<8x32xf32>
      %50 = vector.broadcast %20 : vector<1x32xf32> to vector<8x32xf32>
      %51 = arith.addf %49, %50 : vector<8x32xf32>
      %52 = arith.truncf %51 : vector<8x32xf32> to vector<8x32xbf16>
      %cst_41 = arith.constant dense<0.000000e+00> : vector<8x96xf32>
      %53 = tpu.matmul %52, %21, %cst_41 {dimension_numbers = #tpu.dot_dimension_numbers<[1], [0], [0], [1], [0, 0, 1, 1], [], []>} : vector<8x32xbf16>, vector<32x96xbf16>, vector<8x96xf32> -> vector<8x96xf32>
      %54 = vector.extract_strided_slice %53 {offsets = [0, 0], sizes = [8, 16], strides = [1, 1]} : vector<8x96xf32> to vector<8x16xf32>
      %55 = arith.truncf %54 : vector<8x16xf32> to vector<8x16xbf16>
      %56 = vector.extract_strided_slice %53 {offsets = [0, 32], sizes = [8, 16], strides = [1, 1]} : vector<8x96xf32> to vector<8x16xf32>
      %57 = arith.truncf %56 : vector<8x16xf32> to vector<8x16xbf16>
      %58 = vector.extract_strided_slice %53 {offsets = [0, 64], sizes = [8, 16], strides = [1, 1]} : vector<8x96xf32> to vector<8x16xf32>
      %59 = arith.truncf %58 : vector<8x16xf32> to vector<8x16xbf16>
      %cst_42 = arith.constant dense<0.000000e+00> : vector<8x8xf32>
      %60 = tpu.matmul %55, %57, %cst_42 {dimension_numbers = #tpu.dot_dimension_numbers<[1], [1], [0], [0], [0, 0, 1, 0], [], []>} : vector<8x16xbf16>, vector<8x16xbf16>, vector<8x8xf32> -> vector<8x8xf32>
      %61 = vector.broadcast %1 : vector<1x8xf32> to vector<8x8xf32>
      %62 = arith.addf %60, %61 : vector<8x8xf32>
      %cst_43 = arith.constant dense<0xFF800000> : vector<8xf32>
      %63 = vector.multi_reduction <maximumf>, %62, %cst_43 [1] : vector<8x8xf32> to vector<8xf32>
      %64 = vector.shape_cast %63 : vector<8xf32> to vector<8x1xf32>
      %65 = vector.broadcast %64 : vector<8x1xf32> to vector<8x8xf32>
      %66 = arith.subf %62, %65 : vector<8x8xf32>
      %67 = math.exp %66 : vector<8x8xf32>
      %cst_44 = arith.constant dense<0.000000e+00> : vector<8xf32>
      %68 = vector.multi_reduction <add>, %67, %cst_44 [1] : vector<8x8xf32> to vector<8xf32>
      %69 = vector.shape_cast %68 : vector<8xf32> to vector<8x1xf32>
      %70 = arith.truncf %67 : vector<8x8xf32> to vector<8x8xbf16>
      %cst_45 = arith.constant dense<0.000000e+00> : vector<8x16xf32>
      %71 = tpu.matmul %70, %59, %cst_45 {dimension_numbers = #tpu.dot_dimension_numbers<[1], [0], [0], [1], [0, 0, 1, 1], [], []>} : vector<8x8xbf16>, vector<8x16xbf16>, vector<8x16xf32> -> vector<8x16xf32>
      %72 = tpu.reciprocal %69 {approx = true} : vector<8x1xf32> -> vector<8x1xf32>
      %73 = vector.broadcast %72 : vector<8x1xf32> to vector<8x16xf32>
      %74 = arith.mulf %71, %73 : vector<8x16xf32>
      %75 = vector.extract_strided_slice %53 {offsets = [0, 16], sizes = [8, 16], strides = [1, 1]} : vector<8x96xf32> to vector<8x16xf32>
      %76 = arith.truncf %75 : vector<8x16xf32> to vector<8x16xbf16>
      %77 = vector.extract_strided_slice %53 {offsets = [0, 48], sizes = [8, 16], strides = [1, 1]} : vector<8x96xf32> to vector<8x16xf32>
      %78 = arith.truncf %77 : vector<8x16xf32> to vector<8x16xbf16>
      %79 = vector.extract_strided_slice %53 {offsets = [0, 80], sizes = [8, 16], strides = [1, 1]} : vector<8x96xf32> to vector<8x16xf32>
      %80 = arith.truncf %79 : vector<8x16xf32> to vector<8x16xbf16>
      %cst_46 = arith.constant dense<0.000000e+00> : vector<8x8xf32>
      %81 = tpu.matmul %76, %78, %cst_46 {dimension_numbers = #tpu.dot_dimension_numbers<[1], [1], [0], [0], [0, 0, 1, 0], [], []>} : vector<8x16xbf16>, vector<8x16xbf16>, vector<8x8xf32> -> vector<8x8xf32>
      %82 = vector.broadcast %1 : vector<1x8xf32> to vector<8x8xf32>
      %83 = arith.addf %81, %82 : vector<8x8xf32>
      %cst_47 = arith.constant dense<0xFF800000> : vector<8xf32>
      %84 = vector.multi_reduction <maximumf>, %83, %cst_47 [1] : vector<8x8xf32> to vector<8xf32>
      %85 = vector.shape_cast %84 : vector<8xf32> to vector<8x1xf32>
      %86 = vector.broadcast %85 : vector<8x1xf32> to vector<8x8xf32>
      %87 = arith.subf %83, %86 : vector<8x8xf32>
      %88 = math.exp %87 : vector<8x8xf32>
      %cst_48 = arith.constant dense<0.000000e+00> : vector<8xf32>
      %89 = vector.multi_reduction <add>, %88, %cst_48 [1] : vector<8x8xf32> to vector<8xf32>
      %90 = vector.shape_cast %89 : vector<8xf32> to vector<8x1xf32>
      %91 = arith.truncf %88 : vector<8x8xf32> to vector<8x8xbf16>
      %cst_49 = arith.constant dense<0.000000e+00> : vector<8x16xf32>
      %92 = tpu.matmul %91, %80, %cst_49 {dimension_numbers = #tpu.dot_dimension_numbers<[1], [0], [0], [1], [0, 0, 1, 1], [], []>} : vector<8x8xbf16>, vector<8x16xbf16>, vector<8x16xf32> -> vector<8x16xf32>
      %93 = tpu.reciprocal %90 {approx = true} : vector<8x1xf32> -> vector<8x1xf32>
      %94 = vector.broadcast %93 : vector<8x1xf32> to vector<8x16xf32>
      %95 = arith.mulf %92, %94 : vector<8x16xf32>
      %96 = tpu.concatenate %74, %95 in 1 : vector<8x16xf32>, vector<8x16xf32> -> vector<8x32xf32>
      %97 = arith.truncf %96 : vector<8x32xf32> to vector<8x32xbf16>
      %cst_50 = arith.constant dense<0.000000e+00> : vector<8x32xf32>
      %98 = tpu.matmul %97, %22, %cst_50 {dimension_numbers = #tpu.dot_dimension_numbers<[1], [0], [0], [1], [0, 0, 1, 1], [], []>} : vector<8x32xbf16>, vector<32x32xbf16>, vector<8x32xf32> -> vector<8x32xf32>
      %99 = vector.broadcast %23 : vector<1x32xf32> to vector<8x32xf32>
      %100 = arith.addf %98, %99 : vector<8x32xf32>
      %101 = arith.addf %100, %18 : vector<8x32xf32>
      %cst_51 = arith.constant 5.000000e-01 : f32
      %102 = vector.broadcast %cst_51 : f32 to vector<8x1xf32>
      %103 = arith.cmpf ogt, %3, %102 : vector<8x1xf32>
      %cst_52 = arith.constant 0.000000e+00 : f32
      %104 = vector.shape_cast %103 : vector<8x1xi1> to vector<8x1xi1>
      %105 = vector.broadcast %104 : vector<8x1xi1> to vector<8x32xi1>
      %106 = vector.broadcast %cst_52 : f32 to vector<8x32xf32>
      %107 = arith.select %105, %106, %101 : vector<8x32xi1>, vector<8x32xf32>
      %cst_53 = arith.constant dense<0.000000e+00> : vector<8xf32>
      %108 = vector.multi_reduction <add>, %107, %cst_53 [1] : vector<8x32xf32> to vector<8xf32>
      %109 = vector.shape_cast %108 : vector<8xf32> to vector<8x1xf32>
      %cst_54 = arith.constant 3.200000e+01 : f32
      %110 = vector.broadcast %cst_54 : f32 to vector<8x1xf32>
      %111 = arith.divf %109, %110 : vector<8x1xf32>
      %112 = vector.broadcast %111 : vector<8x1xf32> to vector<8x32xf32>
      %113 = arith.subf %107, %112 : vector<8x32xf32>
      %114 = arith.mulf %113, %113 : vector<8x32xf32>
      %cst_55 = arith.constant dense<0.000000e+00> : vector<8xf32>
      %115 = vector.multi_reduction <add>, %114, %cst_55 [1] : vector<8x32xf32> to vector<8xf32>
      %116 = vector.shape_cast %115 : vector<8xf32> to vector<8x1xf32>
      %cst_56 = arith.constant 3.200000e+01 : f32
      %117 = vector.broadcast %cst_56 : f32 to vector<8x1xf32>
      %118 = arith.divf %116, %117 : vector<8x1xf32>
      %119 = vector.broadcast %111 : vector<8x1xf32> to vector<8x32xf32>
      %120 = arith.subf %107, %119 : vector<8x32xf32>
      %cst_57 = arith.constant 9.99999974E-6 : f32
      %121 = vector.broadcast %cst_57 : f32 to vector<8x1xf32>
      %122 = arith.addf %118, %121 : vector<8x1xf32>
      %123 = math.rsqrt %122 : vector<8x1xf32>
      %124 = vector.broadcast %123 : vector<8x1xf32> to vector<8x32xf32>
      %125 = arith.mulf %120, %124 : vector<8x32xf32>
      %126 = vector.broadcast %24 : vector<1x32xf32> to vector<8x32xf32>
      %127 = arith.mulf %125, %126 : vector<8x32xf32>
      %128 = vector.broadcast %25 : vector<1x32xf32> to vector<8x32xf32>
      %129 = arith.addf %127, %128 : vector<8x32xf32>
      %130 = tpu.iota {dimensions = array<i32: 0>} : vector<8x32xi32>
      %c0_i32_58 = arith.constant 0 : i32
      %131 = vector.broadcast %c0_i32_58 : i32 to vector<8x32xi32>
      %132 = arith.cmpi eq, %130, %131 : vector<8x32xi32>
      %c1_i32_59 = arith.constant 1 : i32
      %133 = tpu.dynamic_rotate %129 by %c1_i32_59 dim 0 : vector<8x32xf32>, i32 -> vector<8x32xf32>
      %cst_60 = arith.constant 0.000000e+00 : f32
      %134 = vector.broadcast %cst_60 : f32 to vector<8x32xf32>
      %135 = arith.select %132, %134, %133 : vector<8x32xi1>, vector<8x32xf32>
      %c7_i32 = arith.constant 7 : i32
      %136 = vector.broadcast %c7_i32 : i32 to vector<8x32xi32>
      %137 = arith.cmpi eq, %130, %136 : vector<8x32xi32>
      %c7_i32_61 = arith.constant 7 : i32
      %138 = tpu.dynamic_rotate %129 by %c7_i32_61 dim 0 : vector<8x32xf32>, i32 -> vector<8x32xf32>
      %cst_62 = arith.constant 0.000000e+00 : f32
      %139 = vector.broadcast %cst_62 : f32 to vector<8x32xf32>
      %140 = arith.select %137, %139, %138 : vector<8x32xi1>, vector<8x32xf32>
      %141 = tpu.concatenate %135, %129, %140 in 1 : vector<8x32xf32>, vector<8x32xf32>, vector<8x32xf32> -> vector<8x96xf32>
      %142 = arith.truncf %141 : vector<8x96xf32> to vector<8x96xbf16>
      %cst_63 = arith.constant dense<0.000000e+00> : vector<8x64xf32>
      %143 = tpu.matmul %142, %26, %cst_63 {dimension_numbers = #tpu.dot_dimension_numbers<[1], [0], [0], [1], [0, 0, 1, 1], [], []>} : vector<8x96xbf16>, vector<96x64xbf16>, vector<8x64xf32> -> vector<8x64xf32>
      %144 = vector.broadcast %27 : vector<1x64xf32> to vector<8x64xf32>
      %145 = arith.addf %143, %144 : vector<8x64xf32>
      %cst_64 = arith.constant 0.000000e+00 : f32
      %146 = vector.broadcast %cst_64 : f32 to vector<8x64xf32>
      %147 = arith.maximumf %145, %146 : vector<8x64xf32>
      %148 = arith.truncf %147 : vector<8x64xf32> to vector<8x64xbf16>
      %cst_65 = arith.constant dense<0.000000e+00> : vector<8x32xf32>
      %149 = tpu.matmul %148, %28, %cst_65 {dimension_numbers = #tpu.dot_dimension_numbers<[1], [0], [0], [1], [0, 0, 1, 1], [], []>} : vector<8x64xbf16>, vector<64x32xbf16>, vector<8x32xf32> -> vector<8x32xf32>
      %150 = vector.broadcast %29 : vector<1x32xf32> to vector<8x32xf32>
      %151 = arith.addf %149, %150 : vector<8x32xf32>
      %152 = arith.addf %151, %107 : vector<8x32xf32>
      %cst_66 = arith.constant 5.000000e-01 : f32
      %153 = vector.broadcast %cst_66 : f32 to vector<8x1xf32>
      %154 = arith.cmpf ogt, %3, %153 : vector<8x1xf32>
      %cst_67 = arith.constant 0.000000e+00 : f32
      %155 = vector.shape_cast %154 : vector<8x1xi1> to vector<8x1xi1>
      %156 = vector.broadcast %155 : vector<8x1xi1> to vector<8x32xi1>
      %157 = vector.broadcast %cst_67 : f32 to vector<8x32xf32>
      %158 = arith.select %156, %157, %152 : vector<8x32xi1>, vector<8x32xf32>
      %c0_68 = arith.constant 0 : index
      %c0_69 = arith.constant 0 : index
      %c0_70 = arith.constant 0 : index
      %159 = vector.load %arg30[%c0_68, %c0_69, %c0_70] : memref<1x8x32xf32, #tpu.memory_space<vmem>>, vector<1x8x32xf32>
      %160 = vector.shape_cast %159 : vector<1x8x32xf32> to vector<8x32xf32>
      %161 = vector.shape_cast %158 : vector<8x32xf32> to vector<1x8x32xf32>
      tpu.vector_store %arg30[%c0_68, %c0_69, %c0_70], %161 {strides = array<i32>} : memref<1x8x32xf32, #tpu.memory_space<vmem>>, vector<1x8x32xf32>,
    } else {
    }
    %c0_i32_6 = arith.constant 0 : i32
    %7 = arith.cmpi sgt, %arg1, %c0_i32_6 : i32
    %8 = arith.extui %7 : i1 to i32
    %c0_i32_7 = arith.constant 0 : i32
    %9 = arith.cmpi ne, %8, %c0_i32_7 : i32
    scf.if %9 {
      %c0_9 = arith.constant 0 : index
      %c0_10 = arith.constant 0 : index
      %c0_11 = arith.constant 0 : index
      %13 = vector.load %arg17[%c0_9, %c0_10, %c0_11] : memref<1x1x32xf32, #tpu.memory_space<vmem>>, vector<1x1x32xf32>
      %14 = vector.shape_cast %13 : vector<1x1x32xf32> to vector<1x32xf32>
      %c0_12 = arith.constant 0 : index
      %c0_13 = arith.constant 0 : index
      %c0_14 = arith.constant 0 : index
      %15 = vector.load %arg18[%c0_12, %c0_13, %c0_14] : memref<1x1x32xf32, #tpu.memory_space<vmem>>, vector<1x1x32xf32>
      %16 = vector.shape_cast %15 : vector<1x1x32xf32> to vector<1x32xf32>
      %c0_15 = arith.constant 0 : index
      %c0_16 = arith.constant 0 : index
      %c0_17 = arith.constant 0 : index
      %17 = vector.load %arg19[%c0_15, %c0_16, %c0_17] : memref<1x32x96xbf16, #tpu.memory_space<vmem>>, vector<1x32x96xbf16>
      %18 = vector.shape_cast %17 : vector<1x32x96xbf16> to vector<32x96xbf16>
      %c0_18 = arith.constant 0 : index
      %c0_19 = arith.constant 0 : index
      %c0_20 = arith.constant 0 : index
      %19 = vector.load %arg20[%c0_18, %c0_19, %c0_20] : memref<1x32x32xbf16, #tpu.memory_space<vmem>>, vector<1x32x32xbf16>
      %20 = vector.shape_cast %19 : vector<1x32x32xbf16> to vector<32x32xbf16>
      %c0_21 = arith.constant 0 : index
      %c0_22 = arith.constant 0 : index
      %c0_23 = arith.constant 0 : index
      %21 = vector.load %arg21[%c0_21, %c0_22, %c0_23] : memref<1x1x32xf32, #tpu.memory_space<vmem>>, vector<1x1x32xf32>
      %22 = vector.shape_cast %21 : vector<1x1x32xf32> to vector<1x32xf32>
      %c0_24 = arith.constant 0 : index
      %c0_25 = arith.constant 0 : index
      %c0_26 = arith.constant 0 : index
      %23 = vector.load %arg22[%c0_24, %c0_25, %c0_26] : memref<1x1x32xf32, #tpu.memory_space<vmem>>, vector<1x1x32xf32>
      %24 = vector.shape_cast %23 : vector<1x1x32xf32> to vector<1x32xf32>
      %c0_27 = arith.constant 0 : index
      %c0_28 = arith.constant 0 : index
      %c0_29 = arith.constant 0 : index
      %25 = vector.load %arg23[%c0_27, %c0_28, %c0_29] : memref<1x1x32xf32, #tpu.memory_space<vmem>>, vector<1x1x32xf32>
      %26 = vector.shape_cast %25 : vector<1x1x32xf32> to vector<1x32xf32>
      %c0_30 = arith.constant 0 : index
      %c0_31 = arith.constant 0 : index
      %c0_32 = arith.constant 0 : index
      %27 = vector.load %arg24[%c0_30, %c0_31, %c0_32] : memref<1x96x64xbf16, #tpu.memory_space<vmem>>, vector<1x96x64xbf16>
      %28 = vector.shape_cast %27 : vector<1x96x64xbf16> to vector<96x64xbf16>
      %c0_33 = arith.constant 0 : index
      %c0_34 = arith.constant 0 : index
      %c0_35 = arith.constant 0 : index
      %29 = vector.load %arg25[%c0_33, %c0_34, %c0_35] : memref<1x1x64xf32, #tpu.memory_space<vmem>>, vector<1x1x64xf32>
      %30 = vector.shape_cast %29 : vector<1x1x64xf32> to vector<1x64xf32>
      %c0_36 = arith.constant 0 : index
      %c0_37 = arith.constant 0 : index
      %c0_38 = arith.constant 0 : index
      %31 = vector.load %arg26[%c0_36, %c0_37, %c0_38] : memref<1x64x32xbf16, #tpu.memory_space<vmem>>, vector<1x64x32xbf16>
      %32 = vector.shape_cast %31 : vector<1x64x32xbf16> to vector<64x32xbf16>
      %c0_39 = arith.constant 0 : index
      %c0_40 = arith.constant 0 : index
      %c0_41 = arith.constant 0 : index
      %33 = vector.load %arg27[%c0_39, %c0_40, %c0_41] : memref<1x1x32xf32, #tpu.memory_space<vmem>>, vector<1x1x32xf32>
      %34 = vector.shape_cast %33 : vector<1x1x32xf32> to vector<1x32xf32>
      %c0_42 = arith.constant 0 : index
      %c0_43 = arith.constant 0 : index
      %c0_44 = arith.constant 0 : index
      %35 = vector.load %arg30[%c0_42, %c0_43, %c0_44] : memref<1x8x32xf32, #tpu.memory_space<vmem>>, vector<1x8x32xf32>
      %36 = vector.shape_cast %35 : vector<1x8x32xf32> to vector<8x32xf32>
      %cst = arith.constant dense<0.000000e+00> : vector<8xf32>
      %37 = vector.multi_reduction <add>, %36, %cst [1] : vector<8x32xf32> to vector<8xf32>
      %38 = vector.shape_cast %37 : vector<8xf32> to vector<8x1xf32>
      %cst_45 = arith.constant 3.200000e+01 : f32
      %39 = vector.broadcast %cst_45 : f32 to vector<8x1xf32>
      %40 = arith.divf %38, %39 : vector<8x1xf32>
      %41 = vector.broadcast %40 : vector<8x1xf32> to vector<8x32xf32>
      %42 = arith.subf %36, %41 : vector<8x32xf32>
      %43 = arith.mulf %42, %42 : vector<8x32xf32>
      %cst_46 = arith.constant dense<0.000000e+00> : vector<8xf32>
      %44 = vector.multi_reduction <add>, %43, %cst_46 [1] : vector<8x32xf32> to vector<8xf32>
      %45 = vector.shape_cast %44 : vector<8xf32> to vector<8x1xf32>
      %cst_47 = arith.constant 3.200000e+01 : f32
      %46 = vector.broadcast %cst_47 : f32 to vector<8x1xf32>
      %47 = arith.divf %45, %46 : vector<8x1xf32>
      %48 = vector.broadcast %40 : vector<8x1xf32> to vector<8x32xf32>
      %49 = arith.subf %36, %48 : vector<8x32xf32>
      %cst_48 = arith.constant 9.99999974E-6 : f32
      %50 = vector.broadcast %cst_48 : f32 to vector<8x1xf32>
      %51 = arith.addf %47, %50 : vector<8x1xf32>
      %52 = math.rsqrt %51 : vector<8x1xf32>
      %53 = vector.broadcast %52 : vector<8x1xf32> to vector<8x32xf32>
      %54 = arith.mulf %49, %53 : vector<8x32xf32>
      %55 = vector.broadcast %14 : vector<1x32xf32> to vector<8x32xf32>
      %56 = arith.mulf %54, %55 : vector<8x32xf32>
      %57 = vector.broadcast %16 : vector<1x32xf32> to vector<8x32xf32>
      %58 = arith.addf %56, %57 : vector<8x32xf32>
      %59 = arith.truncf %58 : vector<8x32xf32> to vector<8x32xbf16>
      %cst_49 = arith.constant dense<0.000000e+00> : vector<8x96xf32>
      %60 = tpu.matmul %59, %18, %cst_49 {dimension_numbers = #tpu.dot_dimension_numbers<[1], [0], [0], [1], [0, 0, 1, 1], [], []>} : vector<8x32xbf16>, vector<32x96xbf16>, vector<8x96xf32> -> vector<8x96xf32>
      %61 = vector.extract_strided_slice %60 {offsets = [0, 0], sizes = [8, 16], strides = [1, 1]} : vector<8x96xf32> to vector<8x16xf32>
      %62 = arith.truncf %61 : vector<8x16xf32> to vector<8x16xbf16>
      %63 = vector.extract_strided_slice %60 {offsets = [0, 32], sizes = [8, 16], strides = [1, 1]} : vector<8x96xf32> to vector<8x16xf32>
      %64 = arith.truncf %63 : vector<8x16xf32> to vector<8x16xbf16>
      %65 = vector.extract_strided_slice %60 {offsets = [0, 64], sizes = [8, 16], strides = [1, 1]} : vector<8x96xf32> to vector<8x16xf32>
      %66 = arith.truncf %65 : vector<8x16xf32> to vector<8x16xbf16>
      %cst_50 = arith.constant dense<0.000000e+00> : vector<8x8xf32>
      %67 = tpu.matmul %62, %64, %cst_50 {dimension_numbers = #tpu.dot_dimension_numbers<[1], [1], [0], [0], [0, 0, 1, 0], [], []>} : vector<8x16xbf16>, vector<8x16xbf16>, vector<8x8xf32> -> vector<8x8xf32>
      %68 = vector.broadcast %1 : vector<1x8xf32> to vector<8x8xf32>
      %69 = arith.addf %67, %68 : vector<8x8xf32>
      %cst_51 = arith.constant dense<0xFF800000> : vector<8xf32>
      %70 = vector.multi_reduction <maximumf>, %69, %cst_51 [1] : vector<8x8xf32> to vector<8xf32>
      %71 = vector.shape_cast %70 : vector<8xf32> to vector<8x1xf32>
      %72 = vector.broadcast %71 : vector<8x1xf32> to vector<8x8xf32>
      %73 = arith.subf %69, %72 : vector<8x8xf32>
      %74 = math.exp %73 : vector<8x8xf32>
      %cst_52 = arith.constant dense<0.000000e+00> : vector<8xf32>
      %75 = vector.multi_reduction <add>, %74, %cst_52 [1] : vector<8x8xf32> to vector<8xf32>
      %76 = vector.shape_cast %75 : vector<8xf32> to vector<8x1xf32>
      %77 = arith.truncf %74 : vector<8x8xf32> to vector<8x8xbf16>
      %cst_53 = arith.constant dense<0.000000e+00> : vector<8x16xf32>
      %78 = tpu.matmul %77, %66, %cst_53 {dimension_numbers = #tpu.dot_dimension_numbers<[1], [0], [0], [1], [0, 0, 1, 1], [], []>} : vector<8x8xbf16>, vector<8x16xbf16>, vector<8x16xf32> -> vector<8x16xf32>
      %79 = tpu.reciprocal %76 {approx = true} : vector<8x1xf32> -> vector<8x1xf32>
      %80 = vector.broadcast %79 : vector<8x1xf32> to vector<8x16xf32>
      %81 = arith.mulf %78, %80 : vector<8x16xf32>
      %82 = vector.extract_strided_slice %60 {offsets = [0, 16], sizes = [8, 16], strides = [1, 1]} : vector<8x96xf32> to vector<8x16xf32>
      %83 = arith.truncf %82 : vector<8x16xf32> to vector<8x16xbf16>
      %84 = vector.extract_strided_slice %60 {offsets = [0, 48], sizes = [8, 16], strides = [1, 1]} : vector<8x96xf32> to vector<8x16xf32>
      %85 = arith.truncf %84 : vector<8x16xf32> to vector<8x16xbf16>
      %86 = vector.extract_strided_slice %60 {offsets = [0, 80], sizes = [8, 16], strides = [1, 1]} : vector<8x96xf32> to vector<8x16xf32>
      %87 = arith.truncf %86 : vector<8x16xf32> to vector<8x16xbf16>
      %cst_54 = arith.constant dense<0.000000e+00> : vector<8x8xf32>
      %88 = tpu.matmul %83, %85, %cst_54 {dimension_numbers = #tpu.dot_dimension_numbers<[1], [1], [0], [0], [0, 0, 1, 0], [], []>} : vector<8x16xbf16>, vector<8x16xbf16>, vector<8x8xf32> -> vector<8x8xf32>
      %89 = vector.broadcast %1 : vector<1x8xf32> to vector<8x8xf32>
      %90 = arith.addf %88, %89 : vector<8x8xf32>
      %cst_55 = arith.constant dense<0xFF800000> : vector<8xf32>
      %91 = vector.multi_reduction <maximumf>, %90, %cst_55 [1] : vector<8x8xf32> to vector<8xf32>
      %92 = vector.shape_cast %91 : vector<8xf32> to vector<8x1xf32>
      %93 = vector.broadcast %92 : vector<8x1xf32> to vector<8x8xf32>
      %94 = arith.subf %90, %93 : vector<8x8xf32>
      %95 = math.exp %94 : vector<8x8xf32>
      %cst_56 = arith.constant dense<0.000000e+00> : vector<8xf32>
      %96 = vector.multi_reduction <add>, %95, %cst_56 [1] : vector<8x8xf32> to vector<8xf32>
      %97 = vector.shape_cast %96 : vector<8xf32> to vector<8x1xf32>
      %98 = arith.truncf %95 : vector<8x8xf32> to vector<8x8xbf16>
      %cst_57 = arith.constant dense<0.000000e+00> : vector<8x16xf32>
      %99 = tpu.matmul %98, %87, %cst_57 {dimension_numbers = #tpu.dot_dimension_numbers<[1], [0], [0], [1], [0, 0, 1, 1], [], []>} : vector<8x8xbf16>, vector<8x16xbf16>, vector<8x16xf32> -> vector<8x16xf32>
      %100 = tpu.reciprocal %97 {approx = true} : vector<8x1xf32> -> vector<8x1xf32>
      %101 = vector.broadcast %100 : vector<8x1xf32> to vector<8x16xf32>
      %102 = arith.mulf %99, %101 : vector<8x16xf32>
      %103 = tpu.concatenate %81, %102 in 1 : vector<8x16xf32>, vector<8x16xf32> -> vector<8x32xf32>
      %104 = arith.truncf %103 : vector<8x32xf32> to vector<8x32xbf16>
      %cst_58 = arith.constant dense<0.000000e+00> : vector<8x32xf32>
      %105 = tpu.matmul %104, %20, %cst_58 {dimension_numbers = #tpu.dot_dimension_numbers<[1], [0], [0], [1], [0, 0, 1, 1], [], []>} : vector<8x32xbf16>, vector<32x32xbf16>, vector<8x32xf32> -> vector<8x32xf32>
      %106 = vector.broadcast %22 : vector<1x32xf32> to vector<8x32xf32>
      %107 = arith.addf %105, %106 : vector<8x32xf32>
      %108 = arith.addf %107, %36 : vector<8x32xf32>
      %cst_59 = arith.constant 5.000000e-01 : f32
      %109 = vector.broadcast %cst_59 : f32 to vector<8x1xf32>
      %110 = arith.cmpf ogt, %3, %109 : vector<8x1xf32>
      %cst_60 = arith.constant 0.000000e+00 : f32
      %111 = vector.shape_cast %110 : vector<8x1xi1> to vector<8x1xi1>
      %112 = vector.broadcast %111 : vector<8x1xi1> to vector<8x32xi1>
      %113 = vector.broadcast %cst_60 : f32 to vector<8x32xf32>
      %114 = arith.select %112, %113, %108 : vector<8x32xi1>, vector<8x32xf32>
      %cst_61 = arith.constant dense<0.000000e+00> : vector<8xf32>
      %115 = vector.multi_reduction <add>, %114, %cst_61 [1] : vector<8x32xf32> to vector<8xf32>
      %116 = vector.shape_cast %115 : vector<8xf32> to vector<8x1xf32>
      %cst_62 = arith.constant 3.200000e+01 : f32
      %117 = vector.broadcast %cst_62 : f32 to vector<8x1xf32>
      %118 = arith.divf %116, %117 : vector<8x1xf32>
      %119 = vector.broadcast %118 : vector<8x1xf32> to vector<8x32xf32>
      %120 = arith.subf %114, %119 : vector<8x32xf32>
      %121 = arith.mulf %120, %120 : vector<8x32xf32>
      %cst_63 = arith.constant dense<0.000000e+00> : vector<8xf32>
      %122 = vector.multi_reduction <add>, %121, %cst_63 [1] : vector<8x32xf32> to vector<8xf32>
      %123 = vector.shape_cast %122 : vector<8xf32> to vector<8x1xf32>
      %cst_64 = arith.constant 3.200000e+01 : f32
      %124 = vector.broadcast %cst_64 : f32 to vector<8x1xf32>
      %125 = arith.divf %123, %124 : vector<8x1xf32>
      %126 = vector.broadcast %118 : vector<8x1xf32> to vector<8x32xf32>
      %127 = arith.subf %114, %126 : vector<8x32xf32>
      %cst_65 = arith.constant 9.99999974E-6 : f32
      %128 = vector.broadcast %cst_65 : f32 to vector<8x1xf32>
      %129 = arith.addf %125, %128 : vector<8x1xf32>
      %130 = math.rsqrt %129 : vector<8x1xf32>
      %131 = vector.broadcast %130 : vector<8x1xf32> to vector<8x32xf32>
      %132 = arith.mulf %127, %131 : vector<8x32xf32>
      %133 = vector.broadcast %24 : vector<1x32xf32> to vector<8x32xf32>
      %134 = arith.mulf %132, %133 : vector<8x32xf32>
      %135 = vector.broadcast %26 : vector<1x32xf32> to vector<8x32xf32>
      %136 = arith.addf %134, %135 : vector<8x32xf32>
      %137 = tpu.iota {dimensions = array<i32: 0>} : vector<8x32xi32>
      %c0_i32_66 = arith.constant 0 : i32
      %138 = vector.broadcast %c0_i32_66 : i32 to vector<8x32xi32>
      %139 = arith.cmpi eq, %137, %138 : vector<8x32xi32>
      %c1_i32_67 = arith.constant 1 : i32
      %140 = tpu.dynamic_rotate %136 by %c1_i32_67 dim 0 : vector<8x32xf32>, i32 -> vector<8x32xf32>
      %cst_68 = arith.constant 0.000000e+00 : f32
      %141 = vector.broadcast %cst_68 : f32 to vector<8x32xf32>
      %142 = arith.select %139, %141, %140 : vector<8x32xi1>, vector<8x32xf32>
      %c7_i32 = arith.constant 7 : i32
      %143 = vector.broadcast %c7_i32 : i32 to vector<8x32xi32>
      %144 = arith.cmpi eq, %137, %143 : vector<8x32xi32>
      %c7_i32_69 = arith.constant 7 : i32
      %145 = tpu.dynamic_rotate %136 by %c7_i32_69 dim 0 : vector<8x32xf32>, i32 -> vector<8x32xf32>
      %cst_70 = arith.constant 0.000000e+00 : f32
      %146 = vector.broadcast %cst_70 : f32 to vector<8x32xf32>
      %147 = arith.select %144, %146, %145 : vector<8x32xi1>, vector<8x32xf32>
      %148 = tpu.concatenate %142, %136, %147 in 1 : vector<8x32xf32>, vector<8x32xf32>, vector<8x32xf32> -> vector<8x96xf32>
      %149 = arith.truncf %148 : vector<8x96xf32> to vector<8x96xbf16>
      %cst_71 = arith.constant dense<0.000000e+00> : vector<8x64xf32>
      %150 = tpu.matmul %149, %28, %cst_71 {dimension_numbers = #tpu.dot_dimension_numbers<[1], [0], [0], [1], [0, 0, 1, 1], [], []>} : vector<8x96xbf16>, vector<96x64xbf16>, vector<8x64xf32> -> vector<8x64xf32>
      %151 = vector.broadcast %30 : vector<1x64xf32> to vector<8x64xf32>
      %152 = arith.addf %150, %151 : vector<8x64xf32>
      %cst_72 = arith.constant 0.000000e+00 : f32
      %153 = vector.broadcast %cst_72 : f32 to vector<8x64xf32>
      %154 = arith.maximumf %152, %153 : vector<8x64xf32>
      %155 = arith.truncf %154 : vector<8x64xf32> to vector<8x64xbf16>
      %cst_73 = arith.constant dense<0.000000e+00> : vector<8x32xf32>
      %156 = tpu.matmul %155, %32, %cst_73 {dimension_numbers = #tpu.dot_dimension_numbers<[1], [0], [0], [1], [0, 0, 1, 1], [], []>} : vector<8x64xbf16>, vector<64x32xbf16>, vector<8x32xf32> -> vector<8x32xf32>
      %157 = vector.broadcast %34 : vector<1x32xf32> to vector<8x32xf32>
      %158 = arith.addf %156, %157 : vector<8x32xf32>
      %159 = arith.addf %158, %114 : vector<8x32xf32>
      %cst_74 = arith.constant 5.000000e-01 : f32
      %160 = vector.broadcast %cst_74 : f32 to vector<8x1xf32>
      %161 = arith.cmpf ogt, %3, %160 : vector<8x1xf32>
      %cst_75 = arith.constant 0.000000e+00 : f32
      %162 = vector.shape_cast %161 : vector<8x1xi1> to vector<8x1xi1>
      %163 = vector.broadcast %162 : vector<8x1xi1> to vector<8x32xi1>
      %164 = vector.broadcast %cst_75 : f32 to vector<8x32xf32>
      %165 = arith.select %163, %164, %159 : vector<8x32xi1>, vector<8x32xf32>
      %c0_76 = arith.constant 0 : index
      %c0_77 = arith.constant 0 : index
      %c0_78 = arith.constant 0 : index
      %166 = vector.load %arg30[%c0_76, %c0_77, %c0_78] : memref<1x8x32xf32, #tpu.memory_space<vmem>>, vector<1x8x32xf32>
      %167 = vector.shape_cast %166 : vector<1x8x32xf32> to vector<8x32xf32>
      %168 = vector.shape_cast %165 : vector<8x32xf32> to vector<1x8x32xf32>
      tpu.vector_store %arg30[%c0_76, %c0_77, %c0_78], %168 {strides = array<i32>} : memref<1x8x32xf32, #tpu.memory_space<vmem>>, vector<1x8x32xf32>,
    } else {
    }
    %c1_i32 = arith.constant 1 : i32
    %10 = arith.cmpi eq, %arg1, %c1_i32 : i32
    %11 = arith.extui %10 : i1 to i32
    %c0_i32_8 = arith.constant 0 : i32
    %12 = arith.cmpi ne, %11, %c0_i32_8 : i32
    scf.if %12 {
      %c0_9 = arith.constant 0 : index
      %c0_10 = arith.constant 0 : index
      %c0_11 = arith.constant 0 : index
      %13 = vector.load %arg30[%c0_9, %c0_10, %c0_11] : memref<1x8x32xf32, #tpu.memory_space<vmem>>, vector<1x8x32xf32>
      %14 = vector.shape_cast %13 : vector<1x8x32xf32> to vector<8x32xf32>
      %c0_12 = arith.constant 0 : index
      %c0_13 = arith.constant 0 : index
      %15 = vector.load %arg28[%c0_12, %c0_13] : memref<1x32xf32, #tpu.memory_space<vmem>>, vector<1x32xf32>
      %c0_14 = arith.constant 0 : index
      %c0_15 = arith.constant 0 : index
      %16 = vector.load %arg29[%c0_14, %c0_15] : memref<1x32xf32, #tpu.memory_space<vmem>>, vector<1x32xf32>
      %cst = arith.constant dense<0.000000e+00> : vector<8xf32>
      %17 = vector.multi_reduction <add>, %14, %cst [1] : vector<8x32xf32> to vector<8xf32>
      %18 = vector.shape_cast %17 : vector<8xf32> to vector<8x1xf32>
      %cst_16 = arith.constant 3.200000e+01 : f32
      %19 = vector.broadcast %cst_16 : f32 to vector<8x1xf32>
      %20 = arith.divf %18, %19 : vector<8x1xf32>
      %21 = vector.broadcast %20 : vector<8x1xf32> to vector<8x32xf32>
      %22 = arith.subf %14, %21 : vector<8x32xf32>
      %23 = arith.mulf %22, %22 : vector<8x32xf32>
      %cst_17 = arith.constant dense<0.000000e+00> : vector<8xf32>
      %24 = vector.multi_reduction <add>, %23, %cst_17 [1] : vector<8x32xf32> to vector<8xf32>
      %25 = vector.shape_cast %24 : vector<8xf32> to vector<8x1xf32>
      %cst_18 = arith.constant 3.200000e+01 : f32
      %26 = vector.broadcast %cst_18 : f32 to vector<8x1xf32>
      %27 = arith.divf %25, %26 : vector<8x1xf32>
      %28 = vector.broadcast %20 : vector<8x1xf32> to vector<8x32xf32>
      %29 = arith.subf %14, %28 : vector<8x32xf32>
      %cst_19 = arith.constant 9.99999997E-7 : f32
      %30 = vector.broadcast %cst_19 : f32 to vector<8x1xf32>
      %31 = arith.addf %27, %30 : vector<8x1xf32>
      %32 = math.rsqrt %31 : vector<8x1xf32>
      %33 = vector.broadcast %32 : vector<8x1xf32> to vector<8x32xf32>
      %34 = arith.mulf %29, %33 : vector<8x32xf32>
      %35 = vector.broadcast %15 : vector<1x32xf32> to vector<8x32xf32>
      %36 = arith.mulf %34, %35 : vector<8x32xf32>
      %37 = vector.broadcast %16 : vector<1x32xf32> to vector<8x32xf32>
      %38 = arith.addf %36, %37 : vector<8x32xf32>
      %c0_20 = arith.constant 0 : index
      %c0_21 = arith.constant 0 : index
      %c0_22 = arith.constant 0 : index
      %39 = vector.load %arg30[%c0_20, %c0_21, %c0_22] : memref<1x8x32xf32, #tpu.memory_space<vmem>>, vector<1x8x32xf32>
      %40 = vector.shape_cast %39 : vector<1x8x32xf32> to vector<8x32xf32>
      %41 = vector.shape_cast %38 : vector<8x32xf32> to vector<1x8x32xf32>
      tpu.vector_store %arg30[%c0_20, %c0_21, %c0_22], %41 {strides = array<i32>} : memref<1x8x32xf32, #tpu.memory_space<vmem>>, vector<1x8x32xf32>,
    } else {
    }
    return
  }
  func.func @transform_0(%arg0: i32, %arg1: i32) -> (i32, i32, i32) {
    %c0_i32 = arith.constant 0 : i32
    %c0_i32_0 = arith.constant 0 : i32
    %c0_i32_1 = arith.constant 0 : i32
    return %arg0, %c0_i32, %c0_i32_0 : i32, i32, i32
  }
  func.func @transform_1(%arg0: i32, %arg1: i32) -> (i32, i32) {
    %c0_i32 = arith.constant 0 : i32
    %c0_i32_0 = arith.constant 0 : i32
    %c0_i32_1 = arith.constant 0 : i32
    return %c0_i32, %c0_i32_0 : i32, i32
  }
  func.func @transform_2(%arg0: i32, %arg1: i32) -> (i32, i32, i32) {
    %c0_i32 = arith.constant 0 : i32
    %c0_i32_0 = arith.constant 0 : i32
    %c0_i32_1 = arith.constant 0 : i32
    return %arg0, %c0_i32, %c0_i32_0 : i32, i32, i32
  }
  func.func @transform_3(%arg0: i32, %arg1: i32) -> (i32, i32, i32) {
    %c0_i32 = arith.constant 0 : i32
    %c0_i32_0 = arith.constant 0 : i32
    %c0_i32_1 = arith.constant 0 : i32
    return %arg0, %c0_i32, %c0_i32_0 : i32, i32, i32
  }
  func.func @transform_4(%arg0: i32, %arg1: i32) -> (i32, i32) {
    %c0_i32 = arith.constant 0 : i32
    %c0_i32_0 = arith.constant 0 : i32
    %c0_i32_1 = arith.constant 0 : i32
    return %c0_i32, %c0_i32_0 : i32, i32
  }
  func.func @transform_5(%arg0: i32, %arg1: i32) -> (i32, i32) {
    %c0_i32 = arith.constant 0 : i32
    %c0_i32_0 = arith.constant 0 : i32
    %c0_i32_1 = arith.constant 0 : i32
    return %c0_i32, %c0_i32_0 : i32, i32
  }
  func.func @transform_6(%arg0: i32, %arg1: i32) -> (i32, i32) {
    %c0_i32 = arith.constant 0 : i32
    %c0_i32_0 = arith.constant 0 : i32
    %c0_i32_1 = arith.constant 0 : i32
    return %c0_i32, %c0_i32_0 : i32, i32
  }
  func.func @transform_7(%arg0: i32, %arg1: i32) -> (i32, i32) {
    %c0_i32 = arith.constant 0 : i32
    %c0_i32_0 = arith.constant 0 : i32
    %c0_i32_1 = arith.constant 0 : i32
    return %c0_i32, %c0_i32_0 : i32, i32
  }
  func.func @transform_8(%arg0: i32, %arg1: i32) -> (i32, i32) {
    %c0_i32 = arith.constant 0 : i32
    %c0_i32_0 = arith.constant 0 : i32
    %c0_i32_1 = arith.constant 0 : i32
    return %c0_i32, %c0_i32_0 : i32, i32
  }
  func.func @transform_9(%arg0: i32, %arg1: i32) -> (i32, i32) {
    %c0_i32 = arith.constant 0 : i32
    %c0_i32_0 = arith.constant 0 : i32
    %c0_i32_1 = arith.constant 0 : i32
    return %c0_i32, %c0_i32_0 : i32, i32
  }
  func.func @transform_10(%arg0: i32, %arg1: i32) -> (i32, i32) {
    %c0_i32 = arith.constant 0 : i32
    %c0_i32_0 = arith.constant 0 : i32
    %c0_i32_1 = arith.constant 0 : i32
    return %c0_i32, %c0_i32_0 : i32, i32
  }
  func.func @transform_11(%arg0: i32, %arg1: i32) -> (i32, i32) {
    %c0_i32 = arith.constant 0 : i32
    %c0_i32_0 = arith.constant 0 : i32
    %c0_i32_1 = arith.constant 0 : i32
    return %c0_i32, %c0_i32_0 : i32, i32
  }
  func.func @transform_12(%arg0: i32, %arg1: i32) -> (i32, i32) {
    %c0_i32 = arith.constant 0 : i32
    %c0_i32_0 = arith.constant 0 : i32
    %c0_i32_1 = arith.constant 0 : i32
    return %c0_i32, %c0_i32_0 : i32, i32
  }
  func.func @transform_13(%arg0: i32, %arg1: i32) -> (i32, i32) {
    %c0_i32 = arith.constant 0 : i32
    %c0_i32_0 = arith.constant 0 : i32
    %c0_i32_1 = arith.constant 0 : i32
    return %c0_i32, %c0_i32_0 : i32, i32
  }
  func.func @transform_14(%arg0: i32, %arg1: i32) -> (i32, i32) {
    %c0_i32 = arith.constant 0 : i32
    %c0_i32_0 = arith.constant 0 : i32
    %c0_i32_1 = arith.constant 0 : i32
    return %c0_i32, %c0_i32_0 : i32, i32
  }
  func.func @transform_15(%arg0: i32, %arg1: i32) -> (i32, i32, i32) {
    %c1_i32 = arith.constant 1 : i32
    %0 = arith.subi %arg1, %c1_i32 : i32
    %c0_i32 = arith.constant 0 : i32
    %1 = arith.maxsi %0, %c0_i32 : i32
    %c0_i32_0 = arith.constant 0 : i32
    %c0_i32_1 = arith.constant 0 : i32
    %c0_i32_2 = arith.constant 0 : i32
    return %1, %c0_i32_0, %c0_i32_1 : i32, i32, i32
  }
  func.func @transform_16(%arg0: i32, %arg1: i32) -> (i32, i32, i32) {
    %c1_i32 = arith.constant 1 : i32
    %0 = arith.subi %arg1, %c1_i32 : i32
    %c0_i32 = arith.constant 0 : i32
    %1 = arith.maxsi %0, %c0_i32 : i32
    %c0_i32_0 = arith.constant 0 : i32
    %c0_i32_1 = arith.constant 0 : i32
    %c0_i32_2 = arith.constant 0 : i32
    return %1, %c0_i32_0, %c0_i32_1 : i32, i32, i32
  }
  func.func @transform_17(%arg0: i32, %arg1: i32) -> (i32, i32, i32) {
    %c1_i32 = arith.constant 1 : i32
    %0 = arith.subi %arg1, %c1_i32 : i32
    %c0_i32 = arith.constant 0 : i32
    %1 = arith.maxsi %0, %c0_i32 : i32
    %c0_i32_0 = arith.constant 0 : i32
    %c0_i32_1 = arith.constant 0 : i32
    %c0_i32_2 = arith.constant 0 : i32
    return %1, %c0_i32_0, %c0_i32_1 : i32, i32, i32
  }
  func.func @transform_18(%arg0: i32, %arg1: i32) -> (i32, i32, i32) {
    %c1_i32 = arith.constant 1 : i32
    %0 = arith.subi %arg1, %c1_i32 : i32
    %c0_i32 = arith.constant 0 : i32
    %1 = arith.maxsi %0, %c0_i32 : i32
    %c0_i32_0 = arith.constant 0 : i32
    %c0_i32_1 = arith.constant 0 : i32
    %c0_i32_2 = arith.constant 0 : i32
    return %1, %c0_i32_0, %c0_i32_1 : i32, i32, i32
  }
  func.func @transform_19(%arg0: i32, %arg1: i32) -> (i32, i32, i32) {
    %c1_i32 = arith.constant 1 : i32
    %0 = arith.subi %arg1, %c1_i32 : i32
    %c0_i32 = arith.constant 0 : i32
    %1 = arith.maxsi %0, %c0_i32 : i32
    %c0_i32_0 = arith.constant 0 : i32
    %c0_i32_1 = arith.constant 0 : i32
    %c0_i32_2 = arith.constant 0 : i32
    return %1, %c0_i32_0, %c0_i32_1 : i32, i32, i32
  }
  func.func @transform_20(%arg0: i32, %arg1: i32) -> (i32, i32, i32) {
    %c1_i32 = arith.constant 1 : i32
    %0 = arith.subi %arg1, %c1_i32 : i32
    %c0_i32 = arith.constant 0 : i32
    %1 = arith.maxsi %0, %c0_i32 : i32
    %c0_i32_0 = arith.constant 0 : i32
    %c0_i32_1 = arith.constant 0 : i32
    %c0_i32_2 = arith.constant 0 : i32
    return %1, %c0_i32_0, %c0_i32_1 : i32, i32, i32
  }
  func.func @transform_21(%arg0: i32, %arg1: i32) -> (i32, i32, i32) {
    %c1_i32 = arith.constant 1 : i32
    %0 = arith.subi %arg1, %c1_i32 : i32
    %c0_i32 = arith.constant 0 : i32
    %1 = arith.maxsi %0, %c0_i32 : i32
    %c0_i32_0 = arith.constant 0 : i32
    %c0_i32_1 = arith.constant 0 : i32
    %c0_i32_2 = arith.constant 0 : i32
    return %1, %c0_i32_0, %c0_i32_1 : i32, i32, i32
  }
  func.func @transform_22(%arg0: i32, %arg1: i32) -> (i32, i32, i32) {
    %c1_i32 = arith.constant 1 : i32
    %0 = arith.subi %arg1, %c1_i32 : i32
    %c0_i32 = arith.constant 0 : i32
    %1 = arith.maxsi %0, %c0_i32 : i32
    %c0_i32_0 = arith.constant 0 : i32
    %c0_i32_1 = arith.constant 0 : i32
    %c0_i32_2 = arith.constant 0 : i32
    return %1, %c0_i32_0, %c0_i32_1 : i32, i32, i32
  }
  func.func @transform_23(%arg0: i32, %arg1: i32) -> (i32, i32, i32) {
    %c1_i32 = arith.constant 1 : i32
    %0 = arith.subi %arg1, %c1_i32 : i32
    %c0_i32 = arith.constant 0 : i32
    %1 = arith.maxsi %0, %c0_i32 : i32
    %c0_i32_0 = arith.constant 0 : i32
    %c0_i32_1 = arith.constant 0 : i32
    %c0_i32_2 = arith.constant 0 : i32
    return %1, %c0_i32_0, %c0_i32_1 : i32, i32, i32
  }
  func.func @transform_24(%arg0: i32, %arg1: i32) -> (i32, i32, i32) {
    %c1_i32 = arith.constant 1 : i32
    %0 = arith.subi %arg1, %c1_i32 : i32
    %c0_i32 = arith.constant 0 : i32
    %1 = arith.maxsi %0, %c0_i32 : i32
    %c0_i32_0 = arith.constant 0 : i32
    %c0_i32_1 = arith.constant 0 : i32
    %c0_i32_2 = arith.constant 0 : i32
    return %1, %c0_i32_0, %c0_i32_1 : i32, i32, i32
  }
  func.func @transform_25(%arg0: i32, %arg1: i32) -> (i32, i32, i32) {
    %c1_i32 = arith.constant 1 : i32
    %0 = arith.subi %arg1, %c1_i32 : i32
    %c0_i32 = arith.constant 0 : i32
    %1 = arith.maxsi %0, %c0_i32 : i32
    %c0_i32_0 = arith.constant 0 : i32
    %c0_i32_1 = arith.constant 0 : i32
    %c0_i32_2 = arith.constant 0 : i32
    return %1, %c0_i32_0, %c0_i32_1 : i32, i32, i32
  }
  func.func @transform_26(%arg0: i32, %arg1: i32) -> (i32, i32) {
    %c0_i32 = arith.constant 0 : i32
    %c0_i32_0 = arith.constant 0 : i32
    %c0_i32_1 = arith.constant 0 : i32
    return %c0_i32, %c0_i32_0 : i32, i32
  }
  func.func @transform_27(%arg0: i32, %arg1: i32) -> (i32, i32) {
    %c0_i32 = arith.constant 0 : i32
    %c0_i32_0 = arith.constant 0 : i32
    %c0_i32_1 = arith.constant 0 : i32
    return %c0_i32, %c0_i32_0 : i32, i32
  }
  func.func @transform_28(%arg0: i32, %arg1: i32) -> (i32, i32, i32) {
    %c0_i32 = arith.constant 0 : i32
    %c0_i32_0 = arith.constant 0 : i32
    %c0_i32_1 = arith.constant 0 : i32
    return %arg0, %c0_i32, %c0_i32_0 : i32, i32, i32
  }
}

</mosaic_0001>

<llo_original>
// kernel: tpu_custom_call.1
$region0: #{tpu_custom_call.1}
  #allocation0 [shape = 'u32[]', space=smem, size = 0x4, offset = 0x4, fixed_abs, tag = 'smem constant byte address 0x4 - core index']
  #allocation1 [shape = 'u32[72,128]{1,0:T(1,128)}', space=vmem, size = 0x9000, scoped, tag = 'internal scratch']
  %s0 = inlined_call_operand.vmem [shape: f32[2,8,32], index: 0, kind: input, shape index: {}]
  %s1 = inlined_call_operand.vmem [shape: f32[8,32], index: 1, kind: input, shape index: {}]
  %s2 = inlined_call_operand.vmem [shape: f32[2,1,8], index: 2, kind: input, shape index: {}]
  %s3 = inlined_call_operand.vmem [shape: f32[2,8,1], index: 3, kind: input, shape index: {}]
  %s4 = inlined_call_operand.vmem [shape: f32[1,32], index: 4, kind: input, shape index: {}]
  %s5 = inlined_call_operand.vmem [shape: f32[1,32], index: 5, kind: input, shape index: {}]
  %s6 = inlined_call_operand.vmem [shape: bf16[32,96], index: 6, kind: input, shape index: {}]
  %s7 = inlined_call_operand.vmem [shape: bf16[32,32], index: 7, kind: input, shape index: {}]
  %s8 = inlined_call_operand.vmem [shape: f32[1,32], index: 8, kind: input, shape index: {}]
  %s9 = inlined_call_operand.vmem [shape: f32[1,32], index: 9, kind: input, shape index: {}]
  %s10 = inlined_call_operand.vmem [shape: f32[1,32], index: 10, kind: input, shape index: {}]
  %s11 = inlined_call_operand.vmem [shape: bf16[96,64], index: 11, kind: input, shape index: {}]
  %s12 = inlined_call_operand.vmem [shape: f32[1,64], index: 12, kind: input, shape index: {}]
  %s13 = inlined_call_operand.vmem [shape: bf16[64,32], index: 13, kind: input, shape index: {}]
  %s14 = inlined_call_operand.vmem [shape: f32[1,32], index: 14, kind: input, shape index: {}]
  %s15 = inlined_call_operand.vmem [shape: f32[1,1,32], index: 15, kind: input, shape index: {}]
  %s16 = inlined_call_operand.vmem [shape: f32[1,1,32], index: 16, kind: input, shape index: {}]
  %s17 = inlined_call_operand.vmem [shape: bf16[1,32,96], index: 17, kind: input, shape index: {}]
  %s18 = inlined_call_operand.vmem [shape: bf16[1,32,32], index: 18, kind: input, shape index: {}]
  %s19 = inlined_call_operand.vmem [shape: f32[1,1,32], index: 19, kind: input, shape index: {}]
  %s20 = inlined_call_operand.vmem [shape: f32[1,1,32], index: 20, kind: input, shape index: {}]
  %s21 = inlined_call_operand.vmem [shape: f32[1,1,32], index: 21, kind: input, shape index: {}]
  %s22 = inlined_call_operand.vmem [shape: bf16[1,96,64], index: 22, kind: input, shape index: {}]
  %s23 = inlined_call_operand.vmem [shape: f32[1,1,64], index: 23, kind: input, shape index: {}]
  %s24 = inlined_call_operand.vmem [shape: bf16[1,64,32], index: 24, kind: input, shape index: {}]
  %s25 = inlined_call_operand.vmem [shape: f32[1,1,32], index: 25, kind: input, shape index: {}]
  %s26 = inlined_call_operand.vmem [shape: f32[1,32], index: 26, kind: input, shape index: {}]
  %s27 = inlined_call_operand.vmem [shape: f32[1,32], index: 27, kind: input, shape index: {}]
  %s28 = inlined_call_operand.hbm [shape: f32[2,8,32], index: 28, kind: output, shape index: {}]
  %s29 = sld [smem:[#allocation0]]
  $region157: #{tpu_custom_call.1} parent=0
    _
  %s31 = ssub.s32 1, %s29
  %s32 = scalar_select 0, %s31, %s29
  $region1: #{tpu_custom_call.1} parent=0
    #allocation2 [shape = 'u8[8192]{0}', space=vmem, size = 0x2000, scoped, tag = 'output window, operand 0']
    #allocation3 [shape = 's32[2]{0}', space=sflag, size = 0x8, scoped, tag = 'scoped memory for tpu_custom_call.1']
    %33 = vsyncpa [#allocation3], 0
    %s34 = scalar_lea.sflag [#allocation3], 1
    %35 = vsyncpa %s34, 0
    loop: start=0, step=1, limit=6
    $region2: #{tpu_custom_call.1} parent=1 // loop_pre_header
      _
    $region3: #{tpu_custom_call.1} parent=1 // loop_header
      %s37 = sphi 0, %s41
      %p38 = scmp.ge.s32.totalorder %s37, 6
      %s44 = sphi 0, %s56
      %s45 = sphi 0, %s52
      %s46 = sphi 0, %s44
      %s47 = sphi 0, %s45
      %s48 = sphi 0, %s46
      %s49 = sphi 0, %s47
      %s59 = sphi 0, %s61
      %s62 = sphi 0, %s59
      %s63 = sphi 0, %s62
      %s79 = sphi 0, %s63
      %s83 = sphi 0, %s83
      %s85 = sphi 0, %s83
      %s86 = sphi 0, %s85
      %s100 = sphi 0, %s86
      %s106 = sphi 0, %s108
      %s109 = sphi 0, %s106
      %s110 = sphi 0, %s109
      %s126 = sphi 0, %s110
      %s132 = sphi 0, %s134
      %s135 = sphi 0, %s132
      %s136 = sphi 0, %s135
      %s152 = sphi 0, %s136
      %s156 = sphi 0, %s156
      %s158 = sphi 0, %s156
      %s159 = sphi 0, %s158
      %s173 = sphi 0, %s159
      %s177 = sphi 0, %s177
      %s179 = sphi 0, %s177
      %s180 = sphi 0, %s179
      %s194 = sphi 0, %s180
      %s198 = sphi 0, %s198
      %s200 = sphi 0, %s198
      %s201 = sphi 0, %s200
      %s215 = sphi 0, %s201
      %s219 = sphi 0, %s219
      %s221 = sphi 0, %s219
      %s222 = sphi 0, %s221
      %s236 = sphi 0, %s222
      %s240 = sphi 0, %s240
      %s242 = sphi 0, %s240
      %s243 = sphi 0, %s242
      %s257 = sphi 0, %s243
      %s261 = sphi 0, %s261
      %s263 = sphi 0, %s261
      %s264 = sphi 0, %s263
      %s278 = sphi 0, %s264
      %s282 = sphi 0, %s282
      %s284 = sphi 0, %s282
      %s285 = sphi 0, %s284
      %s299 = sphi 0, %s285
      %s303 = sphi 0, %s303
      %s305 = sphi 0, %s303
      %s306 = sphi 0, %s305
      %s320 = sphi 0, %s306
      %s324 = sphi 0, %s324
      %s326 = sphi 0, %s324
      %s327 = sphi 0, %s326
      %s341 = sphi 0, %s327
      %s345 = sphi 0, %s345
      %s347 = sphi 0, %s345
      %s348 = sphi 0, %s347
      %s362 = sphi 0, %s348
      %s366 = sphi 0, %s366
      %s368 = sphi 0, %s366
      %s369 = sphi 0, %s368
      %s383 = sphi 0, %s369
      %s395 = sphi 0, %s397
      %s398 = sphi 0, %s395
      %s399 = sphi 0, %s398
      %s415 = sphi 0, %s399
      %s427 = sphi 0, %s429
      %s430 = sphi 0, %s427
      %s431 = sphi 0, %s430
      %s447 = sphi 0, %s431
      %s459 = sphi 0, %s461
      %s462 = sphi 0, %s459
      %s463 = sphi 0, %s462
      %s479 = sphi 0, %s463
      %s491 = sphi 0, %s493
      %s494 = sphi 0, %s491
      %s495 = sphi 0, %s494
      %s511 = sphi 0, %s495
      %s523 = sphi 0, %s525
      %s526 = sphi 0, %s523
      %s527 = sphi 0, %s526
      %s543 = sphi 0, %s527
      %s555 = sphi 0, %s557
      %s558 = sphi 0, %s555
      %s559 = sphi 0, %s558
      %s575 = sphi 0, %s559
      %s587 = sphi 0, %s589
      %s590 = sphi 0, %s587
      %s591 = sphi 0, %s590
      %s607 = sphi 0, %s591
      %s619 = sphi 0, %s621
      %s622 = sphi 0, %s619
      %s623 = sphi 0, %s622
      %s639 = sphi 0, %s623
      %s651 = sphi 0, %s653
      %s654 = sphi 0, %s651
      %s655 = sphi 0, %s654
      %s671 = sphi 0, %s655
      %s683 = sphi 0, %s685
      %s686 = sphi 0, %s683
      %s687 = sphi 0, %s686
      %s703 = sphi 0, %s687
      %s715 = sphi 0, %s717
      %s718 = sphi 0, %s715
      %s719 = sphi 0, %s718
      %s735 = sphi 0, %s719
      %s739 = sphi 0, %s739
      %s741 = sphi 0, %s739
      %s742 = sphi 0, %s741
      %s756 = sphi 0, %s742
      %s760 = sphi 0, %s760
      %s762 = sphi 0, %s760
      %s763 = sphi 0, %s762
      %s777 = sphi 0, %s763
      %s783 = sphi 0, %s785
      %s786 = sphi 0, %s783
      %s787 = sphi 0, %s786
      %s803 = sphi 0, %s787
    $region4: #{tpu_custom_call.1} parent=1 // loop_header_branch
      %40 = sbr.rel (%p38) target = $region8
    $region5: #{tpu_custom_call.1} parent=1 // loop_body
      %s42 = ssub.s32 %s37, 1
      %s43 = ssub.s32 %s37, 2
      %s50 = sadd.s32 1, %s45
      %p51 = scmp.ge.s32.totalorder %s50, 2
      %s52 = scalar_select %p51, 0, %s50
      %s53 = sadd.s32 1, %s44
      %s54 = scalar_select %p51, %s53, %s44
      %p55 = scmp.ge.s32.totalorder %s54, 2
      %s56 = scalar_select %p55, 0, %s54
      %s57 = ssub.s32 %s44, %s56
      %p58 = scmp.eq.s32.totalorder %s57, 0
      %s60 = sadd.s32 %s59, 1
      %s61 = scalar_select %p58, %s59, %s60
      %p64 = pneg %p58
      %p65 = scmp.eq.s32.totalorder %s37, 3
      %p66 = por %p64, %p65
      %p67 = scmp.ne.s32.totalorder %s59, %s62
      %p68 = scmp.eq.s32.totalorder %s37, 0
      %p69 = por %p67, %p68
      %p70 = scmp.ne.s32.totalorder %s59, %s62
      %p71 = scmp.eq.s32.totalorder %s42, 3
      %p72 = por %p70, %p71
      %p73 = scmp.ne.s32.totalorder %s62, %s63
      %p74 = scmp.eq.s32.totalorder %s42, 0
      %p75 = por %p73, %p74
      %p76 = scmp.ne.s32.totalorder %s62, %s63
      %p77 = scmp.eq.s32.totalorder %s43, 3
      %p78 = por %p76, %p77
      %p80 = scmp.ne.s32.totalorder %s63, %s79
      %p81 = scmp.eq.s32.totalorder %s43, 0
      %p82 = por %p80, %p81
      %s84 = sadd.s32 %s83, 1
      %p87 = scmp.eq.s32.totalorder %s37, 3
      %p88 = scmp.ne.s32.totalorder %s83, %s85
      %p89 = scmp.eq.s32.totalorder %s37, 0
      %p90 = por %p88, %p89
      %p91 = scmp.ne.s32.totalorder %s83, %s85
      %p92 = scmp.eq.s32.totalorder %s42, 3
      %p93 = por %p91, %p92
      %p94 = scmp.ne.s32.totalorder %s85, %s86
      %p95 = scmp.eq.s32.totalorder %s42, 0
      %p96 = por %p94, %p95
      %p97 = scmp.ne.s32.totalorder %s85, %s86
      %p98 = scmp.eq.s32.totalorder %s43, 3
      %p99 = por %p97, %p98
      %p101 = scmp.ne.s32.totalorder %s86, %s100
      %p102 = scmp.eq.s32.totalorder %s43, 0
      %p103 = por %p101, %p102
      %s104 = ssub.s32 %s44, %s56
      %p105 = scmp.eq.s32.totalorder %s104, 0
      %s107 = sadd.s32 %s106, 1
      %s108 = scalar_select %p105, %s106, %s107
      %p111 = pneg %p105
      %p112 = scmp.eq.s32.totalorder %s37, 3
      %p113 = por %p111, %p112
      %p114 = scmp.ne.s32.totalorder %s106, %s109
      %p115 = scmp.eq.s32.totalorder %s37, 0
      %p116 = por %p114, %p115
      %p117 = scmp.ne.s32.totalorder %s106, %s109
      %p118 = scmp.eq.s32.totalorder %s42, 3
      %p119 = por %p117, %p118
      %p120 = scmp.ne.s32.totalorder %s109, %s110
      %p121 = scmp.eq.s32.totalorder %s42, 0
      %p122 = por %p120, %p121
      %p123 = scmp.ne.s32.totalorder %s109, %s110
      %p124 = scmp.eq.s32.totalorder %s43, 3
      %p125 = por %p123, %p124
      %p127 = scmp.ne.s32.totalorder %s110, %s126
      %p128 = scmp.eq.s32.totalorder %s43, 0
      %p129 = por %p127, %p128
      %s130 = ssub.s32 %s44, %s56
      %p131 = scmp.eq.s32.totalorder %s130, 0
      %s133 = sadd.s32 %s132, 1
      %s134 = scalar_select %p131, %s132, %s133
      %p137 = pneg %p131
      %p138 = scmp.eq.s32.totalorder %s37, 3
      %p139 = por %p137, %p138
      %p140 = scmp.ne.s32.totalorder %s132, %s135
      %p141 = scmp.eq.s32.totalorder %s37, 0
      %p142 = por %p140, %p141
      %p143 = scmp.ne.s32.totalorder %s132, %s135
      %p144 = scmp.eq.s32.totalorder %s42, 3
      %p145 = por %p143, %p144
      %p146 = scmp.ne.s32.totalorder %s135, %s136
      %p147 = scmp.eq.s32.totalorder %s42, 0
      %p148 = por %p146, %p147
      %p149 = scmp.ne.s32.totalorder %s135, %s136
      %p150 = scmp.eq.s32.totalorder %s43, 3
      %p151 = por %p149, %p150
      %p153 = scmp.ne.s32.totalorder %s136, %s152
      %p154 = scmp.eq.s32.totalorder %s43, 0
      %p155 = por %p153, %p154
      %s157 = sadd.s32 %s156, 1
      %p160 = scmp.eq.s32.totalorder %s37, 3
      %p161 = scmp.ne.s32.totalorder %s156, %s158
      %p162 = scmp.eq.s32.totalorder %s37, 0
      %p163 = por %p161, %p162
      %p164 = scmp.ne.s32.totalorder %s156, %s158
      %p165 = scmp.eq.s32.totalorder %s42, 3
      %p166 = por %p164, %p165
      %p167 = scmp.ne.s32.totalorder %s158, %s159
      %p168 = scmp.eq.s32.totalorder %s42, 0
      %p169 = por %p167, %p168
      %p170 = scmp.ne.s32.totalorder %s158, %s159
      %p171 = scmp.eq.s32.totalorder %s43, 3
      %p172 = por %p170, %p171
      %p174 = scmp.ne.s32.totalorder %s159, %s173
      %p175 = scmp.eq.s32.totalorder %s43, 0
      %p176 = por %p174, %p175
      %s178 = sadd.s32 %s177, 1
      %p181 = scmp.eq.s32.totalorder %s37, 3
      %p182 = scmp.ne.s32.totalorder %s177, %s179
      %p183 = scmp.eq.s32.totalorder %s37, 0
      %p184 = por %p182, %p183
      %p185 = scmp.ne.s32.totalorder %s177, %s179
      %p186 = scmp.eq.s32.totalorder %s42, 3
      %p187 = por %p185, %p186
      %p188 = scmp.ne.s32.totalorder %s179, %s180
      %p189 = scmp.eq.s32.totalorder %s42, 0
      %p190 = por %p188, %p189
      %p191 = scmp.ne.s32.totalorder %s179, %s180
      %p192 = scmp.eq.s32.totalorder %s43, 3
      %p193 = por %p191, %p192
      %p195 = scmp.ne.s32.totalorder %s180, %s194
      %p196 = scmp.eq.s32.totalorder %s43, 0
      %p197 = por %p195, %p196
      %s199 = sadd.s32 %s198, 1
      %p202 = scmp.eq.s32.totalorder %s37, 3
      %p203 = scmp.ne.s32.totalorder %s198, %s200
      %p204 = scmp.eq.s32.totalorder %s37, 0
      %p205 = por %p203, %p204
      %p206 = scmp.ne.s32.totalorder %s198, %s200
      %p207 = scmp.eq.s32.totalorder %s42, 3
      %p208 = por %p206, %p207
      %p209 = scmp.ne.s32.totalorder %s200, %s201
      %p210 = scmp.eq.s32.totalorder %s42, 0
      %p211 = por %p209, %p210
      %p212 = scmp.ne.s32.totalorder %s200, %s201
      %p213 = scmp.eq.s32.totalorder %s43, 3
      %p214 = por %p212, %p213
      %p216 = scmp.ne.s32.totalorder %s201, %s215
      %p217 = scmp.eq.s32.totalorder %s43, 0
      %p218 = por %p216, %p217
      %s220 = sadd.s32 %s219, 1
      %p223 = scmp.eq.s32.totalorder %s37, 3
      %p224 = scmp.ne.s32.totalorder %s219, %s221
      %p225 = scmp.eq.s32.totalorder %s37, 0
      %p226 = por %p224, %p225
      %p227 = scmp.ne.s32.totalorder %s219, %s221
      %p228 = scmp.eq.s32.totalorder %s42, 3
      %p229 = por %p227, %p228
      %p230 = scmp.ne.s32.totalorder %s221, %s222
      %p231 = scmp.eq.s32.totalorder %s42, 0
      %p232 = por %p230, %p231
      %p233 = scmp.ne.s32.totalorder %s221, %s222
      %p234 = scmp.eq.s32.totalorder %s43, 3
      %p235 = por %p233, %p234
      %p237 = scmp.ne.s32.totalorder %s222, %s236
      %p238 = scmp.eq.s32.totalorder %s43, 0
      %p239 = por %p237, %p238
      %s241 = sadd.s32 %s240, 1
      %p244 = scmp.eq.s32.totalorder %s37, 3
      %p245 = scmp.ne.s32.totalorder %s240, %s242
      %p246 = scmp.eq.s32.totalorder %s37, 0
      %p247 = por %p245, %p246
      %p248 = scmp.ne.s32.totalorder %s240, %s242
      %p249 = scmp.eq.s32.totalorder %s42, 3
      %p250 = por %p248, %p249
      %p251 = scmp.ne.s32.totalorder %s242, %s243
      %p252 = scmp.eq.s32.totalorder %s42, 0
      %p253 = por %p251, %p252
      %p254 = scmp.ne.s32.totalorder %s242, %s243
      %p255 = scmp.eq.s32.totalorder %s43, 3
      %p256 = por %p254, %p255
      %p258 = scmp.ne.s32.totalorder %s243, %s257
      %p259 = scmp.eq.s32.totalorder %s43, 0
      %p260 = por %p258, %p259
      %s262 = sadd.s32 %s261, 1
      %p265 = scmp.eq.s32.totalorder %s37, 3
      %p266 = scmp.ne.s32.totalorder %s261, %s263
      %p267 = scmp.eq.s32.totalorder %s37, 0
      %p268 = por %p266, %p267
      %p269 = scmp.ne.s32.totalorder %s261, %s263
      %p270 = scmp.eq.s32.totalorder %s42, 3
      %p271 = por %p269, %p270
      %p272 = scmp.ne.s32.totalorder %s263, %s264
      %p273 = scmp.eq.s32.totalorder %s42, 0
      %p274 = por %p272, %p273
      %p275 = scmp.ne.s32.totalorder %s263, %s264
      %p276 = scmp.eq.s32.totalorder %s43, 3
      %p277 = por %p275, %p276
      %p279 = scmp.ne.s32.totalorder %s264, %s278
      %p280 = scmp.eq.s32.totalorder %s43, 0
      %p281 = por %p279, %p280
      %s283 = sadd.s32 %s282, 1
      %p286 = scmp.eq.s32.totalorder %s37, 3
      %p287 = scmp.ne.s32.totalorder %s282, %s284
      %p288 = scmp.eq.s32.totalorder %s37, 0
      %p289 = por %p287, %p288
      %p290 = scmp.ne.s32.totalorder %s282, %s284
      %p291 = scmp.eq.s32.totalorder %s42, 3
      %p292 = por %p290, %p291
      %p293 = scmp.ne.s32.totalorder %s284, %s285
      %p294 = scmp.eq.s32.totalorder %s42, 0
      %p295 = por %p293, %p294
      %p296 = scmp.ne.s32.totalorder %s284, %s285
      %p297 = scmp.eq.s32.totalorder %s43, 3
      %p298 = por %p296, %p297
      %p300 = scmp.ne.s32.totalorder %s285, %s299
      %p301 = scmp.eq.s32.totalorder %s43, 0
      %p302 = por %p300, %p301
      %s304 = sadd.s32 %s303, 1
      %p307 = scmp.eq.s32.totalorder %s37, 3
      %p308 = scmp.ne.s32.totalorder %s303, %s305
      %p309 = scmp.eq.s32.totalorder %s37, 0
      %p310 = por %p308, %p309
      %p311 = scmp.ne.s32.totalorder %s303, %s305
      %p312 = scmp.eq.s32.totalorder %s42, 3
      %p313 = por %p311, %p312
      %p314 = scmp.ne.s32.totalorder %s305, %s306
      %p315 = scmp.eq.s32.totalorder %s42, 0
      %p316 = por %p314, %p315
      %p317 = scmp.ne.s32.totalorder %s305, %s306
      %p318 = scmp.eq.s32.totalorder %s43, 3
      %p319 = por %p317, %p318
      %p321 = scmp.ne.s32.totalorder %s306, %s320
      %p322 = scmp.eq.s32.totalorder %s43, 0
      %p323 = por %p321, %p322
      %s325 = sadd.s32 %s324, 1
      %p328 = scmp.eq.s32.totalorder %s37, 3
      %p329 = scmp.ne.s32.totalorder %s324, %s326
      %p330 = scmp.eq.s32.totalorder %s37, 0
      %p331 = por %p329, %p330
      %p332 = scmp.ne.s32.totalorder %s324, %s326
      %p333 = scmp.eq.s32.totalorder %s42, 3
      %p334 = por %p332, %p333
      %p335 = scmp.ne.s32.totalorder %s326, %s327
      %p336 = scmp.eq.s32.totalorder %s42, 0
      %p337 = por %p335, %p336
      %p338 = scmp.ne.s32.totalorder %s326, %s327
      %p339 = scmp.eq.s32.totalorder %s43, 3
      %p340 = por %p338, %p339
      %p342 = scmp.ne.s32.totalorder %s327, %s341
      %p343 = scmp.eq.s32.totalorder %s43, 0
      %p344 = por %p342, %p343
      %s346 = sadd.s32 %s345, 1
      %p349 = scmp.eq.s32.totalorder %s37, 3
      %p350 = scmp.ne.s32.totalorder %s345, %s347
      %p351 = scmp.eq.s32.totalorder %s37, 0
      %p352 = por %p350, %p351
      %p353 = scmp.ne.s32.totalorder %s345, %s347
      %p354 = scmp.eq.s32.totalorder %s42, 3
      %p355 = por %p353, %p354
      %p356 = scmp.ne.s32.totalorder %s347, %s348
      %p357 = scmp.eq.s32.totalorder %s42, 0
      %p358 = por %p356, %p357
      %p359 = scmp.ne.s32.totalorder %s347, %s348
      %p360 = scmp.eq.s32.totalorder %s43, 3
      %p361 = por %p359, %p360
      %p363 = scmp.ne.s32.totalorder %s348, %s362
      %p364 = scmp.eq.s32.totalorder %s43, 0
      %p365 = por %p363, %p364
      %s367 = sadd.s32 %s366, 1
      %p370 = scmp.eq.s32.totalorder %s37, 3
      %p371 = scmp.ne.s32.totalorder %s366, %s368
      %p372 = scmp.eq.s32.totalorder %s37, 0
      %p373 = por %p371, %p372
      %p374 = scmp.ne.s32.totalorder %s366, %s368
      %p375 = scmp.eq.s32.totalorder %s42, 3
      %p376 = por %p374, %p375
      %p377 = scmp.ne.s32.totalorder %s368, %s369
      %p378 = scmp.eq.s32.totalorder %s42, 0
      %p379 = por %p377, %p378
      %p380 = scmp.ne.s32.totalorder %s368, %s369
      %p381 = scmp.eq.s32.totalorder %s43, 3
      %p382 = por %p380, %p381
      %p384 = scmp.ne.s32.totalorder %s369, %s383
      %p385 = scmp.eq.s32.totalorder %s43, 0
      %p386 = por %p384, %p385
      %s387 = ssub.s32 %s45, 1
      %p388 = scmp.gt.s32.totalorder %s387, 0
      %s389 = scalar_select %p388, %s387, 0
      %s390 = ssub.s32 %s52, 1
      %p391 = scmp.gt.s32.totalorder %s390, 0
      %s392 = scalar_select %p391, %s390, 0
      %s393 = ssub.s32 %s389, %s392
      %p394 = scmp.eq.s32.totalorder %s393, 0
      %s396 = sadd.s32 %s395, 1
      %s397 = scalar_select %p394, %s395, %s396
      %p400 = pneg %p394
      %p401 = scmp.eq.s32.totalorder %s37, 3
      %p402 = por %p400, %p401
      %p403 = scmp.ne.s32.totalorder %s395, %s398
      %p404 = scmp.eq.s32.totalorder %s37, 0
      %p405 = por %p403, %p404
      %p406 = scmp.ne.s32.totalorder %s395, %s398
      %p407 = scmp.eq.s32.totalorder %s42, 3
      %p408 = por %p406, %p407
      %p409 = scmp.ne.s32.totalorder %s398, %s399
      %p410 = scmp.eq.s32.totalorder %s42, 0
      %p411 = por %p409, %p410
      %p412 = scmp.ne.s32.totalorder %s398, %s399
      %p413 = scmp.eq.s32.totalorder %s43, 3
      %p414 = por %p412, %p413
      %p416 = scmp.ne.s32.totalorder %s399, %s415
      %p417 = scmp.eq.s32.totalorder %s43, 0
      %p418 = por %p416, %p417
      %s419 = ssub.s32 %s45, 1
      %p420 = scmp.gt.s32.totalorder %s419, 0
      %s421 = scalar_select %p420, %s419, 0
      %s422 = ssub.s32 %s52, 1
      %p423 = scmp.gt.s32.totalorder %s422, 0
      %s424 = scalar_select %p423, %s422, 0
      %s425 = ssub.s32 %s421, %s424
      %p426 = scmp.eq.s32.totalorder %s425, 0
      %s428 = sadd.s32 %s427, 1
      %s429 = scalar_select %p426, %s427, %s428
      %p432 = pneg %p426
      %p433 = scmp.eq.s32.totalorder %s37, 3
      %p434 = por %p432, %p433
      %p435 = scmp.ne.s32.totalorder %s427, %s430
      %p436 = scmp.eq.s32.totalorder %s37, 0
      %p437 = por %p435, %p436
      %p438 = scmp.ne.s32.totalorder %s427, %s430
      %p439 = scmp.eq.s32.totalorder %s42, 3
      %p440 = por %p438, %p439
      %p441 = scmp.ne.s32.totalorder %s430, %s431
      %p442 = scmp.eq.s32.totalorder %s42, 0
      %p443 = por %p441, %p442
      %p444 = scmp.ne.s32.totalorder %s430, %s431
      %p445 = scmp.eq.s32.totalorder %s43, 3
      %p446 = por %p444, %p445
      %p448 = scmp.ne.s32.totalorder %s431, %s447
      %p449 = scmp.eq.s32.totalorder %s43, 0
      %p450 = por %p448, %p449
      %s451 = ssub.s32 %s45, 1
      %p452 = scmp.gt.s32.totalorder %s451, 0
      %s453 = scalar_select %p452, %s451, 0
      %s454 = ssub.s32 %s52, 1
      %p455 = scmp.gt.s32.totalorder %s454, 0
      %s456 = scalar_select %p455, %s454, 0
      %s457 = ssub.s32 %s453, %s456
      %p458 = scmp.eq.s32.totalorder %s457, 0
      %s460 = sadd.s32 %s459, 1
      %s461 = scalar_select %p458, %s459, %s460
      %p464 = pneg %p458
      %p465 = scmp.eq.s32.totalorder %s37, 3
      %p466 = por %p464, %p465
      %p467 = scmp.ne.s32.totalorder %s459, %s462
      %p468 = scmp.eq.s32.totalorder %s37, 0
      %p469 = por %p467, %p468
      %p470 = scmp.ne.s32.totalorder %s459, %s462
      %p471 = scmp.eq.s32.totalorder %s42, 3
      %p472 = por %p470, %p471
      %p473 = scmp.ne.s32.totalorder %s462, %s463
      %p474 = scmp.eq.s32.totalorder %s42, 0
      %p475 = por %p473, %p474
      %p476 = scmp.ne.s32.totalorder %s462, %s463
      %p477 = scmp.eq.s32.totalorder %s43, 3
      %p478 = por %p476, %p477
      %p480 = scmp.ne.s32.totalorder %s463, %s479
      %p481 = scmp.eq.s32.totalorder %s43, 0
      %p482 = por %p480, %p481
      %s483 = ssub.s32 %s45, 1
      %p484 = scmp.gt.s32.totalorder %s483, 0
      %s485 = scalar_select %p484, %s483, 0
      %s486 = ssub.s32 %s52, 1
      %p487 = scmp.gt.s32.totalorder %s486, 0
      %s488 = scalar_select %p487, %s486, 0
      %s489 = ssub.s32 %s485, %s488
      %p490 = scmp.eq.s32.totalorder %s489, 0
      %s492 = sadd.s32 %s491, 1
      %s493 = scalar_select %p490, %s491, %s492
      %p496 = pneg %p490
      %p497 = scmp.eq.s32.totalorder %s37, 3
      %p498 = por %p496, %p497
      %p499 = scmp.ne.s32.totalorder %s491, %s494
      %p500 = scmp.eq.s32.totalorder %s37, 0
      %p501 = por %p499, %p500
      %p502 = scmp.ne.s32.totalorder %s491, %s494
      %p503 = scmp.eq.s32.totalorder %s42, 3
      %p504 = por %p502, %p503
      %p505 = scmp.ne.s32.totalorder %s494, %s495
      %p506 = scmp.eq.s32.totalorder %s42, 0
      %p507 = por %p505, %p506
      %p508 = scmp.ne.s32.totalorder %s494, %s495
      %p509 = scmp.eq.s32.totalorder %s43, 3
      %p510 = por %p508, %p509
      %p512 = scmp.ne.s32.totalorder %s495, %s511
      %p513 = scmp.eq.s32.totalorder %s43, 0
      %p514 = por %p512, %p513
      %s515 = ssub.s32 %s45, 1
      %p516 = scmp.gt.s32.totalorder %s515, 0
      %s517 = scalar_select %p516, %s515, 0
      %s518 = ssub.s32 %s52, 1
      %p519 = scmp.gt.s32.totalorder %s518, 0
      %s520 = scalar_select %p519, %s518, 0
      %s521 = ssub.s32 %s517, %s520
      %p522 = scmp.eq.s32.totalorder %s521, 0
      %s524 = sadd.s32 %s523, 1
      %s525 = scalar_select %p522, %s523, %s524
      %p528 = pneg %p522
      %p529 = scmp.eq.s32.totalorder %s37, 3
      %p530 = por %p528, %p529
      %p531 = scmp.ne.s32.totalorder %s523, %s526
      %p532 = scmp.eq.s32.totalorder %s37, 0
      %p533 = por %p531, %p532
      %p534 = scmp.ne.s32.totalorder %s523, %s526
      %p535 = scmp.eq.s32.totalorder %s42, 3
      %p536 = por %p534, %p535
      %p537 = scmp.ne.s32.totalorder %s526, %s527
      %p538 = scmp.eq.s32.totalorder %s42, 0
      %p539 = por %p537, %p538
      %p540 = scmp.ne.s32.totalorder %s526, %s527
      %p541 = scmp.eq.s32.totalorder %s43, 3
      %p542 = por %p540, %p541
      %p544 = scmp.ne.s32.totalorder %s527, %s543
      %p545 = scmp.eq.s32.totalorder %s43, 0
      %p546 = por %p544, %p545
      %s547 = ssub.s32 %s45, 1
      %p548 = scmp.gt.s32.totalorder %s547, 0
      %s549 = scalar_select %p548, %s547, 0
      %s550 = ssub.s32 %s52, 1
      %p551 = scmp.gt.s32.totalorder %s550, 0
      %s552 = scalar_select %p551, %s550, 0
      %s553 = ssub.s32 %s549, %s552
      %p554 = scmp.eq.s32.totalorder %s553, 0
      %s556 = sadd.s32 %s555, 1
      %s557 = scalar_select %p554, %s555, %s556
      %p560 = pneg %p554
      %p561 = scmp.eq.s32.totalorder %s37, 3
      %p562 = por %p560, %p561
      %p563 = scmp.ne.s32.totalorder %s555, %s558
      %p564 = scmp.eq.s32.totalorder %s37, 0
      %p565 = por %p563, %p564
      %p566 = scmp.ne.s32.totalorder %s555, %s558
      %p567 = scmp.eq.s32.totalorder %s42, 3
      %p568 = por %p566, %p567
      %p569 = scmp.ne.s32.totalorder %s558, %s559
      %p570 = scmp.eq.s32.totalorder %s42, 0
      %p571 = por %p569, %p570
      %p572 = scmp.ne.s32.totalorder %s558, %s559
      %p573 = scmp.eq.s32.totalorder %s43, 3
      %p574 = por %p572, %p573
      %p576 = scmp.ne.s32.totalorder %s559, %s575
      %p577 = scmp.eq.s32.totalorder %s43, 0
      %p578 = por %p576, %p577
      %s579 = ssub.s32 %s45, 1
      %p580 = scmp.gt.s32.totalorder %s579, 0
      %s581 = scalar_select %p580, %s579, 0
      %s582 = ssub.s32 %s52, 1
      %p583 = scmp.gt.s32.totalorder %s582, 0
      %s584 = scalar_select %p583, %s582, 0
      %s585 = ssub.s32 %s581, %s584
      %p586 = scmp.eq.s32.totalorder %s585, 0
      %s588 = sadd.s32 %s587, 1
      %s589 = scalar_select %p586, %s587, %s588
      %p592 = pneg %p586
      %p593 = scmp.eq.s32.totalorder %s37, 3
      %p594 = por %p592, %p593
      %p595 = scmp.ne.s32.totalorder %s587, %s590
      %p596 = scmp.eq.s32.totalorder %s37, 0
      %p597 = por %p595, %p596
      %p598 = scmp.ne.s32.totalorder %s587, %s590
      %p599 = scmp.eq.s32.totalorder %s42, 3
      %p600 = por %p598, %p599
      %p601 = scmp.ne.s32.totalorder %s590, %s591
      %p602 = scmp.eq.s32.totalorder %s42, 0
      %p603 = por %p601, %p602
      %p604 = scmp.ne.s32.totalorder %s590, %s591
      %p605 = scmp.eq.s32.totalorder %s43, 3
      %p606 = por %p604, %p605
      %p608 = scmp.ne.s32.totalorder %s591, %s607
      %p609 = scmp.eq.s32.totalorder %s43, 0
      %p610 = por %p608, %p609
      %s611 = ssub.s32 %s45, 1
      %p612 = scmp.gt.s32.totalorder %s611, 0
      %s613 = scalar_select %p612, %s611, 0
      %s614 = ssub.s32 %s52, 1
      %p615 = scmp.gt.s32.totalorder %s614, 0
      %s616 = scalar_select %p615, %s614, 0
      %s617 = ssub.s32 %s613, %s616
      %p618 = scmp.eq.s32.totalorder %s617, 0
      %s620 = sadd.s32 %s619, 1
      %s621 = scalar_select %p618, %s619, %s620
      %p624 = pneg %p618
      %p625 = scmp.eq.s32.totalorder %s37, 3
      %p626 = por %p624, %p625
      %p627 = scmp.ne.s32.totalorder %s619, %s622
      %p628 = scmp.eq.s32.totalorder %s37, 0
      %p629 = por %p627, %p628
      %p630 = scmp.ne.s32.totalorder %s619, %s622
      %p631 = scmp.eq.s32.totalorder %s42, 3
      %p632 = por %p630, %p631
      %p633 = scmp.ne.s32.totalorder %s622, %s623
      %p634 = scmp.eq.s32.totalorder %s42, 0
      %p635 = por %p633, %p634
      %p636 = scmp.ne.s32.totalorder %s622, %s623
      %p637 = scmp.eq.s32.totalorder %s43, 3
      %p638 = por %p636, %p637
      %p640 = scmp.ne.s32.totalorder %s623, %s639
      %p641 = scmp.eq.s32.totalorder %s43, 0
      %p642 = por %p640, %p641
      %s643 = ssub.s32 %s45, 1
      %p644 = scmp.gt.s32.totalorder %s643, 0
      %s645 = scalar_select %p644, %s643, 0
      %s646 = ssub.s32 %s52, 1
      %p647 = scmp.gt.s32.totalorder %s646, 0
      %s648 = scalar_select %p647, %s646, 0
      %s649 = ssub.s32 %s645, %s648
      %p650 = scmp.eq.s32.totalorder %s649, 0
      %s652 = sadd.s32 %s651, 1
      %s653 = scalar_select %p650, %s651, %s652
      %p656 = pneg %p650
      %p657 = scmp.eq.s32.totalorder %s37, 3
      %p658 = por %p656, %p657
      %p659 = scmp.ne.s32.totalorder %s651, %s654
      %p660 = scmp.eq.s32.totalorder %s37, 0
      %p661 = por %p659, %p660
      %p662 = scmp.ne.s32.totalorder %s651, %s654
      %p663 = scmp.eq.s32.totalorder %s42, 3
      %p664 = por %p662, %p663
      %p665 = scmp.ne.s32.totalorder %s654, %s655
      %p666 = scmp.eq.s32.totalorder %s42, 0
      %p667 = por %p665, %p666
      %p668 = scmp.ne.s32.totalorder %s654, %s655
      %p669 = scmp.eq.s32.totalorder %s43, 3
      %p670 = por %p668, %p669
      %p672 = scmp.ne.s32.totalorder %s655, %s671
      %p673 = scmp.eq.s32.totalorder %s43, 0
      %p674 = por %p672, %p673
      %s675 = ssub.s32 %s45, 1
      %p676 = scmp.gt.s32.totalorder %s675, 0
      %s677 = scalar_select %p676, %s675, 0
      %s678 = ssub.s32 %s52, 1
      %p679 = scmp.gt.s32.totalorder %s678, 0
      %s680 = scalar_select %p679, %s678, 0
      %s681 = ssub.s32 %s677, %s680
      %p682 = scmp.eq.s32.totalorder %s681, 0
      %s684 = sadd.s32 %s683, 1
      %s685 = scalar_select %p682, %s683, %s684
      %p688 = pneg %p682
      %p689 = scmp.eq.s32.totalorder %s37, 3
      %p690 = por %p688, %p689
      %p691 = scmp.ne.s32.totalorder %s683, %s686
      %p692 = scmp.eq.s32.totalorder %s37, 0
      %p693 = por %p691, %p692
      %p694 = scmp.ne.s32.totalorder %s683, %s686
      %p695 = scmp.eq.s32.totalorder %s42, 3
      %p696 = por %p694, %p695
      %p697 = scmp.ne.s32.totalorder %s686, %s687
      %p698 = scmp.eq.s32.totalorder %s42, 0
      %p699 = por %p697, %p698
      %p700 = scmp.ne.s32.totalorder %s686, %s687
      %p701 = scmp.eq.s32.totalorder %s43, 3
      %p702 = por %p700, %p701
      %p704 = scmp.ne.s32.totalorder %s687, %s703
      %p705 = scmp.eq.s32.totalorder %s43, 0
      %p706 = por %p704, %p705
      %s707 = ssub.s32 %s45, 1
      %p708 = scmp.gt.s32.totalorder %s707, 0
      %s709 = scalar_select %p708, %s707, 0
      %s710 = ssub.s32 %s52, 1
      %p711 = scmp.gt.s32.totalorder %s710, 0
      %s712 = scalar_select %p711, %s710, 0
      %s713 = ssub.s32 %s709, %s712
      %p714 = scmp.eq.s32.totalorder %s713, 0
      %s716 = sadd.s32 %s715, 1
      %s717 = scalar_select %p714, %s715, %s716
      %p720 = pneg %p714
      %p721 = scmp.eq.s32.totalorder %s37, 3
      %p722 = por %p720, %p721
      %p723 = scmp.ne.s32.totalorder %s715, %s718
      %p724 = scmp.eq.s32.totalorder %s37, 0
      %p725 = por %p723, %p724
      %p726 = scmp.ne.s32.totalorder %s715, %s718
      %p727 = scmp.eq.s32.totalorder %s42, 3
      %p728 = por %p726, %p727
      %p729 = scmp.ne.s32.totalorder %s718, %s719
      %p730 = scmp.eq.s32.totalorder %s42, 0
      %p731 = por %p729, %p730
      %p732 = scmp.ne.s32.totalorder %s718, %s719
      %p733 = scmp.eq.s32.totalorder %s43, 3
      %p734 = por %p732, %p733
      %p736 = scmp.ne.s32.totalorder %s719, %s735
      %p737 = scmp.eq.s32.totalorder %s43, 0
      %p738 = por %p736, %p737
      %s740 = sadd.s32 %s739, 1
      %p743 = scmp.eq.s32.totalorder %s37, 3
      %p744 = scmp.ne.s32.totalorder %s739, %s741
      %p745 = scmp.eq.s32.totalorder %s37, 0
      %p746 = por %p744, %p745
      %p747 = scmp.ne.s32.totalorder %s739, %s741
      %p748 = scmp.eq.s32.totalorder %s42, 3
      %p749 = por %p747, %p748
      %p750 = scmp.ne.s32.totalorder %s741, %s742
      %p751 = scmp.eq.s32.totalorder %s42, 0
      %p752 = por %p750, %p751
      %p753 = scmp.ne.s32.totalorder %s741, %s742
      %p754 = scmp.eq.s32.totalorder %s43, 3
      %p755 = por %p753, %p754
      %p757 = scmp.ne.s32.totalorder %s742, %s756
      %p758 = scmp.eq.s32.totalorder %s43, 0
      %p759 = por %p757, %p758
      %s761 = sadd.s32 %s760, 1
      %p764 = scmp.eq.s32.totalorder %s37, 3
      %p765 = scmp.ne.s32.totalorder %s760, %s762
      %p766 = scmp.eq.s32.totalorder %s37, 0
      %p767 = por %p765, %p766
      %p768 = scmp.ne.s32.totalorder %s760, %s762
      %p769 = scmp.eq.s32.totalorder %s42, 3
      %p770 = por %p768, %p769
      %p771 = scmp.ne.s32.totalorder %s762, %s763
      %p772 = scmp.eq.s32.totalorder %s42, 0
      %p773 = por %p771, %p772
      %p774 = scmp.ne.s32.totalorder %s762, %s763
      %p775 = scmp.eq.s32.totalorder %s43, 3
      %p776 = por %p774, %p775
      %p778 = scmp.ne.s32.totalorder %s763, %s777
      %p779 = scmp.eq.s32.totalorder %s43, 0
      %p780 = por %p778, %p779
      %s781 = ssub.s32 %s44, %s56
      %p782 = scmp.eq.s32.totalorder %s781, 0
      %s784 = sadd.s32 %s783, 1
      %s785 = scalar_select %p782, %s783, %s784
      %p788 = pneg %p782
      %p789 = scmp.eq.s32.totalorder %s37, 3
      %p790 = por %p788, %p789
      %p791 = scmp.ne.s32.totalorder %s783, %s786
      %p792 = scmp.eq.s32.totalorder %s37, 0
      %p793 = por %p791, %p792
      %p794 = scmp.ne.s32.totalorder %s783, %s786
      %p795 = scmp.eq.s32.totalorder %s42, 3
      %p796 = por %p794, %p795
      %p797 = scmp.ne.s32.totalorder %s786, %s787
      %p798 = scmp.eq.s32.totalorder %s42, 0
      %p799 = por %p797, %p798
      %p800 = scmp.ne.s32.totalorder %s786, %s787
      %p801 = scmp.eq.s32.totalorder %s43, 3
      %p802 = por %p800, %p801
      %p804 = scmp.ne.s32.totalorder %s787, %s803
      %p805 = scmp.eq.s32.totalorder %s43, 0
      %p806 = por %p804, %p805
      %p807 = scmp.le.s32.totalorder 1, %s37
      %p808 = scmp.lt.s32.totalorder %s37, 5
      %p809 = pnand %p807, %p808
      %p810 = pneg %p809
      // Predicated region
      $region9: #{tpu_custom_call.1} parent=5 // pred_check
        _
      $region10: #{tpu_custom_call.1} parent=5 // pred_check_branch
        %812 = sbr.rel (%p809) target = $region12
      $region11: #{tpu_custom_call.1} parent=5 // pred_region
        %s813 = ssub.s32 %s37, 1
        // Predicated region
        $region13: #{tpu_custom_call.1} parent=11 // pred_check
          %p814 = pneg %p96
        $region14: #{tpu_custom_call.1} parent=11 // pred_check_branch
          %816 = sbr.rel (%p814) target = $region16
        $region15: #{tpu_custom_call.1} parent=11 // pred_region
          _
        $region16: #{tpu_custom_call.1} parent=11 // pred_fallthru
          _
        // Predicated region
        $region17: #{tpu_custom_call.1} parent=11 // pred_check
          %p817 = pneg %p169
        $region18: #{tpu_custom_call.1} parent=11 // pred_check_branch
          %819 = sbr.rel (%p817) target = $region20
        $region19: #{tpu_custom_call.1} parent=11 // pred_region
          _
        $region20: #{tpu_custom_call.1} parent=11 // pred_fallthru
          _
        // Predicated region
        $region21: #{tpu_custom_call.1} parent=11 // pred_check
          %p820 = pneg %p190
        $region22: #{tpu_custom_call.1} parent=11 // pred_check_branch
          %822 = sbr.rel (%p820) target = $region24
        $region23: #{tpu_custom_call.1} parent=11 // pred_region
          _
        $region24: #{tpu_custom_call.1} parent=11 // pred_fallthru
          _
        // Predicated region
        $region25: #{tpu_custom_call.1} parent=11 // pred_check
          %p823 = pneg %p211
        $region26: #{tpu_custom_call.1} parent=11 // pred_check_branch
          %825 = sbr.rel (%p823) target = $region28
        $region27: #{tpu_custom_call.1} parent=11 // pred_region
          _
        $region28: #{tpu_custom_call.1} parent=11 // pred_fallthru
          _
        // Predicated region
        $region29: #{tpu_custom_call.1} parent=11 // pred_check
          %p826 = pneg %p232
        $region30: #{tpu_custom_call.1} parent=11 // pred_check_branch
          %828 = sbr.rel (%p826) target = $region32
        $region31: #{tpu_custom_call.1} parent=11 // pred_region
          _
        $region32: #{tpu_custom_call.1} parent=11 // pred_fallthru
          _
        // Predicated region
        $region33: #{tpu_custom_call.1} parent=11 // pred_check
          %p829 = pneg %p253
        $region34: #{tpu_custom_call.1} parent=11 // pred_check_branch
          %831 = sbr.rel (%p829) target = $region36
        $region35: #{tpu_custom_call.1} parent=11 // pred_region
          _
        $region36: #{tpu_custom_call.1} parent=11 // pred_fallthru
          _
        // Predicated region
        $region37: #{tpu_custom_call.1} parent=11 // pred_check
          %p832 = pneg %p274
        $region38: #{tpu_custom_call.1} parent=11 // pred_check_branch
          %834 = sbr.rel (%p832) target = $region40
        $region39: #{tpu_custom_call.1} parent=11 // pred_region
          _
        $region40: #{tpu_custom_call.1} parent=11 // pred_fallthru
          _
        // Predicated region
        $region41: #{tpu_custom_call.1} parent=11 // pred_check
          %p835 = pneg %p295
        $region42: #{tpu_custom_call.1} parent=11 // pred_check_branch
          %837 = sbr.rel (%p835) target = $region44
        $region43: #{tpu_custom_call.1} parent=11 // pred_region
          _
        $region44: #{tpu_custom_call.1} parent=11 // pred_fallthru
          _
        // Predicated region
        $region45: #{tpu_custom_call.1} parent=11 // pred_check
          %p838 = pneg %p316
        $region46: #{tpu_custom_call.1} parent=11 // pred_check_branch
          %840 = sbr.rel (%p838) target = $region48
        $region47: #{tpu_custom_call.1} parent=11 // pred_region
          _
        $region48: #{tpu_custom_call.1} parent=11 // pred_fallthru
          _
        // Predicated region
        $region49: #{tpu_custom_call.1} parent=11 // pred_check
          %p841 = pneg %p337
        $region50: #{tpu_custom_call.1} parent=11 // pred_check_branch
          %843 = sbr.rel (%p841) target = $region52
        $region51: #{tpu_custom_call.1} parent=11 // pred_region
          _
        $region52: #{tpu_custom_call.1} parent=11 // pred_fallthru
          _
        // Predicated region
        $region53: #{tpu_custom_call.1} parent=11 // pred_check
          %p844 = pneg %p358
        $region54: #{tpu_custom_call.1} parent=11 // pred_check_branch
          %846 = sbr.rel (%p844) target = $region56
        $region55: #{tpu_custom_call.1} parent=11 // pred_region
          _
        $region56: #{tpu_custom_call.1} parent=11 // pred_fallthru
          _
        // Predicated region
        $region57: #{tpu_custom_call.1} parent=11 // pred_check
          %p847 = pneg %p379
        $region58: #{tpu_custom_call.1} parent=11 // pred_check_branch
          %849 = sbr.rel (%p847) target = $region60
        $region59: #{tpu_custom_call.1} parent=11 // pred_region
          _
        $region60: #{tpu_custom_call.1} parent=11 // pred_fallthru
          _
        // Predicated region
        $region61: #{tpu_custom_call.1} parent=11 // pred_check
          %p850 = pneg %p752
        $region62: #{tpu_custom_call.1} parent=11 // pred_check_branch
          %852 = sbr.rel (%p850) target = $region64
        $region63: #{tpu_custom_call.1} parent=11 // pred_region
          _
        $region64: #{tpu_custom_call.1} parent=11 // pred_fallthru
          _
        // Predicated region
        $region65: #{tpu_custom_call.1} parent=11 // pred_check
          %p853 = pneg %p773
        $region66: #{tpu_custom_call.1} parent=11 // pred_check_branch
          %855 = sbr.rel (%p853) target = $region68
        $region67: #{tpu_custom_call.1} parent=11 // pred_region
          _
        $region68: #{tpu_custom_call.1} parent=11 // pred_fallthru
          _
      $region12: #{tpu_custom_call.1} parent=5 // pred_fallthru
        _
      %p856 = scmp.lt.s32.totalorder %s37, 4
      // Predicated region
      $region69: #{tpu_custom_call.1} parent=5 // pred_check
        %p857 = pneg %p856
      $region70: #{tpu_custom_call.1} parent=5 // pred_check_branch
        %859 = sbr.rel (%p857) target = $region72
      $region71: #{tpu_custom_call.1} parent=5 // pred_region
        // Predicated region
        $region73: #{tpu_custom_call.1} parent=71 // pred_check
          %p860 = pneg %p69
        $region74: #{tpu_custom_call.1} parent=71 // pred_check_branch
          %862 = sbr.rel (%p860) target = $region76
        $region75: #{tpu_custom_call.1} parent=71 // pred_region
          %p863 = scmp.lt.s32.totalorder %s44, 1
          %s864 = scalar_select %p863, %s44, 1
          %s865 = smul.addr %s864, 8
          %s866 = scalar_lea.vmem %s0, %s865
        $region76: #{tpu_custom_call.1} parent=71 // pred_fallthru
          _
        // Predicated region
        $region77: #{tpu_custom_call.1} parent=71 // pred_check
          %p867 = pneg %p116
        $region78: #{tpu_custom_call.1} parent=71 // pred_check_branch
          %869 = sbr.rel (%p867) target = $region80
        $region79: #{tpu_custom_call.1} parent=71 // pred_region
          %p870 = scmp.lt.s32.totalorder %s44, 1
          %s871 = scalar_select %p870, %s44, 1
          %s872 = scalar_lea.vmem %s2, %s871
        $region80: #{tpu_custom_call.1} parent=71 // pred_fallthru
          _
        // Predicated region
        $region81: #{tpu_custom_call.1} parent=71 // pred_check
          %p873 = pneg %p142
        $region82: #{tpu_custom_call.1} parent=71 // pred_check_branch
          %875 = sbr.rel (%p873) target = $region84
        $region83: #{tpu_custom_call.1} parent=71 // pred_region
          %p876 = scmp.lt.s32.totalorder %s44, 1
          %s877 = scalar_select %p876, %s44, 1
          %s878 = smul.addr %s877, 8
          %s879 = scalar_lea.vmem %s3, %s878
        $region84: #{tpu_custom_call.1} parent=71 // pred_fallthru
          _
        // Predicated region
        $region85: #{tpu_custom_call.1} parent=71 // pred_check
          %p880 = pneg %p405
        $region86: #{tpu_custom_call.1} parent=71 // pred_check_branch
          %882 = sbr.rel (%p880) target = $region88
        $region87: #{tpu_custom_call.1} parent=71 // pred_region
          %s883 = ssub.s32 %s45, 1
          %p884 = scmp.gt.s32.totalorder %s883, 0
          %s885 = scalar_select %p884, %s883, 0
          %p886 = scmp.lt.s32.totalorder %s885, 0
          %s887 = scalar_select %p886, %s885, 0
          %s888 = scalar_lea.vmem %s15, %s887
          %s889 = ssub.s32 %s45, 1
          %p890 = scmp.gt.s32.totalorder %s889, 0
          %s891 = scalar_select %p890, %s889, 0
        $region88: #{tpu_custom_call.1} parent=71 // pred_fallthru
          _
        // Predicated region
        $region89: #{tpu_custom_call.1} parent=71 // pred_check
          %p892 = pneg %p437
        $region90: #{tpu_custom_call.1} parent=71 // pred_check_branch
          %894 = sbr.rel (%p892) target = $region92
        $region91: #{tpu_custom_call.1} parent=71 // pred_region
          %s895 = ssub.s32 %s45, 1
          %p896 = scmp.gt.s32.totalorder %s895, 0
          %s897 = scalar_select %p896, %s895, 0
          %p898 = scmp.lt.s32.totalorder %s897, 0
          %s899 = scalar_select %p898, %s897, 0
          %s900 = scalar_lea.vmem %s16, %s899
          %s901 = ssub.s32 %s45, 1
          %p902 = scmp.gt.s32.totalorder %s901, 0
          %s903 = scalar_select %p902, %s901, 0
        $region92: #{tpu_custom_call.1} parent=71 // pred_fallthru
          _
        // Predicated region
        $region93: #{tpu_custom_call.1} parent=71 // pred_check
          %p904 = pneg %p469
        $region94: #{tpu_custom_call.1} parent=71 // pred_check_branch
          %906 = sbr.rel (%p904) target = $region96
        $region95: #{tpu_custom_call.1} parent=71 // pred_region
          %s907 = ssub.s32 %s45, 1
          %p908 = scmp.gt.s32.totalorder %s907, 0
          %s909 = scalar_select %p908, %s907, 0
          %p910 = scmp.lt.s32.totalorder %s909, 0
          %s911 = scalar_select %p910, %s909, 0
          %s912 = smul.addr %s911, 4
          %s913 = smul.addr %s912, 4
          %s914 = scalar_lea.vmem %s17, %s913
          %s915 = ssub.s32 %s45, 1
          %p916 = scmp.gt.s32.totalorder %s915, 0
          %s917 = scalar_select %p916, %s915, 0
        $region96: #{tpu_custom_call.1} parent=71 // pred_fallthru
          _
        // Predicated region
        $region97: #{tpu_custom_call.1} parent=71 // pred_check
          %p918 = pneg %p501
        $region98: #{tpu_custom_call.1} parent=71 // pred_check_branch
          %920 = sbr.rel (%p918) target = $region100
        $region99: #{tpu_custom_call.1} parent=71 // pred_region
          %s921 = ssub.s32 %s45, 1
          %p922 = scmp.gt.s32.totalorder %s921, 0
          %s923 = scalar_select %p922, %s921, 0
          %p924 = scmp.lt.s32.totalorder %s923, 0
          %s925 = scalar_select %p924, %s923, 0
          %s926 = smul.addr %s925, 4
          %s927 = smul.addr %s926, 4
          %s928 = scalar_lea.vmem %s18, %s927
          %s929 = ssub.s32 %s45, 1
          %p930 = scmp.gt.s32.totalorder %s929, 0
          %s931 = scalar_select %p930, %s929, 0
        $region100: #{tpu_custom_call.1} parent=71 // pred_fallthru
          _
        // Predicated region
        $region101: #{tpu_custom_call.1} parent=71 // pred_check
          %p932 = pneg %p533
        $region102: #{tpu_custom_call.1} parent=71 // pred_check_branch
          %934 = sbr.rel (%p932) target = $region104
        $region103: #{tpu_custom_call.1} parent=71 // pred_region
          %s935 = ssub.s32 %s45, 1
          %p936 = scmp.gt.s32.totalorder %s935, 0
          %s937 = scalar_select %p936, %s935, 0
          %p938 = scmp.lt.s32.totalorder %s937, 0
          %s939 = scalar_select %p938, %s937, 0
          %s940 = scalar_lea.vmem %s19, %s939
          %s941 = ssub.s32 %s45, 1
          %p942 = scmp.gt.s32.totalorder %s941, 0
          %s943 = scalar_select %p942, %s941, 0
        $region104: #{tpu_custom_call.1} parent=71 // pred_fallthru
          _
        // Predicated region
        $region105: #{tpu_custom_call.1} parent=71 // pred_check
          %p944 = pneg %p565
        $region106: #{tpu_custom_call.1} parent=71 // pred_check_branch
          %946 = sbr.rel (%p944) target = $region108
        $region107: #{tpu_custom_call.1} parent=71 // pred_region
          %s947 = ssub.s32 %s45, 1
          %p948 = scmp.gt.s32.totalorder %s947, 0
          %s949 = scalar_select %p948, %s947, 0
          %p950 = scmp.lt.s32.totalorder %s949, 0
          %s951 = scalar_select %p950, %s949, 0
          %s952 = scalar_lea.vmem %s20, %s951
          %s953 = ssub.s32 %s45, 1
          %p954 = scmp.gt.s32.totalorder %s953, 0
          %s955 = scalar_select %p954, %s953, 0
        $region108: #{tpu_custom_call.1} parent=71 // pred_fallthru
          _
        // Predicated region
        $region109: #{tpu_custom_call.1} parent=71 // pred_check
          %p956 = pneg %p597
        $region110: #{tpu_custom_call.1} parent=71 // pred_check_branch
          %958 = sbr.rel (%p956) target = $region112
        $region111: #{tpu_custom_call.1} parent=71 // pred_region
          %s959 = ssub.s32 %s45, 1
          %p960 = scmp.gt.s32.totalorder %s959, 0
          %s961 = scalar_select %p960, %s959, 0
          %p962 = scmp.lt.s32.totalorder %s961, 0
          %s963 = scalar_select %p962, %s961, 0
          %s964 = scalar_lea.vmem %s21, %s963
          %s965 = ssub.s32 %s45, 1
          %p966 = scmp.gt.s32.totalorder %s965, 0
          %s967 = scalar_select %p966, %s965, 0
        $region112: #{tpu_custom_call.1} parent=71 // pred_fallthru
          _
        // Predicated region
        $region113: #{tpu_custom_call.1} parent=71 // pred_check
          %p968 = pneg %p629
        $region114: #{tpu_custom_call.1} parent=71 // pred_check_branch
          %970 = sbr.rel (%p968) target = $region116
        $region115: #{tpu_custom_call.1} parent=71 // pred_region
          %s971 = ssub.s32 %s45, 1
          %p972 = scmp.gt.s32.totalorder %s971, 0
          %s973 = scalar_select %p972, %s971, 0
          %p974 = scmp.lt.s32.totalorder %s973, 0
          %s975 = scalar_select %p974, %s973, 0
          %s976 = smul.addr %s975, 12
          %s977 = smul.addr %s976, 4
          %s978 = scalar_lea.vmem %s22, %s977
          %s979 = ssub.s32 %s45, 1
          %p980 = scmp.gt.s32.totalorder %s979, 0
          %s981 = scalar_select %p980, %s979, 0
        $region116: #{tpu_custom_call.1} parent=71 // pred_fallthru
          _
        // Predicated region
        $region117: #{tpu_custom_call.1} parent=71 // pred_check
          %p982 = pneg %p661
        $region118: #{tpu_custom_call.1} parent=71 // pred_check_branch
          %984 = sbr.rel (%p982) target = $region120
        $region119: #{tpu_custom_call.1} parent=71 // pred_region
          %s985 = ssub.s32 %s45, 1
          %p986 = scmp.gt.s32.totalorder %s985, 0
          %s987 = scalar_select %p986, %s985, 0
          %p988 = scmp.lt.s32.totalorder %s987, 0
          %s989 = scalar_select %p988, %s987, 0
          %s990 = scalar_lea.vmem %s23, %s989
          %s991 = ssub.s32 %s45, 1
          %p992 = scmp.gt.s32.totalorder %s991, 0
          %s993 = scalar_select %p992, %s991, 0
        $region120: #{tpu_custom_call.1} parent=71 // pred_fallthru
          _
        // Predicated region
        $region121: #{tpu_custom_call.1} parent=71 // pred_check
          %p994 = pneg %p693
        $region122: #{tpu_custom_call.1} parent=71 // pred_check_branch
          %996 = sbr.rel (%p994) target = $region124
        $region123: #{tpu_custom_call.1} parent=71 // pred_region
          %s997 = ssub.s32 %s45, 1
          %p998 = scmp.gt.s32.totalorder %s997, 0
          %s999 = scalar_select %p998, %s997, 0
          %p1000 = scmp.lt.s32.totalorder %s999, 0
          %s1001 = scalar_select %p1000, %s999, 0
          %s1002 = smul.addr %s1001, 8
          %s1003 = smul.addr %s1002, 4
          %s1004 = scalar_lea.vmem %s24, %s1003
          %s1005 = ssub.s32 %s45, 1
          %p1006 = scmp.gt.s32.totalorder %s1005, 0
          %s1007 = scalar_select %p1006, %s1005, 0
        $region124: #{tpu_custom_call.1} parent=71 // pred_fallthru
          _
        // Predicated region
        $region125: #{tpu_custom_call.1} parent=71 // pred_check
          %p1008 = pneg %p725
        $region126: #{tpu_custom_call.1} parent=71 // pred_check_branch
          %1010 = sbr.rel (%p1008) target = $region128
        $region127: #{tpu_custom_call.1} parent=71 // pred_region
          %s1011 = ssub.s32 %s45, 1
          %p1012 = scmp.gt.s32.totalorder %s1011, 0
          %s1013 = scalar_select %p1012, %s1011, 0
          %p1014 = scmp.lt.s32.totalorder %s1013, 0
          %s1015 = scalar_select %p1014, %s1013, 0
          %s1016 = scalar_lea.vmem %s25, %s1015
          %s1017 = ssub.s32 %s45, 1
          %p1018 = scmp.gt.s32.totalorder %s1017, 0
          %s1019 = scalar_select %p1018, %s1017, 0
        $region128: #{tpu_custom_call.1} parent=71 // pred_fallthru
          _
      $region72: #{tpu_custom_call.1} parent=5 // pred_fallthru
        _
      %p1020 = scmp.le.s32.totalorder 1, %s37
      %p1021 = scmp.lt.s32.totalorder %s37, 5
      %p1022 = pnand %p1020, %p1021
      %p1023 = pneg %p1022
      // Predicated region
      $region129: #{tpu_custom_call.1} parent=5 // pred_check
        _
      $region130: #{tpu_custom_call.1} parent=5 // pred_check_branch
        %1025 = sbr.rel (%p1022) target = $region132
      $region131: #{tpu_custom_call.1} parent=5 // pred_region
        %s1026 = ssub.s32 %s37, 1
        %p1027 = scmp.lt.s32.totalorder %s46, 1
        %s1028 = scalar_select %p1027, %s46, 1
        %s1029 = smul.addr %s1028, 8
        %s1030 = scalar_lea.vmem %s0, %s1029
        %p1031 = pneg %p75
        %p1032 = pneg %p72
        %p1033 = pneg %p96
        %p1034 = pneg %p93
        %p1035 = scmp.lt.s32.totalorder %s46, 1
        %s1036 = scalar_select %p1035, %s46, 1
        %s1037 = scalar_lea.vmem %s2, %s1036
        %p1038 = pneg %p122
        %p1039 = pneg %p119
        %p1040 = scmp.lt.s32.totalorder %s46, 1
        %s1041 = scalar_select %p1040, %s46, 1
        %s1042 = smul.addr %s1041, 8
        %s1043 = scalar_lea.vmem %s3, %s1042
        %p1044 = pneg %p148
        %p1045 = pneg %p145
        %p1046 = pneg %p169
        %p1047 = pneg %p166
        %p1048 = pneg %p190
        %p1049 = pneg %p187
        %p1050 = pneg %p211
        %p1051 = pneg %p208
        %p1052 = pneg %p232
        %p1053 = pneg %p229
        %p1054 = pneg %p253
        %p1055 = pneg %p250
        %p1056 = pneg %p274
        %p1057 = pneg %p271
        %p1058 = pneg %p295
        %p1059 = pneg %p292
        %p1060 = pneg %p316
        %p1061 = pneg %p313
        %p1062 = pneg %p337
        %p1063 = pneg %p334
        %p1064 = pneg %p358
        %p1065 = pneg %p355
        %p1066 = pneg %p379
        %p1067 = pneg %p376
        %s1068 = ssub.s32 %s47, 1
        %p1069 = scmp.gt.s32.totalorder %s1068, 0
        %s1070 = scalar_select %p1069, %s1068, 0
        %p1071 = scmp.lt.s32.totalorder %s1070, 0
        %s1072 = scalar_select %p1071, %s1070, 0
        %s1073 = scalar_lea.vmem %s15, %s1072
        %p1074 = pneg %p411
        %p1075 = pneg %p408
        %s1076 = ssub.s32 %s47, 1
        %p1077 = scmp.gt.s32.totalorder %s1076, 0
        %s1078 = scalar_select %p1077, %s1076, 0
        %p1079 = scmp.lt.s32.totalorder %s1078, 0
        %s1080 = scalar_select %p1079, %s1078, 0
        %s1081 = scalar_lea.vmem %s16, %s1080
        %p1082 = pneg %p443
        %p1083 = pneg %p440
        %s1084 = ssub.s32 %s47, 1
        %p1085 = scmp.gt.s32.totalorder %s1084, 0
        %s1086 = scalar_select %p1085, %s1084, 0
        %p1087 = scmp.lt.s32.totalorder %s1086, 0
        %s1088 = scalar_select %p1087, %s1086, 0
        %s1089 = smul.addr %s1088, 4
        %s1090 = smul.addr %s1089, 4
        %s1091 = scalar_lea.vmem %s17, %s1090
        %p1092 = pneg %p475
        %p1093 = pneg %p472
        %s1094 = ssub.s32 %s47, 1
        %p1095 = scmp.gt.s32.totalorder %s1094, 0
        %s1096 = scalar_select %p1095, %s1094, 0
        %p1097 = scmp.lt.s32.totalorder %s1096, 0
        %s1098 = scalar_select %p1097, %s1096, 0
        %s1099 = smul.addr %s1098, 4
        %s1100 = smul.addr %s1099, 4
        %s1101 = scalar_lea.vmem %s18, %s1100
        %p1102 = pneg %p507
        %p1103 = pneg %p504
        %s1104 = ssub.s32 %s47, 1
        %p1105 = scmp.gt.s32.totalorder %s1104, 0
        %s1106 = scalar_select %p1105, %s1104, 0
        %p1107 = scmp.lt.s32.totalorder %s1106, 0
        %s1108 = scalar_select %p1107, %s1106, 0
        %s1109 = scalar_lea.vmem %s19, %s1108
        %p1110 = pneg %p539
        %p1111 = pneg %p536
        %s1112 = ssub.s32 %s47, 1
        %p1113 = scmp.gt.s32.totalorder %s1112, 0
        %s1114 = scalar_select %p1113, %s1112, 0
        %p1115 = scmp.lt.s32.totalorder %s1114, 0
        %s1116 = scalar_select %p1115, %s1114, 0
        %s1117 = scalar_lea.vmem %s20, %s1116
        %p1118 = pneg %p571
        %p1119 = pneg %p568
        %s1120 = ssub.s32 %s47, 1
        %p1121 = scmp.gt.s32.totalorder %s1120, 0
        %s1122 = scalar_select %p1121, %s1120, 0
        %p1123 = scmp.lt.s32.totalorder %s1122, 0
        %s1124 = scalar_select %p1123, %s1122, 0
        %s1125 = scalar_lea.vmem %s21, %s1124
        %p1126 = pneg %p603
        %p1127 = pneg %p600
        %s1128 = ssub.s32 %s47, 1
        %p1129 = scmp.gt.s32.totalorder %s1128, 0
        %s1130 = scalar_select %p1129, %s1128, 0
        %p1131 = scmp.lt.s32.totalorder %s1130, 0
        %s1132 = scalar_select %p1131, %s1130, 0
        %s1133 = smul.addr %s1132, 12
        %s1134 = smul.addr %s1133, 4
        %s1135 = scalar_lea.vmem %s22, %s1134
        %p1136 = pneg %p635
        %p1137 = pneg %p632
        %s1138 = ssub.s32 %s47, 1
        %p1139 = scmp.gt.s32.totalorder %s1138, 0
        %s1140 = scalar_select %p1139, %s1138, 0
        %p1141 = scmp.lt.s32.totalorder %s1140, 0
        %s1142 = scalar_select %p1141, %s1140, 0
        %s1143 = scalar_lea.vmem %s23, %s1142
        %p1144 = pneg %p667
        %p1145 = pneg %p664
        %s1146 = ssub.s32 %s47, 1
        %p1147 = scmp.gt.s32.totalorder %s1146, 0
        %s1148 = scalar_select %p1147, %s1146, 0
        %p1149 = scmp.lt.s32.totalorder %s1148, 0
        %s1150 = scalar_select %p1149, %s1148, 0
        %s1151 = smul.addr %s1150, 8
        %s1152 = smul.addr %s1151, 4
        %s1153 = scalar_lea.vmem %s24, %s1152
        %p1154 = pneg %p699
        %p1155 = pneg %p696
        %s1156 = ssub.s32 %s47, 1
        %p1157 = scmp.gt.s32.totalorder %s1156, 0
        %s1158 = scalar_select %p1157, %s1156, 0
        %p1159 = scmp.lt.s32.totalorder %s1158, 0
        %s1160 = scalar_select %p1159, %s1158, 0
        %s1161 = scalar_lea.vmem %s25, %s1160
        %p1162 = pneg %p731
        %p1163 = pneg %p728
        %p1164 = pneg %p752
        %p1165 = pneg %p749
        %p1166 = pneg %p773
        %p1167 = pneg %p770
        %p1168 = pneg %p799
        %p1169 = pneg %p796
        %s1170 = sand.u32 %s786, 1
        %s1171 = scalar_lea.sflag [#allocation3], %s1170
        %s1172 = sand.u32 %s786, 1
        %s1173 = smul.addr %s1172, 8
        %s1174 = scalar_lea.vmem [#allocation2], %s1173
        %p1175 = scmp.lt.s32.totalorder %s46, 1
        %s1176 = scalar_select %p1175, %s46, 1
        %s1177 = smul.addr %s1176, 8
        %s1178 = scalar_lea.vmem %s0, %s1177
        %p1179 = scmp.lt.s32.totalorder %s46, 1
        %s1180 = scalar_select %p1179, %s46, 1
        %s1181 = scalar_lea.vmem %s2, %s1180
        %p1182 = scmp.lt.s32.totalorder %s46, 1
        %s1183 = scalar_select %p1182, %s46, 1
        %s1184 = smul.addr %s1183, 8
        %s1185 = scalar_lea.vmem %s3, %s1184
        %s1186 = ssub.s32 %s47, 1
        %p1187 = scmp.gt.s32.totalorder %s1186, 0
        %s1188 = scalar_select %p1187, %s1186, 0
        %p1189 = scmp.lt.s32.totalorder %s1188, 0
        %s1190 = scalar_select %p1189, %s1188, 0
        %s1191 = scalar_lea.vmem %s15, %s1190
        %s1192 = ssub.s32 %s47, 1
        %p1193 = scmp.gt.s32.totalorder %s1192, 0
        %s1194 = scalar_select %p1193, %s1192, 0
        %s1195 = ssub.s32 %s47, 1
        %p1196 = scmp.gt.s32.totalorder %s1195, 0
        %s1197 = scalar_select %p1196, %s1195, 0
        %p1198 = scmp.lt.s32.totalorder %s1197, 0
        %s1199 = scalar_select %p1198, %s1197, 0
        %s1200 = scalar_lea.vmem %s16, %s1199
        %s1201 = ssub.s32 %s47, 1
        %p1202 = scmp.gt.s32.totalorder %s1201, 0
        %s1203 = scalar_select %p1202, %s1201, 0
        %s1204 = ssub.s32 %s47, 1
        %p1205 = scmp.gt.s32.totalorder %s1204, 0
        %s1206 = scalar_select %p1205, %s1204, 0
        %p1207 = scmp.lt.s32.totalorder %s1206, 0
        %s1208 = scalar_select %p1207, %s1206, 0
        %s1209 = smul.addr %s1208, 4
        %s1210 = smul.addr %s1209, 4
        %s1211 = scalar_lea.vmem %s17, %s1210
        %s1212 = ssub.s32 %s47, 1
        %p1213 = scmp.gt.s32.totalorder %s1212, 0
        %s1214 = scalar_select %p1213, %s1212, 0
        %s1215 = ssub.s32 %s47, 1
        %p1216 = scmp.gt.s32.totalorder %s1215, 0
        %s1217 = scalar_select %p1216, %s1215, 0
        %p1218 = scmp.lt.s32.totalorder %s1217, 0
        %s1219 = scalar_select %p1218, %s1217, 0
        %s1220 = smul.addr %s1219, 4
        %s1221 = smul.addr %s1220, 4
        %s1222 = scalar_lea.vmem %s18, %s1221
        %s1223 = ssub.s32 %s47, 1
        %p1224 = scmp.gt.s32.totalorder %s1223, 0
        %s1225 = scalar_select %p1224, %s1223, 0
        %s1226 = ssub.s32 %s47, 1
        %p1227 = scmp.gt.s32.totalorder %s1226, 0
        %s1228 = scalar_select %p1227, %s1226, 0
        %p1229 = scmp.lt.s32.totalorder %s1228, 0
        %s1230 = scalar_select %p1229, %s1228, 0
        %s1231 = scalar_lea.vmem %s19, %s1230
        %s1232 = ssub.s32 %s47, 1
        %p1233 = scmp.gt.s32.totalorder %s1232, 0
        %s1234 = scalar_select %p1233, %s1232, 0
        %s1235 = ssub.s32 %s47, 1
        %p1236 = scmp.gt.s32.totalorder %s1235, 0
        %s1237 = scalar_select %p1236, %s1235, 0
        %p1238 = scmp.lt.s32.totalorder %s1237, 0
        %s1239 = scalar_select %p1238, %s1237, 0
        %s1240 = scalar_lea.vmem %s20, %s1239
        %s1241 = ssub.s32 %s47, 1
        %p1242 = scmp.gt.s32.totalorder %s1241, 0
        %s1243 = scalar_select %p1242, %s1241, 0
        %s1244 = ssub.s32 %s47, 1
        %p1245 = scmp.gt.s32.totalorder %s1244, 0
        %s1246 = scalar_select %p1245, %s1244, 0
        %p1247 = scmp.lt.s32.totalorder %s1246, 0
        %s1248 = scalar_select %p1247, %s1246, 0
        %s1249 = scalar_lea.vmem %s21, %s1248
        %s1250 = ssub.s32 %s47, 1
        %p1251 = scmp.gt.s32.totalorder %s1250, 0
        %s1252 = scalar_select %p1251, %s1250, 0
        %s1253 = ssub.s32 %s47, 1
        %p1254 = scmp.gt.s32.totalorder %s1253, 0
        %s1255 = scalar_select %p1254, %s1253, 0
        %p1256 = scmp.lt.s32.totalorder %s1255, 0
        %s1257 = scalar_select %p1256, %s1255, 0
        %s1258 = smul.addr %s1257, 12
        %s1259 = smul.addr %s1258, 4
        %s1260 = scalar_lea.vmem %s22, %s1259
        %s1261 = ssub.s32 %s47, 1
        %p1262 = scmp.gt.s32.totalorder %s1261, 0
        %s1263 = scalar_select %p1262, %s1261, 0
        %s1264 = ssub.s32 %s47, 1
        %p1265 = scmp.gt.s32.totalorder %s1264, 0
        %s1266 = scalar_select %p1265, %s1264, 0
        %p1267 = scmp.lt.s32.totalorder %s1266, 0
        %s1268 = scalar_select %p1267, %s1266, 0
        %s1269 = scalar_lea.vmem %s23, %s1268
        %s1270 = ssub.s32 %s47, 1
        %p1271 = scmp.gt.s32.totalorder %s1270, 0
        %s1272 = scalar_select %p1271, %s1270, 0
        %s1273 = ssub.s32 %s47, 1
        %p1274 = scmp.gt.s32.totalorder %s1273, 0
        %s1275 = scalar_select %p1274, %s1273, 0
        %p1276 = scmp.lt.s32.totalorder %s1275, 0
        %s1277 = scalar_select %p1276, %s1275, 0
        %s1278 = smul.addr %s1277, 8
        %s1279 = smul.addr %s1278, 4
        %s1280 = scalar_lea.vmem %s24, %s1279
        %s1281 = ssub.s32 %s47, 1
        %p1282 = scmp.gt.s32.totalorder %s1281, 0
        %s1283 = scalar_select %p1282, %s1281, 0
        %s1284 = ssub.s32 %s47, 1
        %p1285 = scmp.gt.s32.totalorder %s1284, 0
        %s1286 = scalar_select %p1285, %s1284, 0
        %p1287 = scmp.lt.s32.totalorder %s1286, 0
        %s1288 = scalar_select %p1287, %s1286, 0
        %s1289 = scalar_lea.vmem %s25, %s1288
        %s1290 = ssub.s32 %s47, 1
        %p1291 = scmp.gt.s32.totalorder %s1290, 0
        %s1292 = scalar_select %p1291, %s1290, 0
        %v1294 = vld [vmem:[%s1181] sm:$0x1]
        %v1295 = vld [vmem:[%s1185] sm:$0xff]
        %p1296 = scmp.eq.s32.totalorder %s47, 0
        // Predicated region
        $region133: #{tpu_custom_call.1} parent=131 // pred_check
          %p1297 = pneg %p1296
        $region134: #{tpu_custom_call.1} parent=131 // pred_check_branch
          %1299 = sbr.rel (%p1297) target = $region136
        $region135: #{tpu_custom_call.1} parent=131 // pred_region
          %v1300 = vld [vmem:[%s1178] sm:$0xff]
          %v1301 = vmul.f32 %v1300, 5.656854
          %v1302 = vld [vmem:[%s1] sm:$0xff]
          %v1303 = vadd.f32 %v1301, %v1302
          %v1304 = vld [vmem:[%s4] sm:$0x1]
          %v1305 = vld [vmem:[%s5] sm:$0x1]
          %v1306 = vld [vmem:[%s6] sm:$0xf]
          %v1307 = vld [vmem:[%s6 + $0x4] sm:$0xf]
          %v1308 = vld [vmem:[%s6 + $0x8] sm:$0xf]
          %v1309 = vld [vmem:[%s6 + $0xc] sm:$0xf]
          %v1310 = vld [vmem:[%s7] sm:$0xf]
          %v1311 = vld [vmem:[%s7 + $0x4] sm:$0xf]
          %v1312 = vld [vmem:[%s7 + $0x8] sm:$0xf]
          %v1313 = vld [vmem:[%s7 + $0xc] sm:$0xf]
          %v1314 = vld [vmem:[%s8] sm:$0x1]
          %v1315 = vld [vmem:[%s9] sm:$0x1]
          %v1316 = vld [vmem:[%s10] sm:$0x1]
          %v1317 = vld [vmem:[%s11] sm:$0xf]
          %v1318 = vld [vmem:[%s11 + $0x4] sm:$0xf]
          %v1319 = vld [vmem:[%s11 + $0x8] sm:$0xf]
          %v1320 = vld [vmem:[%s11 + $0xc] sm:$0xf]
          %v1321 = vld [vmem:[%s11 + $0x10] sm:$0xf]
          %v1322 = vld [vmem:[%s11 + $0x14] sm:$0xf]
          %v1323 = vld [vmem:[%s11 + $0x18] sm:$0xf]
          %v1324 = vld [vmem:[%s11 + $0x1c] sm:$0xf]
          %v1325 = vld [vmem:[%s11 + $0x20] sm:$0xf]
          %v1326 = vld [vmem:[%s11 + $0x24] sm:$0xf]
          %v1327 = vld [vmem:[%s11 + $0x28] sm:$0xf]
          %v1328 = vld [vmem:[%s11 + $0x2c] sm:$0xf]
          %v1329 = vld [vmem:[%s12] sm:$0x1]
          %v1330 = vld [vmem:[%s13] sm:$0xf]
          %v1331 = vld [vmem:[%s13 + $0x4] sm:$0xf]
          %v1332 = vld [vmem:[%s13 + $0x8] sm:$0xf]
          %v1333 = vld [vmem:[%s13 + $0xc] sm:$0xf]
          %v1334 = vld [vmem:[%s13 + $0x10] sm:$0xf]
          %v1335 = vld [vmem:[%s13 + $0x14] sm:$0xf]
          %v1336 = vld [vmem:[%s13 + $0x18] sm:$0xf]
          %v1337 = vld [vmem:[%s13 + $0x1c] sm:$0xf]
          %v1338 = vld [vmem:[%s14] sm:$0x1]
          %vm1339 = vcmask 261120
          %v1340 = vsel %vm1339, %v1303, 0.0
          %1341 = vadd.xlane.f32.xlu0 %v1340
          %v1342 = vpop.xlane.xlu0 %1341
          %v1343 = vrcp.pop 32.0
          %v1344 = vmul.f32 32.0, %v1343
          %v1345 = vsub.f32 1.0, %v1344
          %v1346 = vmul.f32 %v1343, %v1345
          %v1347 = vadd.f32 %v1343, %v1346
          %vm1348 = vweird.f32 %v1343
          %v1349 = vsel %vm1348, %v1343, %v1347
          %v1350 = vmul.f32 %v1342, %v1349
          %v1351 = vsub.f32 %v1303, %v1350
          %v1352 = vmul.f32 %v1351, %v1351
          %v1353 = vsel %vm1339, %v1352, 0.0
          %1354 = vadd.xlane.f32.xlu0 %v1353
          %v1355 = vpop.xlane.xlu0 %1354
          %v1356 = vmul.f32 %v1355, %v1349
          %v1357 = vadd.f32 %v1356, 1e-05
          %v1358 = vrsqrt.pop %v1357
          %v1359 = vmul.f32 %v1358, %v1357
          %v1360 = vmul.f32 %v1359, %v1358
          %v1361 = vmul.f32 0.5, %v1360
          %v1362 = vsub.f32 1.5, %v1361
          %v1363 = vmul.f32 %v1358, %v1362
          %vm1364 = vweird.f32 %v1357
          %vm1365 = vweird.f32 %v1358
          %vm1366 = vmor %vm1364, %vm1365
          %v1367 = vsel %vm1366, %v1358, %v1363
          %v1368 = vmul.f32 %v1351, %v1367
          %v1370 = vperm.slane %v1304, 0
          %v1372 = vmul.f32 %v1368, %v1370
          %v1374 = vperm.slane %v1305, 0
          %v1376 = vadd.f32 %v1372, %v1374
          %v1377 = vpack.c.bf16 %v1376, %v1376
          %v1382 = vunpack.c.l.b16 %v1306
          %v1383 = vunpack.c.l.b16 %v1307
          %v1384 = vunpack.c.l.b16 %v1308
          %v1385 = vunpack.c.l.b16 %v1309
          %v1386 = vpack.c.b16 %v1383, %v1382
          %v1387 = vpack.c.b16 %v1385, %v1384
          %v1391 = vsel %vm1339, %v1377, 0
          %1393 = vmatpush.bf16.msra.mxu0 0
          %1394 = vmatpush.bf16.msra.mxu0 0
          %1395 = vmatpush.bf16.msra.mxu0 0
          %1396 = vmatpush.bf16.msra.mxu0 0
          %1397 = vmatpush.bf16.msra.mxu0 0
          %1398 = vmatpush.bf16.msra.mxu0 0
          %1399 = vmatpush.bf16.msra.mxu0 %v1387
          %1400 = vmatpush.bf16.msra.mxu0 %v1386
          %1401 = vmatmul.bf16.gmra.mxu0 %v1391
          %v1402 = vpop.f32.mrf.mxu0
          %v1403 = vadd.f32 0.0, %v1402
          %v1404 = vpop.f32.mrf.mxu0
          %1405 = vdwg.mxu0
          %v1406 = vpack.c.bf16 %v1403, %v1403
          %v1408 = vperm.slane %v1294, 0
          %1411 = vrot.lane.b32.xlu0 %v1406, 96
          %v1412 = vpop.permute.xlu0 %1411
          %vm1413 = vcmask 130048
          %v1415 = vsel %vm1413, %v1406, 0
          %v1418 = vsel %vm1413, %v1412, 0
          %1420 = vmatpush.bf16.xpose.msra.mxu0 0
          %1421 = vmatpush.bf16.xpose.msra.mxu0 0
          %1422 = vmatpush.bf16.xpose.msra.mxu0 0
          %1423 = vmatpush.bf16.xpose.msra.mxu0 0
          %1424 = vmatpush.bf16.xpose.msra.mxu0 0
          %1425 = vmatpush.bf16.xpose.msra.mxu0 0
          %1426 = vmatpush.bf16.xpose.msra.mxu0 0
          %1427 = vmatpush.bf16.xpose.msra.mxu0 %v1418
          %1428 = vmatmul.bf16.gmra.mxu0 %v1415
          %v1429 = vpop.f32.mrf.mxu0
          %v1430 = vadd.f32 %v1408, %v1429
          %v1431 = vpop.f32.mrf.mxu0
          %1432 = vdwg.mxu0
          %vm1433 = vcmask 64512
          %v1434 = vsel %vm1433, %v1430, -inf
          %1435 = vmax.xlane.f32.xlu0 %v1434
          %v1436 = vpop.xlane.xlu0 %1435
          %v1437 = vsub.f32 %v1430, %v1436
          %v1438 = vmul.f32 %v1437, 1.442695
          %v1439 = vpow.pop %v1438
          %v1440 = vsel %vm1433, %v1439, 0.0
          %1441 = vadd.xlane.f32.xlu0 %v1440
          %v1442 = vpop.xlane.xlu0 %1441
          %v1443 = vpack.c.bf16 %v1439, %v1439
          %1444 = vrot.lane.b32.xlu0 %v1406, 64
          %v1445 = vpop.permute.xlu0 %1444
          %v1447 = vsel %vm1433, %v1443, 0
          %vm1449 = vcmask 1043456
          %v1451 = vsel %vm1449, %v1445, 0
          %1453 = vmatpush.bf16.msra.mxu0 0
          %1454 = vmatpush.bf16.msra.mxu0 0
          %1455 = vmatpush.bf16.msra.mxu0 0
          %1456 = vmatpush.bf16.msra.mxu0 0
          %1457 = vmatpush.bf16.msra.mxu0 0
          %1458 = vmatpush.bf16.msra.mxu0 0
          %1459 = vmatpush.bf16.msra.mxu0 0
          %1460 = vmatpush.bf16.msra.mxu0 %v1451
          %1461 = vmatmul.bf16.gmra.mxu0 %v1447
          %v1462 = vpop.f32.mrf.mxu0
          %v1463 = vadd.f32 0.0, %v1462
          %v1464 = vpop.f32.mrf.mxu0
          %1465 = vdwg.mxu0
          %v1466 = vrcp.pop %v1442
          %v1467 = vmul.f32 %v1463, %v1466
          %1468 = vrot.lane.b32.xlu0 %v1406, 112
          %v1469 = vpop.permute.xlu0 %1468
          %1470 = vrot.lane.b32.xlu0 %v1406, 80
          %v1471 = vpop.permute.xlu0 %1470
          %v1473 = vsel %vm1413, %v1469, 0
          %v1476 = vsel %vm1413, %v1471, 0
          %1478 = vmatpush.bf16.xpose.msra.mxu0 0
          %1479 = vmatpush.bf16.xpose.msra.mxu0 0
          %1480 = vmatpush.bf16.xpose.msra.mxu0 0
          %1481 = vmatpush.bf16.xpose.msra.mxu0 0
          %1482 = vmatpush.bf16.xpose.msra.mxu0 0
          %1483 = vmatpush.bf16.xpose.msra.mxu0 0
          %1484 = vmatpush.bf16.xpose.msra.mxu0 0
          %1485 = vmatpush.bf16.xpose.msra.mxu0 %v1476
          %1486 = vmatmul.bf16.gmra.mxu0 %v1473
          %v1487 = vpop.f32.mrf.mxu0
          %v1488 = vadd.f32 %v1408, %v1487
          %v1489 = vpop.f32.mrf.mxu0
          %1490 = vdwg.mxu0
          %v1491 = vsel %vm1433, %v1488, -inf
          %1492 = vmax.xlane.f32.xlu0 %v1491
          %v1493 = vpop.xlane.xlu0 %1492
          %v1494 = vsub.f32 %v1488, %v1493
          %v1495 = vmul.f32 %v1494, 1.442695
          %v1496 = vpow.pop %v1495
          %v1497 = vsel %vm1433, %v1496, 0.0
          %1498 = vadd.xlane.f32.xlu0 %v1497
          %v1499 = vpop.xlane.xlu0 %1498
          %v1500 = vpack.c.bf16 %v1496, %v1496
          %1501 = vrot.lane.b32.xlu0 %v1406, 48
          %v1502 = vpop.permute.xlu0 %1501
          %v1504 = vsel %vm1433, %v1500, 0
          %v1507 = vsel %vm1449, %v1502, 0
          %1509 = vmatpush.bf16.msra.mxu0 0
          %1510 = vmatpush.bf16.msra.mxu0 0
          %1511 = vmatpush.bf16.msra.mxu0 0
          %1512 = vmatpush.bf16.msra.mxu0 0
          %1513 = vmatpush.bf16.msra.mxu0 0
          %1514 = vmatpush.bf16.msra.mxu0 0
          %1515 = vmatpush.bf16.msra.mxu0 0
          %1516 = vmatpush.bf16.msra.mxu0 %v1507
          %1517 = vmatmul.bf16.gmra.mxu0 %v1504
          %v1518 = vpop.f32.mrf.mxu0
          %v1519 = vadd.f32 0.0, %v1518
          %v1520 = vpop.f32.mrf.mxu0
          %1521 = vdwg.mxu0
          %v1522 = vrcp.pop %v1499
          %v1523 = vmul.f32 %v1519, %v1522
          %1525 = vrot.lane.b32.xlu0 %v1523, 16
          %v1526 = vpop.permute.xlu0 %1525
          %v1528 = vsel %vm1413, %v1467, %v1526
          %v1529 = vpack.c.bf16 %v1528, %v1528
          %v1531 = vperm.slane %v1314, 0
          %v1537 = vunpack.c.l.b16 %v1310
          %v1538 = vunpack.c.l.b16 %v1311
          %v1539 = vunpack.c.l.b16 %v1312
          %v1540 = vunpack.c.l.b16 %v1313
          %v1541 = vpack.c.b16 %v1538, %v1537
          %v1542 = vpack.c.b16 %v1540, %v1539
          %v1546 = vsel %vm1339, %v1529, 0
          %1548 = vmatpush.bf16.msra.mxu0 0
          %1549 = vmatpush.bf16.msra.mxu0 0
          %1550 = vmatpush.bf16.msra.mxu0 0
          %1551 = vmatpush.bf16.msra.mxu0 0
          %1552 = vmatpush.bf16.msra.mxu0 0
          %1553 = vmatpush.bf16.msra.mxu0 0
          %1554 = vmatpush.bf16.msra.mxu0 %v1542
          %1555 = vmatpush.bf16.msra.mxu0 %v1541
          %1556 = vmatmul.bf16.gmra.mxu0 %v1546
          %v1557 = vpop.f32.mrf.mxu0
          %v1558 = vadd.f32 %v1531, %v1557
          %v1559 = vpop.f32.mrf.mxu0
          %1560 = vdwg.mxu0
          %v1561 = vadd.f32 %v1558, %v1303
          %vm1562 = vcmp.gt.f32.partialorder %v1295, 0.5
          %v1563 = vsel %vm1562, 1, 0
          %1564 = vset.pattern.permute.xlu0 0
          %1565 = vperm.xlu0 %1564, %v1563
          %v1566 = vpop.permute.xlu0 %1565
          %vm1567 = vcmp.eq.s32.totalorder %v1566, 1
          %v1568 = vsel %vm1567, 0.0, %v1561
          %v1569 = vsel %vm1339, %v1568, 0.0
          %1570 = vadd.xlane.f32.xlu0 %v1569
          %v1571 = vpop.xlane.xlu0 %1570
          %v1572 = vmul.f32 %v1571, %v1349
          %v1573 = vsub.f32 %v1568, %v1572
          %v1574 = vmul.f32 %v1573, %v1573
          %v1575 = vsel %vm1339, %v1574, 0.0
          %1576 = vadd.xlane.f32.xlu0 %v1575
          %v1577 = vpop.xlane.xlu0 %1576
          %v1578 = vmul.f32 %v1577, %v1349
          %v1579 = vadd.f32 %v1578, 1e-05
          %v1580 = vrsqrt.pop %v1579
          %v1581 = vmul.f32 %v1580, %v1579
          %v1582 = vmul.f32 %v1581, %v1580
          %v1583 = vmul.f32 0.5, %v1582
          %v1584 = vsub.f32 1.5, %v1583
          %v1585 = vmul.f32 %v1580, %v1584
          %vm1586 = vweird.f32 %v1579
          %vm1587 = vweird.f32 %v1580
          %vm1588 = vmor %vm1586, %vm1587
          %v1589 = vsel %vm1588, %v1580, %v1585
          %v1590 = vmul.f32 %v1573, %v1589
          %v1592 = vperm.slane %v1315, 0
          %v1594 = vmul.f32 %v1590, %v1592
          %v1596 = vperm.slane %v1316, 0
          %v1598 = vadd.f32 %v1594, %v1596
          %v1599 = vlaneseq
          %v1600 = vshrl.u32 %v1599, 7
          %vm1601 = vcmp.eq.s32.totalorder %v1600, 0
          %v1602 = vrot.slane %v1598, 7
          %v1603 = vsel %vm1601, 0.0, %v1602
          %vm1604 = vcmp.eq.s32.totalorder %v1600, 7
          %v1605 = vrot.slane %v1598, 1
          %v1606 = vsel %vm1604, 0.0, %v1605
          %1608 = vrot.lane.b32.xlu0 %v1598, 32
          %v1609 = vpop.permute.xlu0 %1608
          %1612 = vrot.lane.b32.xlu0 %v1606, 64
          %v1613 = vpop.permute.xlu0 %1612
          %v1615 = vsel %vm1339, %v1603, %v1609
          %vm1616 = vcmask 523264
          %v1617 = vsel %vm1616, %v1615, %v1613
          %v1618 = vpack.c.bf16 %v1617, %v1617
          %v1620 = vperm.slane %v1329, 0
          %v1634 = vunpack.c.l.b16 %v1317
          %v1635 = vunpack.c.l.b16 %v1318
          %v1636 = vunpack.c.l.b16 %v1319
          %v1637 = vunpack.c.l.b16 %v1320
          %v1638 = vunpack.c.l.b16 %v1321
          %v1639 = vunpack.c.l.b16 %v1322
          %v1640 = vunpack.c.l.b16 %v1323
          %v1641 = vunpack.c.l.b16 %v1324
          %v1642 = vunpack.c.l.b16 %v1325
          %v1643 = vunpack.c.l.b16 %v1326
          %v1644 = vunpack.c.l.b16 %v1327
          %v1645 = vunpack.c.l.b16 %v1328
          %v1646 = vpack.c.b16 %v1635, %v1634
          %v1647 = vpack.c.b16 %v1637, %v1636
          %v1648 = vpack.c.b16 %v1639, %v1638
          %v1649 = vpack.c.b16 %v1641, %v1640
          %v1650 = vpack.c.b16 %v1643, %v1642
          %v1651 = vpack.c.b16 %v1645, %v1644
          %vm1658 = vcmask 785408
          %v1660 = vsel %vm1658, %v1618, 0
          %1662 = vmatpush.bf16.msra.mxu0 0
          %1663 = vmatpush.bf16.msra.mxu0 0
          %1664 = vmatpush.bf16.msra.mxu0 %v1651
          %1665 = vmatpush.bf16.msra.mxu0 %v1650
          %1666 = vmatpush.bf16.msra.mxu0 %v1649
          %1667 = vmatpush.bf16.msra.mxu0 %v1648
          %1668 = vmatpush.bf16.msra.mxu0 %v1647
          %1669 = vmatpush.bf16.msra.mxu0 %v1646
          %1670 = vmatmul.bf16.gmra.mxu0 %v1660
          %v1671 = vpop.f32.mrf.mxu0
          %v1672 = vadd.f32 %v1620, %v1671
          %v1673 = vpop.f32.mrf.mxu0
          %1674 = vdwg.mxu0
          %v1675 = vmax.f32 %v1672, 0.0
          %v1676 = vpack.c.bf16 %v1675, %v1675
          %v1678 = vperm.slane %v1338, 0
          %v1688 = vunpack.c.l.b16 %v1330
          %v1689 = vunpack.c.l.b16 %v1331
          %v1690 = vunpack.c.l.b16 %v1332
          %v1691 = vunpack.c.l.b16 %v1333
          %v1692 = vunpack.c.l.b16 %v1334
          %v1693 = vunpack.c.l.b16 %v1335
          %v1694 = vunpack.c.l.b16 %v1336
          %v1695 = vunpack.c.l.b16 %v1337
          %v1696 = vpack.c.b16 %v1689, %v1688
          %v1697 = vpack.c.b16 %v1691, %v1690
          %v1698 = vpack.c.b16 %v1693, %v1692
          %v1699 = vpack.c.b16 %v1695, %v1694
          %v1705 = vsel %vm1616, %v1676, 0
          %1707 = vmatpush.bf16.msra.mxu0 0
          %1708 = vmatpush.bf16.msra.mxu0 0
          %1709 = vmatpush.bf16.msra.mxu0 0
          %1710 = vmatpush.bf16.msra.mxu0 0
          %1711 = vmatpush.bf16.msra.mxu0 %v1699
          %1712 = vmatpush.bf16.msra.mxu0 %v1698
          %1713 = vmatpush.bf16.msra.mxu0 %v1697
          %1714 = vmatpush.bf16.msra.mxu0 %v1696
          %1715 = vmatmul.bf16.gmra.mxu0 %v1705
          %v1716 = vpop.f32.mrf.mxu0
          %v1717 = vadd.f32 %v1678, %v1716
          %v1718 = vpop.f32.mrf.mxu0
          %1719 = vdwg.mxu0
          %v1720 = vadd.f32 %v1717, %v1568
          %v1721 = vsel %vm1567, 0.0, %v1720
          %1722 = vst.msk [vmem:[%s1174] sm:$0xff] %vm1339, %v1721
        $region136: #{tpu_custom_call.1} parent=131 // pred_fallthru
          _
        %p1723 = scmp.gt.s32.totalorder %s47, 0
        // Predicated region
        $region137: #{tpu_custom_call.1} parent=131 // pred_check
          %p1724 = pneg %p1723
        $region138: #{tpu_custom_call.1} parent=131 // pred_check_branch
          %1726 = sbr.rel (%p1724) target = $region140
        $region139: #{tpu_custom_call.1} parent=131 // pred_region
          %v1727 = vld [vmem:[%s1191] sm:$0x1]
          %v1728 = vld [vmem:[%s1200] sm:$0x1]
          %v1729 = vld [vmem:[%s1211] sm:$0xf]
          %v1730 = vld [vmem:[%s1211 + $0x4] sm:$0xf]
          %v1731 = vld [vmem:[%s1211 + $0x8] sm:$0xf]
          %v1732 = vld [vmem:[%s1211 + $0xc] sm:$0xf]
          %v1733 = vld [vmem:[%s1222] sm:$0xf]
          %v1734 = vld [vmem:[%s1222 + $0x4] sm:$0xf]
          %v1735 = vld [vmem:[%s1222 + $0x8] sm:$0xf]
          %v1736 = vld [vmem:[%s1222 + $0xc] sm:$0xf]
          %v1737 = vld [vmem:[%s1231] sm:$0x1]
          %v1738 = vld [vmem:[%s1240] sm:$0x1]
          %v1739 = vld [vmem:[%s1249] sm:$0x1]
          %v1740 = vld [vmem:[%s1260] sm:$0xf]
          %v1741 = vld [vmem:[%s1260 + $0x4] sm:$0xf]
          %v1742 = vld [vmem:[%s1260 + $0x8] sm:$0xf]
          %v1743 = vld [vmem:[%s1260 + $0xc] sm:$0xf]
          %v1744 = vld [vmem:[%s1260 + $0x10] sm:$0xf]
          %v1745 = vld [vmem:[%s1260 + $0x14] sm:$0xf]
          %v1746 = vld [vmem:[%s1260 + $0x18] sm:$0xf]
          %v1747 = vld [vmem:[%s1260 + $0x1c] sm:$0xf]
          %v1748 = vld [vmem:[%s1260 + $0x20] sm:$0xf]
          %v1749 = vld [vmem:[%s1260 + $0x24] sm:$0xf]
          %v1750 = vld [vmem:[%s1260 + $0x28] sm:$0xf]
          %v1751 = vld [vmem:[%s1260 + $0x2c] sm:$0xf]
          %v1752 = vld [vmem:[%s1269] sm:$0x1]
          %v1753 = vld [vmem:[%s1280] sm:$0xf]
          %v1754 = vld [vmem:[%s1280 + $0x4] sm:$0xf]
          %v1755 = vld [vmem:[%s1280 + $0x8] sm:$0xf]
          %v1756 = vld [vmem:[%s1280 + $0xc] sm:$0xf]
          %v1757 = vld [vmem:[%s1280 + $0x10] sm:$0xf]
          %v1758 = vld [vmem:[%s1280 + $0x14] sm:$0xf]
          %v1759 = vld [vmem:[%s1280 + $0x18] sm:$0xf]
          %v1760 = vld [vmem:[%s1280 + $0x1c] sm:$0xf]
          %v1761 = vld [vmem:[%s1289] sm:$0x1]
          %v1762 = vld [vmem:[%s1174] sm:$0xff]
          %vm1763 = vcmask 261120
          %v1764 = vsel %vm1763, %v1762, 0.0
          %1765 = vadd.xlane.f32.xlu0 %v1764
          %v1766 = vpop.xlane.xlu0 %1765
          %v1767 = vrcp.pop 32.0
          %v1768 = vmul.f32 32.0, %v1767
          %v1769 = vsub.f32 1.0, %v1768
          %v1770 = vmul.f32 %v1767, %v1769
          %v1771 = vadd.f32 %v1767, %v1770
          %vm1772 = vweird.f32 %v1767
          %v1773 = vsel %vm1772, %v1767, %v1771
          %v1774 = vmul.f32 %v1766, %v1773
          %v1775 = vsub.f32 %v1762, %v1774
          %v1776 = vmul.f32 %v1775, %v1775
          %v1777 = vsel %vm1763, %v1776, 0.0
          %1778 = vadd.xlane.f32.xlu0 %v1777
          %v1779 = vpop.xlane.xlu0 %1778
          %v1780 = vmul.f32 %v1779, %v1773
          %v1781 = vadd.f32 %v1780, 1e-05
          %v1782 = vrsqrt.pop %v1781
          %v1783 = vmul.f32 %v1782, %v1781
          %v1784 = vmul.f32 %v1783, %v1782
          %v1785 = vmul.f32 0.5, %v1784
          %v1786 = vsub.f32 1.5, %v1785
          %v1787 = vmul.f32 %v1782, %v1786
          %vm1788 = vweird.f32 %v1781
          %vm1789 = vweird.f32 %v1782
          %vm1790 = vmor %vm1788, %vm1789
          %v1791 = vsel %vm1790, %v1782, %v1787
          %v1792 = vmul.f32 %v1775, %v1791
          %v1794 = vperm.slane %v1727, 0
          %v1796 = vmul.f32 %v1792, %v1794
          %v1798 = vperm.slane %v1728, 0
          %v1800 = vadd.f32 %v1796, %v1798
          %v1801 = vpack.c.bf16 %v1800, %v1800
          %v1806 = vunpack.c.l.b16 %v1729
          %v1807 = vunpack.c.l.b16 %v1730
          %v1808 = vunpack.c.l.b16 %v1731
          %v1809 = vunpack.c.l.b16 %v1732
          %v1810 = vpack.c.b16 %v1807, %v1806
          %v1811 = vpack.c.b16 %v1809, %v1808
          %v1815 = vsel %vm1763, %v1801, 0
          %1817 = vmatpush.bf16.msra.mxu0 0
          %1818 = vmatpush.bf16.msra.mxu0 0
          %1819 = vmatpush.bf16.msra.mxu0 0
          %1820 = vmatpush.bf16.msra.mxu0 0
          %1821 = vmatpush.bf16.msra.mxu0 0
          %1822 = vmatpush.bf16.msra.mxu0 0
          %1823 = vmatpush.bf16.msra.mxu0 %v1811
          %1824 = vmatpush.bf16.msra.mxu0 %v1810
          %1825 = vmatmul.bf16.gmra.mxu0 %v1815
          %v1826 = vpop.f32.mrf.mxu0
          %v1827 = vadd.f32 0.0, %v1826
          %v1828 = vpop.f32.mrf.mxu0
          %1829 = vdwg.mxu0
          %v1830 = vpack.c.bf16 %v1827, %v1827
          %v1832 = vperm.slane %v1294, 0
          %1835 = vrot.lane.b32.xlu0 %v1830, 96
          %v1836 = vpop.permute.xlu0 %1835
          %vm1837 = vcmask 130048
          %v1839 = vsel %vm1837, %v1830, 0
          %v1842 = vsel %vm1837, %v1836, 0
          %1844 = vmatpush.bf16.xpose.msra.mxu0 0
          %1845 = vmatpush.bf16.xpose.msra.mxu0 0
          %1846 = vmatpush.bf16.xpose.msra.mxu0 0
          %1847 = vmatpush.bf16.xpose.msra.mxu0 0
          %1848 = vmatpush.bf16.xpose.msra.mxu0 0
          %1849 = vmatpush.bf16.xpose.msra.mxu0 0
          %1850 = vmatpush.bf16.xpose.msra.mxu0 0
          %1851 = vmatpush.bf16.xpose.msra.mxu0 %v1842
          %1852 = vmatmul.bf16.gmra.mxu0 %v1839
          %v1853 = vpop.f32.mrf.mxu0
          %v1854 = vadd.f32 %v1832, %v1853
          %v1855 = vpop.f32.mrf.mxu0
          %1856 = vdwg.mxu0
          %vm1857 = vcmask 64512
          %v1858 = vsel %vm1857, %v1854, -inf
          %1859 = vmax.xlane.f32.xlu0 %v1858
          %v1860 = vpop.xlane.xlu0 %1859
          %v1861 = vsub.f32 %v1854, %v1860
          %v1862 = vmul.f32 %v1861, 1.442695
          %v1863 = vpow.pop %v1862
          %v1864 = vsel %vm1857, %v1863, 0.0
          %1865 = vadd.xlane.f32.xlu0 %v1864
          %v1866 = vpop.xlane.xlu0 %1865
          %v1867 = vpack.c.bf16 %v1863, %v1863
          %1868 = vrot.lane.b32.xlu0 %v1830, 64
          %v1869 = vpop.permute.xlu0 %1868
          %v1871 = vsel %vm1857, %v1867, 0
          %vm1873 = vcmask 1043456
          %v1875 = vsel %vm1873, %v1869, 0
          %1877 = vmatpush.bf16.msra.mxu0 0
          %1878 = vmatpush.bf16.msra.mxu0 0
          %1879 = vmatpush.bf16.msra.mxu0 0
          %1880 = vmatpush.bf16.msra.mxu0 0
          %1881 = vmatpush.bf16.msra.mxu0 0
          %1882 = vmatpush.bf16.msra.mxu0 0
          %1883 = vmatpush.bf16.msra.mxu0 0
          %1884 = vmatpush.bf16.msra.mxu0 %v1875
          %1885 = vmatmul.bf16.gmra.mxu0 %v1871
          %v1886 = vpop.f32.mrf.mxu0
          %v1887 = vadd.f32 0.0, %v1886
          %v1888 = vpop.f32.mrf.mxu0
          %1889 = vdwg.mxu0
          %v1890 = vrcp.pop %v1866
          %v1891 = vmul.f32 %v1887, %v1890
          %1892 = vrot.lane.b32.xlu0 %v1830, 112
          %v1893 = vpop.permute.xlu0 %1892
          %1894 = vrot.lane.b32.xlu0 %v1830, 80
          %v1895 = vpop.permute.xlu0 %1894
          %v1897 = vsel %vm1837, %v1893, 0
          %v1900 = vsel %vm1837, %v1895, 0
          %1902 = vmatpush.bf16.xpose.msra.mxu0 0
          %1903 = vmatpush.bf16.xpose.msra.mxu0 0
          %1904 = vmatpush.bf16.xpose.msra.mxu0 0
          %1905 = vmatpush.bf16.xpose.msra.mxu0 0
          %1906 = vmatpush.bf16.xpose.msra.mxu0 0
          %1907 = vmatpush.bf16.xpose.msra.mxu0 0
          %1908 = vmatpush.bf16.xpose.msra.mxu0 0
          %1909 = vmatpush.bf16.xpose.msra.mxu0 %v1900
          %1910 = vmatmul.bf16.gmra.mxu0 %v1897
          %v1911 = vpop.f32.mrf.mxu0
          %v1912 = vadd.f32 %v1832, %v1911
          %v1913 = vpop.f32.mrf.mxu0
          %1914 = vdwg.mxu0
          %v1915 = vsel %vm1857, %v1912, -inf
          %1916 = vmax.xlane.f32.xlu0 %v1915
          %v1917 = vpop.xlane.xlu0 %1916
          %v1918 = vsub.f32 %v1912, %v1917
          %v1919 = vmul.f32 %v1918, 1.442695
          %v1920 = vpow.pop %v1919
          %v1921 = vsel %vm1857, %v1920, 0.0
          %1922 = vadd.xlane.f32.xlu0 %v1921
          %v1923 = vpop.xlane.xlu0 %1922
          %v1924 = vpack.c.bf16 %v1920, %v1920
          %1925 = vrot.lane.b32.xlu0 %v1830, 48
          %v1926 = vpop.permute.xlu0 %1925
          %v1928 = vsel %vm1857, %v1924, 0
          %v1931 = vsel %vm1873, %v1926, 0
          %1933 = vmatpush.bf16.msra.mxu0 0
          %1934 = vmatpush.bf16.msra.mxu0 0
          %1935 = vmatpush.bf16.msra.mxu0 0
          %1936 = vmatpush.bf16.msra.mxu0 0
          %1937 = vmatpush.bf16.msra.mxu0 0
          %1938 = vmatpush.bf16.msra.mxu0 0
          %1939 = vmatpush.bf16.msra.mxu0 0
          %1940 = vmatpush.bf16.msra.mxu0 %v1931
          %1941 = vmatmul.bf16.gmra.mxu0 %v1928
          %v1942 = vpop.f32.mrf.mxu0
          %v1943 = vadd.f32 0.0, %v1942
          %v1944 = vpop.f32.mrf.mxu0
          %1945 = vdwg.mxu0
          %v1946 = vrcp.pop %v1923
          %v1947 = vmul.f32 %v1943, %v1946
          %1949 = vrot.lane.b32.xlu0 %v1947, 16
          %v1950 = vpop.permute.xlu0 %1949
          %v1952 = vsel %vm1837, %v1891, %v1950
          %v1953 = vpack.c.bf16 %v1952, %v1952
          %v1955 = vperm.slane %v1737, 0
          %v1961 = vunpack.c.l.b16 %v1733
          %v1962 = vunpack.c.l.b16 %v1734
          %v1963 = vunpack.c.l.b16 %v1735
          %v1964 = vunpack.c.l.b16 %v1736
          %v1965 = vpack.c.b16 %v1962, %v1961
          %v1966 = vpack.c.b16 %v1964, %v1963
          %v1970 = vsel %vm1763, %v1953, 0
          %1972 = vmatpush.bf16.msra.mxu0 0
          %1973 = vmatpush.bf16.msra.mxu0 0
          %1974 = vmatpush.bf16.msra.mxu0 0
          %1975 = vmatpush.bf16.msra.mxu0 0
          %1976 = vmatpush.bf16.msra.mxu0 0
          %1977 = vmatpush.bf16.msra.mxu0 0
          %1978 = vmatpush.bf16.msra.mxu0 %v1966
          %1979 = vmatpush.bf16.msra.mxu0 %v1965
          %1980 = vmatmul.bf16.gmra.mxu0 %v1970
          %v1981 = vpop.f32.mrf.mxu0
          %v1982 = vadd.f32 %v1955, %v1981
          %v1983 = vpop.f32.mrf.mxu0
          %1984 = vdwg.mxu0
          %v1985 = vadd.f32 %v1982, %v1762
          %vm1986 = vcmp.gt.f32.partialorder %v1295, 0.5
          %v1987 = vsel %vm1986, 1, 0
          %1988 = vset.pattern.permute.xlu0 0
          %1989 = vperm.xlu0 %1988, %v1987
          %v1990 = vpop.permute.xlu0 %1989
          %vm1991 = vcmp.eq.s32.totalorder %v1990, 1
          %v1992 = vsel %vm1991, 0.0, %v1985
          %v1993 = vsel %vm1763, %v1992, 0.0
          %1994 = vadd.xlane.f32.xlu0 %v1993
          %v1995 = vpop.xlane.xlu0 %1994
          %v1996 = vmul.f32 %v1995, %v1773
          %v1997 = vsub.f32 %v1992, %v1996
          %v1998 = vmul.f32 %v1997, %v1997
          %v1999 = vsel %vm1763, %v1998, 0.0
          %2000 = vadd.xlane.f32.xlu0 %v1999
          %v2001 = vpop.xlane.xlu0 %2000
          %v2002 = vmul.f32 %v2001, %v1773
          %v2003 = vadd.f32 %v2002, 1e-05
          %v2004 = vrsqrt.pop %v2003
          %v2005 = vmul.f32 %v2004, %v2003
          %v2006 = vmul.f32 %v2005, %v2004
          %v2007 = vmul.f32 0.5, %v2006
          %v2008 = vsub.f32 1.5, %v2007
          %v2009 = vmul.f32 %v2004, %v2008
          %vm2010 = vweird.f32 %v2003
          %vm2011 = vweird.f32 %v2004
          %vm2012 = vmor %vm2010, %vm2011
          %v2013 = vsel %vm2012, %v2004, %v2009
          %v2014 = vmul.f32 %v1997, %v2013
          %v2016 = vperm.slane %v1738, 0
          %v2018 = vmul.f32 %v2014, %v2016
          %v2020 = vperm.slane %v1739, 0
          %v2022 = vadd.f32 %v2018, %v2020
          %v2023 = vlaneseq
          %v2024 = vshrl.u32 %v2023, 7
          %vm2025 = vcmp.eq.s32.totalorder %v2024, 0
          %v2026 = vrot.slane %v2022, 7
          %v2027 = vsel %vm2025, 0.0, %v2026
          %vm2028 = vcmp.eq.s32.totalorder %v2024, 7
          %v2029 = vrot.slane %v2022, 1
          %v2030 = vsel %vm2028, 0.0, %v2029
          %2032 = vrot.lane.b32.xlu0 %v2022, 32
          %v2033 = vpop.permute.xlu0 %2032
          %2036 = vrot.lane.b32.xlu0 %v2030, 64
          %v2037 = vpop.permute.xlu0 %2036
          %v2039 = vsel %vm1763, %v2027, %v2033
          %vm2040 = vcmask 523264
          %v2041 = vsel %vm2040, %v2039, %v2037
          %v2042 = vpack.c.bf16 %v2041, %v2041
          %v2044 = vperm.slane %v1752, 0
          %v2058 = vunpack.c.l.b16 %v1740
          %v2059 = vunpack.c.l.b16 %v1741
          %v2060 = vunpack.c.l.b16 %v1742
          %v2061 = vunpack.c.l.b16 %v1743
          %v2062 = vunpack.c.l.b16 %v1744
          %v2063 = vunpack.c.l.b16 %v1745
          %v2064 = vunpack.c.l.b16 %v1746
          %v2065 = vunpack.c.l.b16 %v1747
          %v2066 = vunpack.c.l.b16 %v1748
          %v2067 = vunpack.c.l.b16 %v1749
          %v2068 = vunpack.c.l.b16 %v1750
          %v2069 = vunpack.c.l.b16 %v1751
          %v2070 = vpack.c.b16 %v2059, %v2058
          %v2071 = vpack.c.b16 %v2061, %v2060
          %v2072 = vpack.c.b16 %v2063, %v2062
          %v2073 = vpack.c.b16 %v2065, %v2064
          %v2074 = vpack.c.b16 %v2067, %v2066
          %v2075 = vpack.c.b16 %v2069, %v2068
          %vm2082 = vcmask 785408
          %v2084 = vsel %vm2082, %v2042, 0
          %2086 = vmatpush.bf16.msra.mxu0 0
          %2087 = vmatpush.bf16.msra.mxu0 0
          %2088 = vmatpush.bf16.msra.mxu0 %v2075
          %2089 = vmatpush.bf16.msra.mxu0 %v2074
          %2090 = vmatpush.bf16.msra.mxu0 %v2073
          %2091 = vmatpush.bf16.msra.mxu0 %v2072
          %2092 = vmatpush.bf16.msra.mxu0 %v2071
          %2093 = vmatpush.bf16.msra.mxu0 %v2070
          %2094 = vmatmul.bf16.gmra.mxu0 %v2084
          %v2095 = vpop.f32.mrf.mxu0
          %v2096 = vadd.f32 %v2044, %v2095
          %v2097 = vpop.f32.mrf.mxu0
          %2098 = vdwg.mxu0
          %v2099 = vmax.f32 %v2096, 0.0
          %v2100 = vpack.c.bf16 %v2099, %v2099
          %v2102 = vperm.slane %v1761, 0
          %v2112 = vunpack.c.l.b16 %v1753
          %v2113 = vunpack.c.l.b16 %v1754
          %v2114 = vunpack.c.l.b16 %v1755
          %v2115 = vunpack.c.l.b16 %v1756
          %v2116 = vunpack.c.l.b16 %v1757
          %v2117 = vunpack.c.l.b16 %v1758
          %v2118 = vunpack.c.l.b16 %v1759
          %v2119 = vunpack.c.l.b16 %v1760
          %v2120 = vpack.c.b16 %v2113, %v2112
          %v2121 = vpack.c.b16 %v2115, %v2114
          %v2122 = vpack.c.b16 %v2117, %v2116
          %v2123 = vpack.c.b16 %v2119, %v2118
          %v2129 = vsel %vm2040, %v2100, 0
          %2131 = vmatpush.bf16.msra.mxu0 0
          %2132 = vmatpush.bf16.msra.mxu0 0
          %2133 = vmatpush.bf16.msra.mxu0 0
          %2134 = vmatpush.bf16.msra.mxu0 0
          %2135 = vmatpush.bf16.msra.mxu0 %v2123
          %2136 = vmatpush.bf16.msra.mxu0 %v2122
          %2137 = vmatpush.bf16.msra.mxu0 %v2121
          %2138 = vmatpush.bf16.msra.mxu0 %v2120
          %2139 = vmatmul.bf16.gmra.mxu0 %v2129
          %v2140 = vpop.f32.mrf.mxu0
          %v2141 = vadd.f32 %v2102, %v2140
          %v2142 = vpop.f32.mrf.mxu0
          %2143 = vdwg.mxu0
          %v2144 = vadd.f32 %v2141, %v1992
          %v2145 = vsel %vm1991, 0.0, %v2144
          %2146 = vst.msk [vmem:[%s1174] sm:$0xff] %vm1763, %v2145
        $region140: #{tpu_custom_call.1} parent=131 // pred_fallthru
          _
        %p2147 = scmp.eq.s32.totalorder %s47, 1
        // Predicated region
        $region141: #{tpu_custom_call.1} parent=131 // pred_check
          %p2148 = pneg %p2147
        $region142: #{tpu_custom_call.1} parent=131 // pred_check_branch
          %2150 = sbr.rel (%p2148) target = $region144
        $region143: #{tpu_custom_call.1} parent=131 // pred_region
          %v2151 = vld [vmem:[%s1174] sm:$0xff]
          %v2152 = vld [vmem:[%s26] sm:$0x1]
          %v2153 = vld [vmem:[%s27] sm:$0x1]
          %vm2154 = vcmask 261120
          %v2155 = vsel %vm2154, %v2151, 0.0
          %2156 = vadd.xlane.f32.xlu0 %v2155
          %v2157 = vpop.xlane.xlu0 %2156
          %v2158 = vrcp.pop 32.0
          %v2159 = vmul.f32 32.0, %v2158
          %v2160 = vsub.f32 1.0, %v2159
          %v2161 = vmul.f32 %v2158, %v2160
          %v2162 = vadd.f32 %v2158, %v2161
          %vm2163 = vweird.f32 %v2158
          %v2164 = vsel %vm2163, %v2158, %v2162
          %v2165 = vmul.f32 %v2157, %v2164
          %v2166 = vsub.f32 %v2151, %v2165
          %v2167 = vmul.f32 %v2166, %v2166
          %v2168 = vsel %vm2154, %v2167, 0.0
          %2169 = vadd.xlane.f32.xlu0 %v2168
          %v2170 = vpop.xlane.xlu0 %2169
          %v2171 = vmul.f32 %v2170, %v2164
          %v2172 = vadd.f32 %v2171, 1e-06
          %v2173 = vrsqrt.pop %v2172
          %v2174 = vmul.f32 %v2173, %v2172
          %v2175 = vmul.f32 %v2174, %v2173
          %v2176 = vmul.f32 0.5, %v2175
          %v2177 = vsub.f32 1.5, %v2176
          %v2178 = vmul.f32 %v2173, %v2177
          %vm2179 = vweird.f32 %v2172
          %vm2180 = vweird.f32 %v2173
          %vm2181 = vmor %vm2179, %vm2180
          %v2182 = vsel %vm2181, %v2173, %v2178
          %v2183 = vmul.f32 %v2166, %v2182
          %v2185 = vperm.slane %v2152, 0
          %v2187 = vmul.f32 %v2183, %v2185
          %v2189 = vperm.slane %v2153, 0
          %v2191 = vadd.f32 %v2187, %v2189
          %2192 = vst.msk [vmem:[%s1174] sm:$0xff] %vm2154, %v2191
        $region144: #{tpu_custom_call.1} parent=131 // pred_fallthru
          _
        %s2193 = sand.u32 %s786, 1
        %s2194 = scalar_lea.sflag [#allocation3], %s2193
        %s2195 = sand.u32 %s786, 1
        %s2196 = smul.addr %s2195, 8
        %s2197 = scalar_lea.vmem [#allocation2], %s2196
        // Predicated region
        $region145: #{tpu_custom_call.1} parent=131 // pred_check
          %p2198 = pneg %p796
        $region146: #{tpu_custom_call.1} parent=131 // pred_check_branch
          %2200 = sbr.rel (%p2198) target = $region148
        $region147: #{tpu_custom_call.1} parent=131 // pred_region
          %2202 = vsyncadd %s2194, 0
          %s2203 = smul.addr %s46, 8
          %s2204 = scalar_lea.hbm %s28, %s2203
          %s2206 = sshll.u32 %s2197, 4
          %s2207 = int_to_ptr.vmem [resolvable:$true] %s2206
          %s2208 = sshll.u32 %s2204, 4
          %s2209 = int_to_ptr.hbm [resolvable:$true] %s2208
          %2211 = dma.vmem_to_hbm [thread:$0]  %s2207, 128, %s2209, %s2194
        $region148: #{tpu_custom_call.1} parent=131 // pred_fallthru
          _
      $region132: #{tpu_custom_call.1} parent=5 // pred_fallthru
        _
      %p2212 = scmp.le.s32.totalorder 2, %s37
      // Predicated region
      $region149: #{tpu_custom_call.1} parent=5 // pred_check
        %p2213 = pneg %p2212
      $region150: #{tpu_custom_call.1} parent=5 // pred_check_branch
        %2215 = sbr.rel (%p2213) target = $region152
      $region151: #{tpu_custom_call.1} parent=5 // pred_region
        %s2216 = ssub.s32 %s37, 2
        // Predicated region
        $region153: #{tpu_custom_call.1} parent=151 // pred_check
          %p2217 = pneg %p802
        $region154: #{tpu_custom_call.1} parent=151 // pred_check_branch
          %2219 = sbr.rel (%p2217) target = $region156
        $region155: #{tpu_custom_call.1} parent=151 // pred_region
          %s2220 = sand.u32 %s787, 1
          %s2221 = scalar_lea.sflag [#allocation3], %s2220
          %s2222 = sand.u32 %s787, 1
          %s2223 = smul.addr %s2222, 8
          %s2224 = scalar_lea.vmem [#allocation2], %s2223
          %2226 = dma.done %s2221, 128
        $region156: #{tpu_custom_call.1} parent=151 // pred_fallthru
          _
      $region152: #{tpu_custom_call.1} parent=5 // pred_fallthru
        _
    $region6: #{tpu_custom_call.1} parent=1 // loop_footer
      %s41 = sadd.s32 1, %s37
    $region7: #{tpu_custom_call.1} parent=1 // loop_footer_branch
      %36 = sbr.rel target = $region3
    $region8: #{tpu_custom_call.1} parent=1 // loop_exit
      _
    %2227 = vsyncpa [#allocation3], 1
    %s2228 = scalar_lea.sflag [#allocation3], 1
    %2229 = vsyncpa %s2228, 1

</llo_original>
